<compile_context>
chip_gen: v7x
topology: tpu7x:2x2x1
jax: 0.10.0
libtpu: 0.0.40
codegen_flags: <defaults>
</compile_context>

<pallas_src>
import functools

import jax
import jax.numpy as jnp
from jax.experimental import pallas as pl
from jax.experimental.pallas import tpu as pltpu


def _round_up(x, m):
    return (x + m - 1) // m * m


# ----------------------------- Pallas kernels ------------------------------ #

def _matmul_bias_kernel(x_ref, w_ref, b_ref, o_ref, acc_ref, *, leaky_slope):
    """Tiled matmul: grid = (M//tm, OC//tn, K//tk), K innermost ("arbitrary").

    f32 VMEM accumulator; bias add + optional LeakyReLU only in the K-finalize
    step so the inner loop is MXU-only (no per-step broadcast / VALU work).
    """
    k = pl.program_id(2)

    @pl.when(k == 0)
    def _():
        acc_ref[...] = jnp.zeros_like(acc_ref)

    acc_ref[...] += jnp.dot(x_ref[...], w_ref[...],
                            preferred_element_type=jnp.float32)

    @pl.when(k == pl.num_programs(2) - 1)
    def _():
        y = acc_ref[...] + b_ref[...]
        if leaky_slope is not None:
            y = jnp.where(y >= 0, y, leaky_slope * y)
        o_ref[...] = y


def _instnorm_lrelu_kernel(x_ref, g_ref, b_ref, o_ref, *, eps, slope, inv_hw):
    """Per-(sample, channel) instance norm + affine + LeakyReLU.

    Works on a (1, H*W, C) block (one sample): channels on the lane axis,
    single-pass sum / sum-of-squares reduction over the H*W axis, f32 epilogue.
    """
    x = x_ref[...]                                      # (1, HW, C) f32
    s1 = jnp.sum(x, axis=1, keepdims=True)
    s2 = jnp.sum(x * x, axis=1, keepdims=True)
    mean = s1 * inv_hw
    var = jnp.maximum(s2 * inv_hw - mean * mean, 0.0)
    scale = jax.lax.rsqrt(var + eps) * g_ref[...]       # (1, 1, C)-ish broadcast
    y = (x - mean) * scale + b_ref[...]
    o_ref[...] = jnp.where(y >= 0, y, slope * y)


# ------------------------------ Pallas wrappers ---------------------------- #

def _im2col(x_nhwc, kh, kw, stride, pad):
    """Extract conv patches.  Returns (N*OH*OW, KH*KW*C) and (N, OH, OW)."""
    n, h, w, c = x_nhwc.shape
    xp = jnp.pad(x_nhwc, ((0, 0), (pad, pad), (pad, pad), (0, 0)))
    oh = (h + 2 * pad - kh) // stride + 1
    ow = (w + 2 * pad - kw) // stride + 1
    cols = []
    for ki in range(kh):
        for kj in range(kw):
            sl = xp[:, ki:ki + stride * oh:stride, kj:kj + stride * ow:stride, :]
            cols.append(sl)
    patches = jnp.concatenate(cols, axis=-1)            # (N, OH, OW, KH*KW*C)
    return patches.reshape(n * oh * ow, kh * kw * c), (n, oh, ow)


def conv2d_pallas(x_nhwc, w_oihw, bias, stride, pad, leaky_slope=None):
    """PyTorch-semantics Conv2d (weights OIHW), activations NHWC, tiled matmul."""
    oc, ic, kh, kw = w_oihw.shape
    patches, (n, oh, ow) = _im2col(x_nhwc, kh, kw, stride, pad)
    # (OC, IC, KH, KW) -> (KH, KW, IC, OC) -> (KH*KW*IC, OC); matches patch order.
    w2 = jnp.transpose(w_oihw, (2, 3, 1, 0)).reshape(kh * kw * ic, oc)

    m, k = patches.shape
    # Lane-dense / MXU-friendly padding: OC and K -> multiples of 128,
    # M -> multiple of the (sublane-aligned) M tile.  Tiles sized so the
    # double-buffered working set stays far below v7x's 32 MiB scoped VMEM.
    oc_pad = _round_up(oc, 128)
    k_pad = _round_up(k, 128)
    tk = min(512, k_pad)
    k_pad = _round_up(k_pad, tk)
    tm = min(256, _round_up(m, 8))
    m_pad = _round_up(m, tm)
    tn = 128

    a = jnp.pad(patches, ((0, m_pad - m), (0, k_pad - k))).astype(jnp.bfloat16)
    b = jnp.pad(w2, ((0, k_pad - k), (0, oc_pad - oc))).astype(jnp.bfloat16)
    bb = jnp.pad(bias, (0, oc_pad - oc)).reshape(1, oc_pad).astype(jnp.float32)

    grid = (m_pad // tm, oc_pad // tn, k_pad // tk)
    flops = 2 * m_pad * k_pad * oc_pad
    bytes_accessed = (m_pad * k_pad + k_pad * oc_pad) * 2 + (m_pad + 1) * oc_pad * 4

    out = pl.pallas_call(
        functools.partial(_matmul_bias_kernel, leaky_slope=leaky_slope),
        grid_spec=pltpu.PrefetchScalarGridSpec(
            num_scalar_prefetch=0,
            grid=grid,
            in_specs=[
                pl.BlockSpec((tm, tk), lambda i, j, kk: (i, kk)),
                pl.BlockSpec((tk, tn), lambda i, j, kk: (kk, j)),
                pl.BlockSpec((1, tn), lambda i, j, kk: (0, j)),
            ],
            out_specs=pl.BlockSpec((tm, tn), lambda i, j, kk: (i, j)),
            scratch_shapes=[pltpu.VMEM((tm, tn), jnp.float32)],
        ),
        out_shape=jax.ShapeDtypeStruct((m_pad, oc_pad), jnp.float32),
        compiler_params=pltpu.CompilerParams(
            dimension_semantics=("parallel", "parallel", "arbitrary"),
            vmem_limit_bytes=32 * 1024 * 1024,
        ),
        cost_estimate=pl.CostEstimate(
            flops=int(flops),
            transcendentals=0,
            bytes_accessed=int(bytes_accessed),
        ),
    )(a, b, bb)

    return out[:m, :oc].reshape(n, oh, ow, oc)


def instnorm_lrelu_pallas(x_nhwc, gamma, beta, eps=1e-5, slope=0.2):
    """InstanceNorm2d(affine) + LeakyReLU on the NHWC-flat layout (no transposes)."""
    n, h, w, c = x_nhwc.shape
    hw = h * w
    x3 = x_nhwc.reshape(n, hw, c)                        # contiguous reshape only
    g = gamma.reshape(1, c).astype(jnp.float32)          # lane-dense (1, C) rows
    b = beta.reshape(1, c).astype(jnp.float32)

    out = pl.pallas_call(
        functools.partial(_instnorm_lrelu_kernel, eps=eps, slope=slope,
                          inv_hw=1.0 / float(hw)),
        grid_spec=pltpu.PrefetchScalarGridSpec(
            num_scalar_prefetch=0,
            grid=(n,),
            in_specs=[
                pl.BlockSpec((1, hw, c), lambda i: (i, 0, 0)),
                pl.BlockSpec((1, c), lambda i: (0, 0)),
                pl.BlockSpec((1, c), lambda i: (0, 0)),
            ],
            out_specs=pl.BlockSpec((1, hw, c), lambda i: (i, 0, 0)),
        ),
        out_shape=jax.ShapeDtypeStruct((n, hw, c), jnp.float32),
        compiler_params=pltpu.CompilerParams(
            dimension_semantics=("parallel",),
            vmem_limit_bytes=32 * 1024 * 1024,
        ),
        cost_estimate=pl.CostEstimate(
            flops=int(8 * n * hw * c),
            transcendentals=int(n * c),
            bytes_accessed=int(2 * 4 * n * hw * c),
        ),
    )(x3, g, b)
    return out.reshape(n, h, w, c)


# ---------------------------- Model construction --------------------------- #

def make_discriminator_params(key, in_channels, ndf=64, n_layers=3):
    """Deterministic synthetic parameters mirroring the PyTorch __init__ shapes."""
    specs = []  # (in_c, out_c, stride, has_instance_norm)
    specs.append((in_channels, ndf, 2, False))
    nf_mult = 1
    for n in range(1, n_layers):
        nf_mult_prev = nf_mult
        nf_mult = min(2 ** n, 8)
        specs.append((ndf * nf_mult_prev, ndf * nf_mult, 2, True))
    nf_mult_prev = nf_mult
    nf_mult = min(2 ** n_layers, 8)
    specs.append((ndf * nf_mult_prev, ndf * nf_mult, 1, True))
    specs.append((ndf * nf_mult, 1, 1, False))

    params = []
    for (ic, oc, stride, has_norm) in specs:
        key, kw_, kb_, kg_, kbe_ = jax.random.split(key, 5)
        p = {
            "w": 0.1 * jax.random.normal(kw_, (oc, ic, 4, 4), jnp.float32),
            "b": 0.1 * jax.random.normal(kb_, (oc,), jnp.float32),
            "stride": stride,
            "has_norm": has_norm,
        }
        if has_norm:
            p["gamma"] = 1.0 + 0.1 * jax.random.normal(kg_, (oc,), jnp.float32)
            p["beta"] = 0.1 * jax.random.normal(kbe_, (oc,), jnp.float32)
        params.append(p)
    return params


def discriminator_forward(params, x_nchw):
    """Pallas forward.  Input NCHW (PyTorch convention); output flat 1-D."""
    x = jnp.transpose(x_nchw, (0, 2, 3, 1))              # NCHW -> NHWC (once)
    for i, p in enumerate(params):
        slope = 0.2 if i == 0 else None                  # layer-0 LeakyReLU fused
        x = conv2d_pallas(x, p["w"], p["b"], p["stride"], 2, leaky_slope=slope)
        if p["has_norm"]:
            x = instnorm_lrelu_pallas(x, p["gamma"], p["beta"])
    out_nchw = jnp.transpose(x, (0, 3, 1, 2))            # back to NCHW for view(-1)
    return out_nchw.reshape(-1)


# -------------------------- Pure-JAX reference ----------------------------- #

def _ref_conv(x_nchw, w, b, stride, pad):
    out = jax.lax.conv_general_dilated(
        x_nchw, w, window_strides=(stride, stride),
        padding=[(pad, pad), (pad, pad)],
        dimension_numbers=("NCHW", "OIHW", "NCHW"),
        precision=jax.lax.Precision.HIGHEST,
    )
    return out + b[None, :, None, None]


def _ref_instnorm(x, g, b, eps=1e-5):
    mean = jnp.mean(x, axis=(2, 3), keepdims=True)
    var = jnp.mean(jnp.square(x - mean), axis=(2, 3), keepdims=True)
    return (x - mean) * jax.lax.rsqrt(var + eps) * g[None, :, None, None] \
        + b[None, :, None, None]


def _leaky(x, slope=0.2):
    return jnp.where(x >= 0, x, slope * x)


def reference_forward(params, x_nchw):
    x = x_nchw
    last = len(params) - 1
    for i, p in enumerate(params):
        x = _ref_conv(x, p["w"], p["b"], p["stride"], 2)
        if i == 0:
            x = _leaky(x)
        elif i != last:
            x = _leaky(_ref_instnorm(x, p["gamma"], p["beta"]))
    return x.reshape(-1)


# ---------------------------------- Main ------------------------------------ #

if __name__ == "__main__":
    key = jax.random.PRNGKey(0)
    k_param, k_x = jax.random.split(key)

    in_channels, ndf, n_layers = 3, 8, 3
    N, H, W = 2, 16, 16

    params = make_discriminator_params(k_param, in_channels, ndf, n_layers)
    x = jax.random.normal(k_x, (N, in_channels, H, W), jnp.float32)

    fwd = jax.jit(lambda xx: discriminator_forward(params, xx))
    out = fwd(x)
    jax.block_until_ready(out)

    ref = reference_forward(params, x)
    jax.block_until_ready(ref)

    assert out.shape == ref.shape, (out.shape, ref.shape)
    # bf16 MXU inputs with f32 accumulation -> slightly looser tolerance than
    # a full-f32 matmul; reference is HIGHEST-precision f32.
    assert jnp.allclose(out, ref, rtol=5e-2, atol=5e-2), (
        float(jnp.max(jnp.abs(out - ref))))

    print("KERNEL_OK")
</pallas_src>

<mosaic_0001>
module attributes {stable_mosaic.version = 11 : i64} {
  func.func @_matmul_bias_kernel(%arg0: i32, %arg1: i32, %arg2: i32, %arg3: memref<168x128xbf16, #tpu.memory_space<vmem>>, %arg4: memref<128x128xbf16, #tpu.memory_space<vmem>>, %arg5: memref<1x128xf32, #tpu.memory_space<vmem>>, %arg6: memref<168x128xf32, #tpu.memory_space<vmem>>, %arg7: memref<168x128xf32, #tpu.memory_space<vmem>>) attributes {dimension_semantics = [#tpu.dimension_semantics<parallel>, #tpu.dimension_semantics<parallel>, #tpu.dimension_semantics<arbitrary>], iteration_bounds = array<i64: 1, 1, 1>, scalar_prefetch = 0 : i64, scratch_operands = 1 : i64, tpu.core_type = #tpu.core_type<tc>, window_params = [{transform_indices = @transform_0, window_bounds = array<i64: 168, 128>}, {transform_indices = @transform_1, window_bounds = array<i64: 128, 128>}, {transform_indices = @transform_2, window_bounds = array<i64: 1, 128>}, {transform_indices = @transform_3, window_bounds = array<i64: 168, 128>}]} {
    %c0_i32 = arith.constant 0 : i32
    %0 = arith.cmpi eq, %arg2, %c0_i32 : i32
    %1 = arith.extui %0 : i1 to i32
    %c0_i32_0 = arith.constant 0 : i32
    %2 = arith.cmpi ne, %1, %c0_i32_0 : i32
    scf.if %2 {
      %cst_10 = arith.constant 0.000000e+00 : f32
      %12 = vector.broadcast %cst_10 : f32 to vector<168x128xf32>
      %c0_11 = arith.constant 0 : index
      %c0_12 = arith.constant 0 : index
      %13 = vector.load %arg7[%c0_11, %c0_12] : memref<168x128xf32, #tpu.memory_space<vmem>>, vector<168x128xf32>
      tpu.vector_store %arg7[%c0_11, %c0_12], %12 {strides = array<i32>} : memref<168x128xf32, #tpu.memory_space<vmem>>, vector<168x128xf32>,
    } else {
    }
    %c0 = arith.constant 0 : index
    %c0_1 = arith.constant 0 : index
    %3 = vector.load %arg7[%c0, %c0_1] : memref<168x128xf32, #tpu.memory_space<vmem>>, vector<168x128xf32>
    %c0_2 = arith.constant 0 : index
    %c0_3 = arith.constant 0 : index
    %4 = vector.load %arg3[%c0_2, %c0_3] : memref<168x128xbf16, #tpu.memory_space<vmem>>, vector<168x128xbf16>
    %c0_4 = arith.constant 0 : index
    %c0_5 = arith.constant 0 : index
    %5 = vector.load %arg4[%c0_4, %c0_5] : memref<128x128xbf16, #tpu.memory_space<vmem>>, vector<128x128xbf16>
    %cst = arith.constant dense<0.000000e+00> : vector<168x128xf32>
    %6 = tpu.matmul %4, %5, %cst {dimension_numbers = #tpu.dot_dimension_numbers<[1], [0], [0], [1], [0, 0, 1, 1], [], []>} : vector<168x128xbf16>, vector<128x128xbf16>, vector<168x128xf32> -> vector<168x128xf32>
    %7 = arith.addf %3, %6 : vector<168x128xf32>
    %c0_6 = arith.constant 0 : index
    %c0_7 = arith.constant 0 : index
    %8 = vector.load %arg7[%c0_6, %c0_7] : memref<168x128xf32, #tpu.memory_space<vmem>>, vector<168x128xf32>
    tpu.vector_store %arg7[%c0_6, %c0_7], %7 {strides = array<i32>} : memref<168x128xf32, #tpu.memory_space<vmem>>, vector<168x128xf32>,
    %c0_i32_8 = arith.constant 0 : i32
    %9 = arith.cmpi eq, %arg2, %c0_i32_8 : i32
    %10 = arith.extui %9 : i1 to i32
    %c0_i32_9 = arith.constant 0 : i32
    %11 = arith.cmpi ne, %10, %c0_i32_9 : i32
    scf.if %11 {
      %c0_10 = arith.constant 0 : index
      %c0_11 = arith.constant 0 : index
      %12 = vector.load %arg7[%c0_10, %c0_11] : memref<168x128xf32, #tpu.memory_space<vmem>>, vector<168x128xf32>
      %c0_12 = arith.constant 0 : index
      %c0_13 = arith.constant 0 : index
      %13 = vector.load %arg5[%c0_12, %c0_13] : memref<1x128xf32, #tpu.memory_space<vmem>>, vector<1x128xf32>
      %14 = vector.broadcast %13 : vector<1x128xf32> to vector<168x128xf32>
      %15 = arith.addf %12, %14 : vector<168x128xf32>
      %cst_14 = arith.constant 0.000000e+00 : f32
      %16 = vector.broadcast %cst_14 : f32 to vector<168x128xf32>
      %17 = arith.cmpf oge, %15, %16 : vector<168x128xf32>
      %cst_15 = arith.constant 2.000000e-01 : f32
      %18 = vector.broadcast %cst_15 : f32 to vector<168x128xf32>
      %19 = arith.mulf %18, %15 : vector<168x128xf32>
      %20 = arith.select %17, %15, %19 : vector<168x128xi1>, vector<168x128xf32>
      %c0_16 = arith.constant 0 : index
      %c0_17 = arith.constant 0 : index
      %21 = vector.load %arg6[%c0_16, %c0_17] : memref<168x128xf32, #tpu.memory_space<vmem>>, vector<168x128xf32>
      tpu.vector_store %arg6[%c0_16, %c0_17], %20 {strides = array<i32>} : memref<168x128xf32, #tpu.memory_space<vmem>>, vector<168x128xf32>,
    } else {
    }
    return
  }
  func.func @transform_0(%arg0: i32, %arg1: i32, %arg2: i32) -> (i32, i32) {
    %c0_i32 = arith.constant 0 : i32
    return %arg0, %arg2 : i32, i32
  }
  func.func @transform_1(%arg0: i32, %arg1: i32, %arg2: i32) -> (i32, i32) {
    %c0_i32 = arith.constant 0 : i32
    return %arg2, %arg1 : i32, i32
  }
  func.func @transform_2(%arg0: i32, %arg1: i32, %arg2: i32) -> (i32, i32) {
    %c0_i32 = arith.constant 0 : i32
    %c0_i32_0 = arith.constant 0 : i32
    return %c0_i32, %arg1 : i32, i32
  }
  func.func @transform_3(%arg0: i32, %arg1: i32, %arg2: i32) -> (i32, i32) {
    %c0_i32 = arith.constant 0 : i32
    return %arg0, %arg1 : i32, i32
  }
}

module attributes {stable_mosaic.version = 11 : i64} {
  func.func @_instnorm_lrelu_kernel(%arg0: i32, %arg1: memref<1x25x16xf32, #tpu.memory_space<vmem>>, %arg2: memref<1x16xf32, #tpu.memory_space<vmem>>, %arg3: memref<1x16xf32, #tpu.memory_space<vmem>>, %arg4: memref<1x25x16xf32, #tpu.memory_space<vmem>>) attributes {dimension_semantics = [#tpu.dimension_semantics<parallel>], iteration_bounds = array<i64: 2>, scalar_prefetch = 0 : i64, scratch_operands = 0 : i64, tpu.core_type = #tpu.core_type<tc>, window_params = [{transform_indices = @transform_0, window_bounds = array<i64: 1, 25, 16>}, {pipeline_mode = #tpu.pipeline_mode<synchronous>, transform_indices = @transform_1, window_bounds = array<i64: 1, 16>}, {pipeline_mode = #tpu.pipeline_mode<synchronous>, transform_indices = @transform_2, window_bounds = array<i64: 1, 16>}, {transform_indices = @transform_3, window_bounds = array<i64: 1, 25, 16>}]} {
    %c0 = arith.constant 0 : index
    %c0_0 = arith.constant 0 : index
    %c0_1 = arith.constant 0 : index
    %0 = vector.load %arg1[%c0, %c0_0, %c0_1] : memref<1x25x16xf32, #tpu.memory_space<vmem>>, vector<1x25x16xf32>
    %cst = arith.constant dense<0.000000e+00> : vector<1x16xf32>
    %1 = vector.multi_reduction <add>, %0, %cst [1] : vector<1x25x16xf32> to vector<1x16xf32>
    %2 = vector.shape_cast %1 : vector<1x16xf32> to vector<1x1x16xf32>
    %3 = arith.mulf %0, %0 : vector<1x25x16xf32>
    %cst_2 = arith.constant dense<0.000000e+00> : vector<1x16xf32>
    %4 = vector.multi_reduction <add>, %3, %cst_2 [1] : vector<1x25x16xf32> to vector<1x16xf32>
    %5 = vector.shape_cast %4 : vector<1x16xf32> to vector<1x1x16xf32>
    %cst_3 = arith.constant 4.000000e-02 : f32
    %6 = vector.broadcast %cst_3 : f32 to vector<1x1x16xf32>
    %7 = arith.mulf %2, %6 : vector<1x1x16xf32>
    %cst_4 = arith.constant 4.000000e-02 : f32
    %8 = vector.broadcast %cst_4 : f32 to vector<1x1x16xf32>
    %9 = arith.mulf %5, %8 : vector<1x1x16xf32>
    %10 = arith.mulf %7, %7 : vector<1x1x16xf32>
    %11 = arith.subf %9, %10 : vector<1x1x16xf32>
    %cst_5 = arith.constant 0.000000e+00 : f32
    %12 = vector.broadcast %cst_5 : f32 to vector<1x1x16xf32>
    %13 = arith.maximumf %11, %12 : vector<1x1x16xf32>
    %cst_6 = arith.constant 9.99999974E-6 : f32
    %14 = vector.broadcast %cst_6 : f32 to vector<1x1x16xf32>
    %15 = arith.addf %13, %14 : vector<1x1x16xf32>
    %16 = math.rsqrt %15 : vector<1x1x16xf32>
    %c0_7 = arith.constant 0 : index
    %c0_8 = arith.constant 0 : index
    %17 = vector.load %arg2[%c0_7, %c0_8] : memref<1x16xf32, #tpu.memory_space<vmem>>, vector<1x16xf32>
    %18 = vector.shape_cast %17 : vector<1x16xf32> to vector<1x1x16xf32>
    %19 = arith.mulf %16, %18 : vector<1x1x16xf32>
    %20 = vector.broadcast %7 : vector<1x1x16xf32> to vector<1x25x16xf32>
    %21 = arith.subf %0, %20 : vector<1x25x16xf32>
    %22 = vector.broadcast %19 : vector<1x1x16xf32> to vector<1x25x16xf32>
    %23 = arith.mulf %21, %22 : vector<1x25x16xf32>
    %c0_9 = arith.constant 0 : index
    %c0_10 = arith.constant 0 : index
    %24 = vector.load %arg3[%c0_9, %c0_10] : memref<1x16xf32, #tpu.memory_space<vmem>>, vector<1x16xf32>
    %25 = vector.shape_cast %24 : vector<1x16xf32> to vector<1x1x16xf32>
    %26 = vector.broadcast %25 : vector<1x1x16xf32> to vector<1x25x16xf32>
    %27 = arith.addf %23, %26 : vector<1x25x16xf32>
    %cst_11 = arith.constant 0.000000e+00 : f32
    %28 = vector.broadcast %cst_11 : f32 to vector<1x25x16xf32>
    %29 = arith.cmpf oge, %27, %28 : vector<1x25x16xf32>
    %cst_12 = arith.constant 2.000000e-01 : f32
    %30 = vector.broadcast %cst_12 : f32 to vector<1x25x16xf32>
    %31 = arith.mulf %30, %27 : vector<1x25x16xf32>
    %32 = arith.select %29, %27, %31 : vector<1x25x16xi1>, vector<1x25x16xf32>
    %c0_13 = arith.constant 0 : index
    %c0_14 = arith.constant 0 : index
    %c0_15 = arith.constant 0 : index
    %33 = vector.load %arg4[%c0_13, %c0_14, %c0_15] : memref<1x25x16xf32, #tpu.memory_space<vmem>>, vector<1x25x16xf32>
    tpu.vector_store %arg4[%c0_13, %c0_14, %c0_15], %32 {strides = array<i32>} : memref<1x25x16xf32, #tpu.memory_space<vmem>>, vector<1x25x16xf32>,
    return
  }
  func.func @transform_0(%arg0: i32) -> (i32, i32, i32) {
    %c0_i32 = arith.constant 0 : i32
    %c0_i32_0 = arith.constant 0 : i32
    %c0_i32_1 = arith.constant 0 : i32
    return %arg0, %c0_i32, %c0_i32_0 : i32, i32, i32
  }
  func.func @transform_1(%arg0: i32) -> (i32, i32) {
    %c0_i32 = arith.constant 0 : i32
    %c0_i32_0 = arith.constant 0 : i32
    %c0_i32_1 = arith.constant 0 : i32
    return %c0_i32, %c0_i32_0 : i32, i32
  }
  func.func @transform_2(%arg0: i32) -> (i32, i32) {
    %c0_i32 = arith.constant 0 : i32
    %c0_i32_0 = arith.constant 0 : i32
    %c0_i32_1 = arith.constant 0 : i32
    return %c0_i32, %c0_i32_0 : i32, i32
  }
  func.func @transform_3(%arg0: i32) -> (i32, i32, i32) {
    %c0_i32 = arith.constant 0 : i32
    %c0_i32_0 = arith.constant 0 : i32
    %c0_i32_1 = arith.constant 0 : i32
    return %arg0, %c0_i32, %c0_i32_0 : i32, i32, i32
  }
}

module attributes {stable_mosaic.version = 11 : i64} {
  func.func @_matmul_bias_kernel(%arg0: i32, %arg1: i32, %arg2: i32, %arg3: memref<56x128xbf16, #tpu.memory_space<vmem>>, %arg4: memref<128x128xbf16, #tpu.memory_space<vmem>>, %arg5: memref<1x128xf32, #tpu.memory_space<vmem>>, %arg6: memref<56x128xf32, #tpu.memory_space<vmem>>, %arg7: memref<56x128xf32, #tpu.memory_space<vmem>>) attributes {dimension_semantics = [#tpu.dimension_semantics<parallel>, #tpu.dimension_semantics<parallel>, #tpu.dimension_semantics<arbitrary>], iteration_bounds = array<i64: 1, 1, 1>, scalar_prefetch = 0 : i64, scratch_operands = 1 : i64, tpu.core_type = #tpu.core_type<tc>, window_params = [{transform_indices = @transform_0, window_bounds = array<i64: 56, 128>}, {transform_indices = @transform_1, window_bounds = array<i64: 128, 128>}, {transform_indices = @transform_2, window_bounds = array<i64: 1, 128>}, {transform_indices = @transform_3, window_bounds = array<i64: 56, 128>}]} {
    %c0_i32 = arith.constant 0 : i32
    %0 = arith.cmpi eq, %arg2, %c0_i32 : i32
    %1 = arith.extui %0 : i1 to i32
    %c0_i32_0 = arith.constant 0 : i32
    %2 = arith.cmpi ne, %1, %c0_i32_0 : i32
    scf.if %2 {
      %cst_10 = arith.constant 0.000000e+00 : f32
      %12 = vector.broadcast %cst_10 : f32 to vector<56x128xf32>
      %c0_11 = arith.constant 0 : index
      %c0_12 = arith.constant 0 : index
      %13 = vector.load %arg7[%c0_11, %c0_12] : memref<56x128xf32, #tpu.memory_space<vmem>>, vector<56x128xf32>
      tpu.vector_store %arg7[%c0_11, %c0_12], %12 {strides = array<i32>} : memref<56x128xf32, #tpu.memory_space<vmem>>, vector<56x128xf32>,
    } else {
    }
    %c0 = arith.constant 0 : index
    %c0_1 = arith.constant 0 : index
    %3 = vector.load %arg7[%c0, %c0_1] : memref<56x128xf32, #tpu.memory_space<vmem>>, vector<56x128xf32>
    %c0_2 = arith.constant 0 : index
    %c0_3 = arith.constant 0 : index
    %4 = vector.load %arg3[%c0_2, %c0_3] : memref<56x128xbf16, #tpu.memory_space<vmem>>, vector<56x128xbf16>
    %c0_4 = arith.constant 0 : index
    %c0_5 = arith.constant 0 : index
    %5 = vector.load %arg4[%c0_4, %c0_5] : memref<128x128xbf16, #tpu.memory_space<vmem>>, vector<128x128xbf16>
    %cst = arith.constant dense<0.000000e+00> : vector<56x128xf32>
    %6 = tpu.matmul %4, %5, %cst {dimension_numbers = #tpu.dot_dimension_numbers<[1], [0], [0], [1], [0, 0, 1, 1], [], []>} : vector<56x128xbf16>, vector<128x128xbf16>, vector<56x128xf32> -> vector<56x128xf32>
    %7 = arith.addf %3, %6 : vector<56x128xf32>
    %c0_6 = arith.constant 0 : index
    %c0_7 = arith.constant 0 : index
    %8 = vector.load %arg7[%c0_6, %c0_7] : memref<56x128xf32, #tpu.memory_space<vmem>>, vector<56x128xf32>
    tpu.vector_store %arg7[%c0_6, %c0_7], %7 {strides = array<i32>} : memref<56x128xf32, #tpu.memory_space<vmem>>, vector<56x128xf32>,
    %c0_i32_8 = arith.constant 0 : i32
    %9 = arith.cmpi eq, %arg2, %c0_i32_8 : i32
    %10 = arith.extui %9 : i1 to i32
    %c0_i32_9 = arith.constant 0 : i32
    %11 = arith.cmpi ne, %10, %c0_i32_9 : i32
    scf.if %11 {
      %c0_10 = arith.constant 0 : index
      %c0_11 = arith.constant 0 : index
      %12 = vector.load %arg7[%c0_10, %c0_11] : memref<56x128xf32, #tpu.memory_space<vmem>>, vector<56x128xf32>
      %c0_12 = arith.constant 0 : index
      %c0_13 = arith.constant 0 : index
      %13 = vector.load %arg5[%c0_12, %c0_13] : memref<1x128xf32, #tpu.memory_space<vmem>>, vector<1x128xf32>
      %14 = vector.broadcast %13 : vector<1x128xf32> to vector<56x128xf32>
      %15 = arith.addf %12, %14 : vector<56x128xf32>
      %c0_14 = arith.constant 0 : index
      %c0_15 = arith.constant 0 : index
      %16 = vector.load %arg6[%c0_14, %c0_15] : memref<56x128xf32, #tpu.memory_space<vmem>>, vector<56x128xf32>
      tpu.vector_store %arg6[%c0_14, %c0_15], %15 {strides = array<i32>} : memref<56x128xf32, #tpu.memory_space<vmem>>, vector<56x128xf32>,
    } else {
    }
    return
  }
  func.func @transform_0(%arg0: i32, %arg1: i32, %arg2: i32) -> (i32, i32) {
    %c0_i32 = arith.constant 0 : i32
    return %arg0, %arg2 : i32, i32
  }
  func.func @transform_1(%arg0: i32, %arg1: i32, %arg2: i32) -> (i32, i32) {
    %c0_i32 = arith.constant 0 : i32
    return %arg2, %arg1 : i32, i32
  }
  func.func @transform_2(%arg0: i32, %arg1: i32, %arg2: i32) -> (i32, i32) {
    %c0_i32 = arith.constant 0 : i32
    %c0_i32_0 = arith.constant 0 : i32
    return %c0_i32, %arg1 : i32, i32
  }
  func.func @transform_3(%arg0: i32, %arg1: i32, %arg2: i32) -> (i32, i32) {
    %c0_i32 = arith.constant 0 : i32
    return %arg0, %arg1 : i32, i32
  }
}

module attributes {stable_mosaic.version = 11 : i64} {
  func.func @_matmul_bias_kernel(%arg0: i32, %arg1: i32, %arg2: i32, %arg3: memref<24x256xbf16, #tpu.memory_space<vmem>>, %arg4: memref<256x128xbf16, #tpu.memory_space<vmem>>, %arg5: memref<1x128xf32, #tpu.memory_space<vmem>>, %arg6: memref<24x128xf32, #tpu.memory_space<vmem>>, %arg7: memref<24x128xf32, #tpu.memory_space<vmem>>) attributes {dimension_semantics = [#tpu.dimension_semantics<parallel>, #tpu.dimension_semantics<parallel>, #tpu.dimension_semantics<arbitrary>], iteration_bounds = array<i64: 1, 1, 1>, scalar_prefetch = 0 : i64, scratch_operands = 1 : i64, tpu.core_type = #tpu.core_type<tc>, window_params = [{transform_indices = @transform_0, window_bounds = array<i64: 24, 256>}, {transform_indices = @transform_1, window_bounds = array<i64: 256, 128>}, {transform_indices = @transform_2, window_bounds = array<i64: 1, 128>}, {transform_indices = @transform_3, window_bounds = array<i64: 24, 128>}]} {
    %c0_i32 = arith.constant 0 : i32
    %0 = arith.cmpi eq, %arg2, %c0_i32 : i32
    %1 = arith.extui %0 : i1 to i32
    %c0_i32_0 = arith.constant 0 : i32
    %2 = arith.cmpi ne, %1, %c0_i32_0 : i32
    scf.if %2 {
      %cst_10 = arith.constant 0.000000e+00 : f32
      %12 = vector.broadcast %cst_10 : f32 to vector<24x128xf32>
      %c0_11 = arith.constant 0 : index
      %c0_12 = arith.constant 0 : index
      %13 = vector.load %arg7[%c0_11, %c0_12] : memref<24x128xf32, #tpu.memory_space<vmem>>, vector<24x128xf32>
      tpu.vector_store %arg7[%c0_11, %c0_12], %12 {strides = array<i32>} : memref<24x128xf32, #tpu.memory_space<vmem>>, vector<24x128xf32>,
    } else {
    }
    %c0 = arith.constant 0 : index
    %c0_1 = arith.constant 0 : index
    %3 = vector.load %arg7[%c0, %c0_1] : memref<24x128xf32, #tpu.memory_space<vmem>>, vector<24x128xf32>
    %c0_2 = arith.constant 0 : index
    %c0_3 = arith.constant 0 : index
    %4 = vector.load %arg3[%c0_2, %c0_3] : memref<24x256xbf16, #tpu.memory_space<vmem>>, vector<24x256xbf16>
    %c0_4 = arith.constant 0 : index
    %c0_5 = arith.constant 0 : index
    %5 = vector.load %arg4[%c0_4, %c0_5] : memref<256x128xbf16, #tpu.memory_space<vmem>>, vector<256x128xbf16>
    %cst = arith.constant dense<0.000000e+00> : vector<24x128xf32>
    %6 = tpu.matmul %4, %5, %cst {dimension_numbers = #tpu.dot_dimension_numbers<[1], [0], [0], [1], [0, 0, 1, 1], [], []>} : vector<24x256xbf16>, vector<256x128xbf16>, vector<24x128xf32> -> vector<24x128xf32>
    %7 = arith.addf %3, %6 : vector<24x128xf32>
    %c0_6 = arith.constant 0 : index
    %c0_7 = arith.constant 0 : index
    %8 = vector.load %arg7[%c0_6, %c0_7] : memref<24x128xf32, #tpu.memory_space<vmem>>, vector<24x128xf32>
    tpu.vector_store %arg7[%c0_6, %c0_7], %7 {strides = array<i32>} : memref<24x128xf32, #tpu.memory_space<vmem>>, vector<24x128xf32>,
    %c0_i32_8 = arith.constant 0 : i32
    %9 = arith.cmpi eq, %arg2, %c0_i32_8 : i32
    %10 = arith.extui %9 : i1 to i32
    %c0_i32_9 = arith.constant 0 : i32
    %11 = arith.cmpi ne, %10, %c0_i32_9 : i32
    scf.if %11 {
      %c0_10 = arith.constant 0 : index
      %c0_11 = arith.constant 0 : index
      %12 = vector.load %arg7[%c0_10, %c0_11] : memref<24x128xf32, #tpu.memory_space<vmem>>, vector<24x128xf32>
      %c0_12 = arith.constant 0 : index
      %c0_13 = arith.constant 0 : index
      %13 = vector.load %arg5[%c0_12, %c0_13] : memref<1x128xf32, #tpu.memory_space<vmem>>, vector<1x128xf32>
      %14 = vector.broadcast %13 : vector<1x128xf32> to vector<24x128xf32>
      %15 = arith.addf %12, %14 : vector<24x128xf32>
      %c0_14 = arith.constant 0 : index
      %c0_15 = arith.constant 0 : index
      %16 = vector.load %arg6[%c0_14, %c0_15] : memref<24x128xf32, #tpu.memory_space<vmem>>, vector<24x128xf32>
      tpu.vector_store %arg6[%c0_14, %c0_15], %15 {strides = array<i32>} : memref<24x128xf32, #tpu.memory_space<vmem>>, vector<24x128xf32>,
    } else {
    }
    return
  }
  func.func @transform_0(%arg0: i32, %arg1: i32, %arg2: i32) -> (i32, i32) {
    %c0_i32 = arith.constant 0 : i32
    return %arg0, %arg2 : i32, i32
  }
  func.func @transform_1(%arg0: i32, %arg1: i32, %arg2: i32) -> (i32, i32) {
    %c0_i32 = arith.constant 0 : i32
    return %arg2, %arg1 : i32, i32
  }
  func.func @transform_2(%arg0: i32, %arg1: i32, %arg2: i32) -> (i32, i32) {
    %c0_i32 = arith.constant 0 : i32
    %c0_i32_0 = arith.constant 0 : i32
    return %c0_i32, %arg1 : i32, i32
  }
  func.func @transform_3(%arg0: i32, %arg1: i32, %arg2: i32) -> (i32, i32) {
    %c0_i32 = arith.constant 0 : i32
    return %arg0, %arg1 : i32, i32
  }
}

module attributes {stable_mosaic.version = 11 : i64} {
  func.func @_instnorm_lrelu_kernel(%arg0: i32, %arg1: memref<1x9x32xf32, #tpu.memory_space<vmem>>, %arg2: memref<1x32xf32, #tpu.memory_space<vmem>>, %arg3: memref<1x32xf32, #tpu.memory_space<vmem>>, %arg4: memref<1x9x32xf32, #tpu.memory_space<vmem>>) attributes {dimension_semantics = [#tpu.dimension_semantics<parallel>], iteration_bounds = array<i64: 2>, scalar_prefetch = 0 : i64, scratch_operands = 0 : i64, tpu.core_type = #tpu.core_type<tc>, window_params = [{transform_indices = @transform_0, window_bounds = array<i64: 1, 9, 32>}, {pipeline_mode = #tpu.pipeline_mode<synchronous>, transform_indices = @transform_1, window_bounds = array<i64: 1, 32>}, {pipeline_mode = #tpu.pipeline_mode<synchronous>, transform_indices = @transform_2, window_bounds = array<i64: 1, 32>}, {transform_indices = @transform_3, window_bounds = array<i64: 1, 9, 32>}]} {
    %c0 = arith.constant 0 : index
    %c0_0 = arith.constant 0 : index
    %c0_1 = arith.constant 0 : index
    %0 = vector.load %arg1[%c0, %c0_0, %c0_1] : memref<1x9x32xf32, #tpu.memory_space<vmem>>, vector<1x9x32xf32>
    %cst = arith.constant dense<0.000000e+00> : vector<1x32xf32>
    %1 = vector.multi_reduction <add>, %0, %cst [1] : vector<1x9x32xf32> to vector<1x32xf32>
    %2 = vector.shape_cast %1 : vector<1x32xf32> to vector<1x1x32xf32>
    %3 = arith.mulf %0, %0 : vector<1x9x32xf32>
    %cst_2 = arith.constant dense<0.000000e+00> : vector<1x32xf32>
    %4 = vector.multi_reduction <add>, %3, %cst_2 [1] : vector<1x9x32xf32> to vector<1x32xf32>
    %5 = vector.shape_cast %4 : vector<1x32xf32> to vector<1x1x32xf32>
    %cst_3 = arith.constant 0.111111112 : f32
    %6 = vector.broadcast %cst_3 : f32 to vector<1x1x32xf32>
    %7 = arith.mulf %2, %6 : vector<1x1x32xf32>
    %cst_4 = arith.constant 0.111111112 : f32
    %8 = vector.broadcast %cst_4 : f32 to vector<1x1x32xf32>
    %9 = arith.mulf %5, %8 : vector<1x1x32xf32>
    %10 = arith.mulf %7, %7 : vector<1x1x32xf32>
    %11 = arith.subf %9, %10 : vector<1x1x32xf32>
    %cst_5 = arith.constant 0.000000e+00 : f32
    %12 = vector.broadcast %cst_5 : f32 to vector<1x1x32xf32>
    %13 = arith.maximumf %11, %12 : vector<1x1x32xf32>
    %cst_6 = arith.constant 9.99999974E-6 : f32
    %14 = vector.broadcast %cst_6 : f32 to vector<1x1x32xf32>
    %15 = arith.addf %13, %14 : vector<1x1x32xf32>
    %16 = math.rsqrt %15 : vector<1x1x32xf32>
    %c0_7 = arith.constant 0 : index
    %c0_8 = arith.constant 0 : index
    %17 = vector.load %arg2[%c0_7, %c0_8] : memref<1x32xf32, #tpu.memory_space<vmem>>, vector<1x32xf32>
    %18 = vector.shape_cast %17 : vector<1x32xf32> to vector<1x1x32xf32>
    %19 = arith.mulf %16, %18 : vector<1x1x32xf32>
    %20 = vector.broadcast %7 : vector<1x1x32xf32> to vector<1x9x32xf32>
    %21 = arith.subf %0, %20 : vector<1x9x32xf32>
    %22 = vector.broadcast %19 : vector<1x1x32xf32> to vector<1x9x32xf32>
    %23 = arith.mulf %21, %22 : vector<1x9x32xf32>
    %c0_9 = arith.constant 0 : index
    %c0_10 = arith.constant 0 : index
    %24 = vector.load %arg3[%c0_9, %c0_10] : memref<1x32xf32, #tpu.memory_space<vmem>>, vector<1x32xf32>
    %25 = vector.shape_cast %24 : vector<1x32xf32> to vector<1x1x32xf32>
    %26 = vector.broadcast %25 : vector<1x1x32xf32> to vector<1x9x32xf32>
    %27 = arith.addf %23, %26 : vector<1x9x32xf32>
    %cst_11 = arith.constant 0.000000e+00 : f32
    %28 = vector.broadcast %cst_11 : f32 to vector<1x9x32xf32>
    %29 = arith.cmpf oge, %27, %28 : vector<1x9x32xf32>
    %cst_12 = arith.constant 2.000000e-01 : f32
    %30 = vector.broadcast %cst_12 : f32 to vector<1x9x32xf32>
    %31 = arith.mulf %30, %27 : vector<1x9x32xf32>
    %32 = arith.select %29, %27, %31 : vector<1x9x32xi1>, vector<1x9x32xf32>
    %c0_13 = arith.constant 0 : index
    %c0_14 = arith.constant 0 : index
    %c0_15 = arith.constant 0 : index
    %33 = vector.load %arg4[%c0_13, %c0_14, %c0_15] : memref<1x9x32xf32, #tpu.memory_space<vmem>>, vector<1x9x32xf32>
    tpu.vector_store %arg4[%c0_13, %c0_14, %c0_15], %32 {strides = array<i32>} : memref<1x9x32xf32, #tpu.memory_space<vmem>>, vector<1x9x32xf32>,
    return
  }
  func.func @transform_0(%arg0: i32) -> (i32, i32, i32) {
    %c0_i32 = arith.constant 0 : i32
    %c0_i32_0 = arith.constant 0 : i32
    %c0_i32_1 = arith.constant 0 : i32
    return %arg0, %c0_i32, %c0_i32_0 : i32, i32, i32
  }
  func.func @transform_1(%arg0: i32) -> (i32, i32) {
    %c0_i32 = arith.constant 0 : i32
    %c0_i32_0 = arith.constant 0 : i32
    %c0_i32_1 = arith.constant 0 : i32
    return %c0_i32, %c0_i32_0 : i32, i32
  }
  func.func @transform_2(%arg0: i32) -> (i32, i32) {
    %c0_i32 = arith.constant 0 : i32
    %c0_i32_0 = arith.constant 0 : i32
    %c0_i32_1 = arith.constant 0 : i32
    return %c0_i32, %c0_i32_0 : i32, i32
  }
  func.func @transform_3(%arg0: i32) -> (i32, i32, i32) {
    %c0_i32 = arith.constant 0 : i32
    %c0_i32_0 = arith.constant 0 : i32
    %c0_i32_1 = arith.constant 0 : i32
    return %arg0, %c0_i32, %c0_i32_0 : i32, i32, i32
  }
}

module attributes {stable_mosaic.version = 11 : i64} {
  func.func @_matmul_bias_kernel(%arg0: i32, %arg1: i32, %arg2: i32, %arg3: memref<32x512xbf16, #tpu.memory_space<vmem>>, %arg4: memref<512x128xbf16, #tpu.memory_space<vmem>>, %arg5: memref<1x128xf32, #tpu.memory_space<vmem>>, %arg6: memref<32x128xf32, #tpu.memory_space<vmem>>, %arg7: memref<32x128xf32, #tpu.memory_space<vmem>>) attributes {dimension_semantics = [#tpu.dimension_semantics<parallel>, #tpu.dimension_semantics<parallel>, #tpu.dimension_semantics<arbitrary>], iteration_bounds = array<i64: 1, 1, 1>, scalar_prefetch = 0 : i64, scratch_operands = 1 : i64, tpu.core_type = #tpu.core_type<tc>, window_params = [{transform_indices = @transform_0, window_bounds = array<i64: 32, 512>}, {transform_indices = @transform_1, window_bounds = array<i64: 512, 128>}, {transform_indices = @transform_2, window_bounds = array<i64: 1, 128>}, {transform_indices = @transform_3, window_bounds = array<i64: 32, 128>}]} {
    %c0_i32 = arith.constant 0 : i32
    %0 = arith.cmpi eq, %arg2, %c0_i32 : i32
    %1 = arith.extui %0 : i1 to i32
    %c0_i32_0 = arith.constant 0 : i32
    %2 = arith.cmpi ne, %1, %c0_i32_0 : i32
    scf.if %2 {
      %cst_10 = arith.constant 0.000000e+00 : f32
      %12 = vector.broadcast %cst_10 : f32 to vector<32x128xf32>
      %c0_11 = arith.constant 0 : index
      %c0_12 = arith.constant 0 : index
      %13 = vector.load %arg7[%c0_11, %c0_12] : memref<32x128xf32, #tpu.memory_space<vmem>>, vector<32x128xf32>
      tpu.vector_store %arg7[%c0_11, %c0_12], %12 {strides = array<i32>} : memref<32x128xf32, #tpu.memory_space<vmem>>, vector<32x128xf32>,
    } else {
    }
    %c0 = arith.constant 0 : index
    %c0_1 = arith.constant 0 : index
    %3 = vector.load %arg7[%c0, %c0_1] : memref<32x128xf32, #tpu.memory_space<vmem>>, vector<32x128xf32>
    %c0_2 = arith.constant 0 : index
    %c0_3 = arith.constant 0 : index
    %4 = vector.load %arg3[%c0_2, %c0_3] : memref<32x512xbf16, #tpu.memory_space<vmem>>, vector<32x512xbf16>
    %c0_4 = arith.constant 0 : index
    %c0_5 = arith.constant 0 : index
    %5 = vector.load %arg4[%c0_4, %c0_5] : memref<512x128xbf16, #tpu.memory_space<vmem>>, vector<512x128xbf16>
    %cst = arith.constant dense<0.000000e+00> : vector<32x128xf32>
    %6 = tpu.matmul %4, %5, %cst {dimension_numbers = #tpu.dot_dimension_numbers<[1], [0], [0], [1], [0, 0, 1, 1], [], []>} : vector<32x512xbf16>, vector<512x128xbf16>, vector<32x128xf32> -> vector<32x128xf32>
    %7 = arith.addf %3, %6 : vector<32x128xf32>
    %c0_6 = arith.constant 0 : index
    %c0_7 = arith.constant 0 : index
    %8 = vector.load %arg7[%c0_6, %c0_7] : memref<32x128xf32, #tpu.memory_space<vmem>>, vector<32x128xf32>
    tpu.vector_store %arg7[%c0_6, %c0_7], %7 {strides = array<i32>} : memref<32x128xf32, #tpu.memory_space<vmem>>, vector<32x128xf32>,
    %c0_i32_8 = arith.constant 0 : i32
    %9 = arith.cmpi eq, %arg2, %c0_i32_8 : i32
    %10 = arith.extui %9 : i1 to i32
    %c0_i32_9 = arith.constant 0 : i32
    %11 = arith.cmpi ne, %10, %c0_i32_9 : i32
    scf.if %11 {
      %c0_10 = arith.constant 0 : index
      %c0_11 = arith.constant 0 : index
      %12 = vector.load %arg7[%c0_10, %c0_11] : memref<32x128xf32, #tpu.memory_space<vmem>>, vector<32x128xf32>
      %c0_12 = arith.constant 0 : index
      %c0_13 = arith.constant 0 : index
      %13 = vector.load %arg5[%c0_12, %c0_13] : memref<1x128xf32, #tpu.memory_space<vmem>>, vector<1x128xf32>
      %14 = vector.broadcast %13 : vector<1x128xf32> to vector<32x128xf32>
      %15 = arith.addf %12, %14 : vector<32x128xf32>
      %c0_14 = arith.constant 0 : index
      %c0_15 = arith.constant 0 : index
      %16 = vector.load %arg6[%c0_14, %c0_15] : memref<32x128xf32, #tpu.memory_space<vmem>>, vector<32x128xf32>
      tpu.vector_store %arg6[%c0_14, %c0_15], %15 {strides = array<i32>} : memref<32x128xf32, #tpu.memory_space<vmem>>, vector<32x128xf32>,
    } else {
    }
    return
  }
  func.func @transform_0(%arg0: i32, %arg1: i32, %arg2: i32) -> (i32, i32) {
    %c0_i32 = arith.constant 0 : i32
    return %arg0, %arg2 : i32, i32
  }
  func.func @transform_1(%arg0: i32, %arg1: i32, %arg2: i32) -> (i32, i32) {
    %c0_i32 = arith.constant 0 : i32
    return %arg2, %arg1 : i32, i32
  }
  func.func @transform_2(%arg0: i32, %arg1: i32, %arg2: i32) -> (i32, i32) {
    %c0_i32 = arith.constant 0 : i32
    %c0_i32_0 = arith.constant 0 : i32
    return %c0_i32, %arg1 : i32, i32
  }
  func.func @transform_3(%arg0: i32, %arg1: i32, %arg2: i32) -> (i32, i32) {
    %c0_i32 = arith.constant 0 : i32
    return %arg0, %arg1 : i32, i32
  }
}

module attributes {stable_mosaic.version = 11 : i64} {
  func.func @_instnorm_lrelu_kernel(%arg0: i32, %arg1: memref<1x16x64xf32, #tpu.memory_space<vmem>>, %arg2: memref<1x64xf32, #tpu.memory_space<vmem>>, %arg3: memref<1x64xf32, #tpu.memory_space<vmem>>, %arg4: memref<1x16x64xf32, #tpu.memory_space<vmem>>) attributes {dimension_semantics = [#tpu.dimension_semantics<parallel>], iteration_bounds = array<i64: 2>, scalar_prefetch = 0 : i64, scratch_operands = 0 : i64, tpu.core_type = #tpu.core_type<tc>, window_params = [{transform_indices = @transform_0, window_bounds = array<i64: 1, 16, 64>}, {pipeline_mode = #tpu.pipeline_mode<synchronous>, transform_indices = @transform_1, window_bounds = array<i64: 1, 64>}, {pipeline_mode = #tpu.pipeline_mode<synchronous>, transform_indices = @transform_2, window_bounds = array<i64: 1, 64>}, {transform_indices = @transform_3, window_bounds = array<i64: 1, 16, 64>}]} {
    %c0 = arith.constant 0 : index
    %c0_0 = arith.constant 0 : index
    %c0_1 = arith.constant 0 : index
    %0 = vector.load %arg1[%c0, %c0_0, %c0_1] : memref<1x16x64xf32, #tpu.memory_space<vmem>>, vector<1x16x64xf32>
    %cst = arith.constant dense<0.000000e+00> : vector<1x64xf32>
    %1 = vector.multi_reduction <add>, %0, %cst [1] : vector<1x16x64xf32> to vector<1x64xf32>
    %2 = vector.shape_cast %1 : vector<1x64xf32> to vector<1x1x64xf32>
    %3 = arith.mulf %0, %0 : vector<1x16x64xf32>
    %cst_2 = arith.constant dense<0.000000e+00> : vector<1x64xf32>
    %4 = vector.multi_reduction <add>, %3, %cst_2 [1] : vector<1x16x64xf32> to vector<1x64xf32>
    %5 = vector.shape_cast %4 : vector<1x64xf32> to vector<1x1x64xf32>
    %cst_3 = arith.constant 6.250000e-02 : f32
    %6 = vector.broadcast %cst_3 : f32 to vector<1x1x64xf32>
    %7 = arith.mulf %2, %6 : vector<1x1x64xf32>
    %cst_4 = arith.constant 6.250000e-02 : f32
    %8 = vector.broadcast %cst_4 : f32 to vector<1x1x64xf32>
    %9 = arith.mulf %5, %8 : vector<1x1x64xf32>
    %10 = arith.mulf %7, %7 : vector<1x1x64xf32>
    %11 = arith.subf %9, %10 : vector<1x1x64xf32>
    %cst_5 = arith.constant 0.000000e+00 : f32
    %12 = vector.broadcast %cst_5 : f32 to vector<1x1x64xf32>
    %13 = arith.maximumf %11, %12 : vector<1x1x64xf32>
    %cst_6 = arith.constant 9.99999974E-6 : f32
    %14 = vector.broadcast %cst_6 : f32 to vector<1x1x64xf32>
    %15 = arith.addf %13, %14 : vector<1x1x64xf32>
    %16 = math.rsqrt %15 : vector<1x1x64xf32>
    %c0_7 = arith.constant 0 : index
    %c0_8 = arith.constant 0 : index
    %17 = vector.load %arg2[%c0_7, %c0_8] : memref<1x64xf32, #tpu.memory_space<vmem>>, vector<1x64xf32>
    %18 = vector.shape_cast %17 : vector<1x64xf32> to vector<1x1x64xf32>
    %19 = arith.mulf %16, %18 : vector<1x1x64xf32>
    %20 = vector.broadcast %7 : vector<1x1x64xf32> to vector<1x16x64xf32>
    %21 = arith.subf %0, %20 : vector<1x16x64xf32>
    %22 = vector.broadcast %19 : vector<1x1x64xf32> to vector<1x16x64xf32>
    %23 = arith.mulf %21, %22 : vector<1x16x64xf32>
    %c0_9 = arith.constant 0 : index
    %c0_10 = arith.constant 0 : index
    %24 = vector.load %arg3[%c0_9, %c0_10] : memref<1x64xf32, #tpu.memory_space<vmem>>, vector<1x64xf32>
    %25 = vector.shape_cast %24 : vector<1x64xf32> to vector<1x1x64xf32>
    %26 = vector.broadcast %25 : vector<1x1x64xf32> to vector<1x16x64xf32>
    %27 = arith.addf %23, %26 : vector<1x16x64xf32>
    %cst_11 = arith.constant 0.000000e+00 : f32
    %28 = vector.broadcast %cst_11 : f32 to vector<1x16x64xf32>
    %29 = arith.cmpf oge, %27, %28 : vector<1x16x64xf32>
    %cst_12 = arith.constant 2.000000e-01 : f32
    %30 = vector.broadcast %cst_12 : f32 to vector<1x16x64xf32>
    %31 = arith.mulf %30, %27 : vector<1x16x64xf32>
    %32 = arith.select %29, %27, %31 : vector<1x16x64xi1>, vector<1x16x64xf32>
    %c0_13 = arith.constant 0 : index
    %c0_14 = arith.constant 0 : index
    %c0_15 = arith.constant 0 : index
    %33 = vector.load %arg4[%c0_13, %c0_14, %c0_15] : memref<1x16x64xf32, #tpu.memory_space<vmem>>, vector<1x16x64xf32>
    tpu.vector_store %arg4[%c0_13, %c0_14, %c0_15], %32 {strides = array<i32>} : memref<1x16x64xf32, #tpu.memory_space<vmem>>, vector<1x16x64xf32>,
    return
  }
  func.func @transform_0(%arg0: i32) -> (i32, i32, i32) {
    %c0_i32 = arith.constant 0 : i32
    %c0_i32_0 = arith.constant 0 : i32
    %c0_i32_1 = arith.constant 0 : i32
    return %arg0, %c0_i32, %c0_i32_0 : i32, i32, i32
  }
  func.func @transform_1(%arg0: i32) -> (i32, i32) {
    %c0_i32 = arith.constant 0 : i32
    %c0_i32_0 = arith.constant 0 : i32
    %c0_i32_1 = arith.constant 0 : i32
    return %c0_i32, %c0_i32_0 : i32, i32
  }
  func.func @transform_2(%arg0: i32) -> (i32, i32) {
    %c0_i32 = arith.constant 0 : i32
    %c0_i32_0 = arith.constant 0 : i32
    %c0_i32_1 = arith.constant 0 : i32
    return %c0_i32, %c0_i32_0 : i32, i32
  }
  func.func @transform_3(%arg0: i32) -> (i32, i32, i32) {
    %c0_i32 = arith.constant 0 : i32
    %c0_i32_0 = arith.constant 0 : i32
    %c0_i32_1 = arith.constant 0 : i32
    return %arg0, %c0_i32, %c0_i32_0 : i32, i32, i32
  }
}

module attributes {stable_mosaic.version = 11 : i64} {
  func.func @_matmul_bias_kernel(%arg0: i32, %arg1: i32, %arg2: i32, %arg3: memref<56x512xbf16, #tpu.memory_space<vmem>>, %arg4: memref<512x128xbf16, #tpu.memory_space<vmem>>, %arg5: memref<1x128xf32, #tpu.memory_space<vmem>>, %arg6: memref<56x128xf32, #tpu.memory_space<vmem>>, %arg7: memref<56x128xf32, #tpu.memory_space<vmem>>) attributes {dimension_semantics = [#tpu.dimension_semantics<parallel>, #tpu.dimension_semantics<parallel>, #tpu.dimension_semantics<arbitrary>], iteration_bounds = array<i64: 1, 1, 2>, scalar_prefetch = 0 : i64, scratch_operands = 1 : i64, tpu.core_type = #tpu.core_type<tc>, window_params = [{transform_indices = @transform_0, window_bounds = array<i64: 56, 512>}, {transform_indices = @transform_1, window_bounds = array<i64: 512, 128>}, {transform_indices = @transform_2, window_bounds = array<i64: 1, 128>}, {transform_indices = @transform_3, window_bounds = array<i64: 56, 128>}]} {
    %c0_i32 = arith.constant 0 : i32
    %0 = arith.cmpi eq, %arg2, %c0_i32 : i32
    %1 = arith.extui %0 : i1 to i32
    %c0_i32_0 = arith.constant 0 : i32
    %2 = arith.cmpi ne, %1, %c0_i32_0 : i32
    scf.if %2 {
      %cst_9 = arith.constant 0.000000e+00 : f32
      %12 = vector.broadcast %cst_9 : f32 to vector<56x128xf32>
      %c0_10 = arith.constant 0 : index
      %c0_11 = arith.constant 0 : index
      %13 = vector.load %arg7[%c0_10, %c0_11] : memref<56x128xf32, #tpu.memory_space<vmem>>, vector<56x128xf32>
      tpu.vector_store %arg7[%c0_10, %c0_11], %12 {strides = array<i32>} : memref<56x128xf32, #tpu.memory_space<vmem>>, vector<56x128xf32>,
    } else {
    }
    %c0 = arith.constant 0 : index
    %c0_1 = arith.constant 0 : index
    %3 = vector.load %arg7[%c0, %c0_1] : memref<56x128xf32, #tpu.memory_space<vmem>>, vector<56x128xf32>
    %c0_2 = arith.constant 0 : index
    %c0_3 = arith.constant 0 : index
    %4 = vector.load %arg3[%c0_2, %c0_3] : memref<56x512xbf16, #tpu.memory_space<vmem>>, vector<56x512xbf16>
    %c0_4 = arith.constant 0 : index
    %c0_5 = arith.constant 0 : index
    %5 = vector.load %arg4[%c0_4, %c0_5] : memref<512x128xbf16, #tpu.memory_space<vmem>>, vector<512x128xbf16>
    %cst = arith.constant dense<0.000000e+00> : vector<56x128xf32>
    %6 = tpu.matmul %4, %5, %cst {dimension_numbers = #tpu.dot_dimension_numbers<[1], [0], [0], [1], [0, 0, 1, 1], [], []>} : vector<56x512xbf16>, vector<512x128xbf16>, vector<56x128xf32> -> vector<56x128xf32>
    %7 = arith.addf %3, %6 : vector<56x128xf32>
    %c0_6 = arith.constant 0 : index
    %c0_7 = arith.constant 0 : index
    %8 = vector.load %arg7[%c0_6, %c0_7] : memref<56x128xf32, #tpu.memory_space<vmem>>, vector<56x128xf32>
    tpu.vector_store %arg7[%c0_6, %c0_7], %7 {strides = array<i32>} : memref<56x128xf32, #tpu.memory_space<vmem>>, vector<56x128xf32>,
    %c1_i32 = arith.constant 1 : i32
    %9 = arith.cmpi eq, %arg2, %c1_i32 : i32
    %10 = arith.extui %9 : i1 to i32
    %c0_i32_8 = arith.constant 0 : i32
    %11 = arith.cmpi ne, %10, %c0_i32_8 : i32
    scf.if %11 {
      %c0_9 = arith.constant 0 : index
      %c0_10 = arith.constant 0 : index
      %12 = vector.load %arg7[%c0_9, %c0_10] : memref<56x128xf32, #tpu.memory_space<vmem>>, vector<56x128xf32>
      %c0_11 = arith.constant 0 : index
      %c0_12 = arith.constant 0 : index
      %13 = vector.load %arg5[%c0_11, %c0_12] : memref<1x128xf32, #tpu.memory_space<vmem>>, vector<1x128xf32>
      %14 = vector.broadcast %13 : vector<1x128xf32> to vector<56x128xf32>
      %15 = arith.addf %12, %14 : vector<56x128xf32>
      %c0_13 = arith.constant 0 : index
      %c0_14 = arith.constant 0 : index
      %16 = vector.load %arg6[%c0_13, %c0_14] : memref<56x128xf32, #tpu.memory_space<vmem>>, vector<56x128xf32>
      tpu.vector_store %arg6[%c0_13, %c0_14], %15 {strides = array<i32>} : memref<56x128xf32, #tpu.memory_space<vmem>>, vector<56x128xf32>,
    } else {
    }
    return
  }
  func.func @transform_0(%arg0: i32, %arg1: i32, %arg2: i32) -> (i32, i32) {
    %c0_i32 = arith.constant 0 : i32
    return %arg0, %arg2 : i32, i32
  }
  func.func @transform_1(%arg0: i32, %arg1: i32, %arg2: i32) -> (i32, i32) {
    %c0_i32 = arith.constant 0 : i32
    return %arg2, %arg1 : i32, i32
  }
  func.func @transform_2(%arg0: i32, %arg1: i32, %arg2: i32) -> (i32, i32) {
    %c0_i32 = arith.constant 0 : i32
    %c0_i32_0 = arith.constant 0 : i32
    return %c0_i32, %arg1 : i32, i32
  }
  func.func @transform_3(%arg0: i32, %arg1: i32, %arg2: i32) -> (i32, i32) {
    %c0_i32 = arith.constant 0 : i32
    return %arg0, %arg1 : i32, i32
  }
}

</mosaic_0001>

<llo_original>
// kernel: _lambda_.8
$region0: #{_lambda_.8}
  #allocation0 [shape = 'u32[]', space=smem, size = 0x4, offset = 0x4, fixed_abs, tag = 'smem constant byte address 0x4 - core index']
  #allocation1 [shape = 'u32[144,128]{1,0:T(1,128)}', space=vmem, size = 0x12000, scoped, tag = 'internal scratch']
  #allocation2 [shape = 'f32[168,128]{1,0:T(8,128)}', space=vmem, size = 0x15000, scoped, tag = 'scratch operand']
  %s0 = inlined_call_operand.vmem [shape: bf16[168,128], index: 0, kind: input, shape index: {}]
  %s1 = inlined_call_operand.vmem [shape: bf16[128,128], index: 1, kind: input, shape index: {}]
  %s2 = inlined_call_operand.vmem [shape: f32[1,128], index: 2, kind: input, shape index: {}]
  %s3 = inlined_call_operand.vmem [shape: f32[168,128], index: 3, kind: output, shape index: {}]
  %s4 = sld [smem:[#allocation0]]
  $region30: #{_lambda_.8} parent=0
    _
  %s6 = ssub.s32 1, %s4
  %s7 = scalar_select 0, %s6, %s4
  // Predicated region
  $region2: #{_lambda_.8} parent=0 // pred_check
    _
  $region3: #{_lambda_.8} parent=0 // pred_check_branch
    %9 = sbr.rel (0) target = $region5
  $region4: #{_lambda_.8} parent=0 // pred_region
    _
  $region5: #{_lambda_.8} parent=0 // pred_fallthru
    _
  // Predicated region
  $region6: #{_lambda_.8} parent=0 // pred_check
    _
  $region7: #{_lambda_.8} parent=0 // pred_check_branch
    %11 = sbr.rel (0) target = $region9
  $region8: #{_lambda_.8} parent=0 // pred_region
    _
  $region9: #{_lambda_.8} parent=0 // pred_fallthru
    _
  // Predicated region
  $region10: #{_lambda_.8} parent=0 // pred_check
    _
  $region11: #{_lambda_.8} parent=0 // pred_check_branch
    %13 = sbr.rel (0) target = $region13
  $region12: #{_lambda_.8} parent=0 // pred_region
    _
  $region13: #{_lambda_.8} parent=0 // pred_fallthru
    _
  %p15 = scmp.eq.s32.totalorder 0, 0
  // Predicated region
  $region14: #{_lambda_.8} parent=0 // pred_check
    %p16 = pneg %p15
  $region15: #{_lambda_.8} parent=0 // pred_check_branch
    %18 = sbr.rel (%p16) target = $region17
  $region16: #{_lambda_.8} parent=0 // pred_region
    %19 = vst [vmem:[#allocation2] sm:$0xff] 0.0
    %20 = vst [vmem:[#allocation2 + $0x8] sm:$0xff] 0.0
    %21 = vst [vmem:[#allocation2 + $0x10] sm:$0xff] 0.0
    %22 = vst [vmem:[#allocation2 + $0x18] sm:$0xff] 0.0
    %23 = vst [vmem:[#allocation2 + $0x20] sm:$0xff] 0.0
    %24 = vst [vmem:[#allocation2 + $0x28] sm:$0xff] 0.0
    %25 = vst [vmem:[#allocation2 + $0x30] sm:$0xff] 0.0
    %26 = vst [vmem:[#allocation2 + $0x38] sm:$0xff] 0.0
    %27 = vst [vmem:[#allocation2 + $0x40] sm:$0xff] 0.0
    %28 = vst [vmem:[#allocation2 + $0x48] sm:$0xff] 0.0
    %29 = vst [vmem:[#allocation2 + $0x50] sm:$0xff] 0.0
    %30 = vst [vmem:[#allocation2 + $0x58] sm:$0xff] 0.0
    %31 = vst [vmem:[#allocation2 + $0x60] sm:$0xff] 0.0
    %32 = vst [vmem:[#allocation2 + $0x68] sm:$0xff] 0.0
    %33 = vst [vmem:[#allocation2 + $0x70] sm:$0xff] 0.0
    %34 = vst [vmem:[#allocation2 + $0x78] sm:$0xff] 0.0
    %35 = vst [vmem:[#allocation2 + $0x80] sm:$0xff] 0.0
    %36 = vst [vmem:[#allocation2 + $0x88] sm:$0xff] 0.0
    %37 = vst [vmem:[#allocation2 + $0x90] sm:$0xff] 0.0
    %38 = vst [vmem:[#allocation2 + $0x98] sm:$0xff] 0.0
    %39 = vst [vmem:[#allocation2 + $0xa0] sm:$0xff] 0.0
  $region17: #{_lambda_.8} parent=0 // pred_fallthru
    _
  %v40 = vld [vmem:[#allocation2] sm:$0xff]
  %v41 = vld [vmem:[#allocation2 + $0x8] sm:$0xff]
  %v42 = vld [vmem:[#allocation2 + $0x10] sm:$0xff]
  %v43 = vld [vmem:[#allocation2 + $0x18] sm:$0xff]
  %v44 = vld [vmem:[#allocation2 + $0x20] sm:$0xff]
  %v45 = vld [vmem:[#allocation2 + $0x28] sm:$0xff]
  %v46 = vld [vmem:[#allocation2 + $0x30] sm:$0xff]
  %v47 = vld [vmem:[#allocation2 + $0x38] sm:$0xff]
  %v48 = vld [vmem:[#allocation2 + $0x40] sm:$0xff]
  %v49 = vld [vmem:[#allocation2 + $0x48] sm:$0xff]
  %v50 = vld [vmem:[#allocation2 + $0x50] sm:$0xff]
  %v51 = vld [vmem:[#allocation2 + $0x58] sm:$0xff]
  %v52 = vld [vmem:[#allocation2 + $0x60] sm:$0xff]
  %v53 = vld [vmem:[#allocation2 + $0x68] sm:$0xff]
  %v54 = vld [vmem:[#allocation2 + $0x70] sm:$0xff]
  %v55 = vld [vmem:[#allocation2 + $0x78] sm:$0xff]
  %v56 = vld [vmem:[#allocation2 + $0x80] sm:$0xff]
  %v57 = vld [vmem:[#allocation2 + $0x88] sm:$0xff]
  %v58 = vld [vmem:[#allocation2 + $0x90] sm:$0xff]
  %v59 = vld [vmem:[#allocation2 + $0x98] sm:$0xff]
  %v60 = vld [vmem:[#allocation2 + $0xa0] sm:$0xff]
  %v61 = vld [vmem:[%s0] sm:$0xf]
  %v62 = vld [vmem:[%s0 + $0x4] sm:$0xf]
  %v63 = vld [vmem:[%s0 + $0x8] sm:$0xf]
  %v64 = vld [vmem:[%s0 + $0xc] sm:$0xf]
  %v65 = vld [vmem:[%s0 + $0x10] sm:$0xf]
  %v66 = vld [vmem:[%s0 + $0x14] sm:$0xf]
  %v67 = vld [vmem:[%s0 + $0x18] sm:$0xf]
  %v68 = vld [vmem:[%s0 + $0x1c] sm:$0xf]
  %v69 = vld [vmem:[%s0 + $0x20] sm:$0xf]
  %v70 = vld [vmem:[%s0 + $0x24] sm:$0xf]
  %v71 = vld [vmem:[%s0 + $0x28] sm:$0xf]
  %v72 = vld [vmem:[%s0 + $0x2c] sm:$0xf]
  %v73 = vld [vmem:[%s0 + $0x30] sm:$0xf]
  %v74 = vld [vmem:[%s0 + $0x34] sm:$0xf]
  %v75 = vld [vmem:[%s0 + $0x38] sm:$0xf]
  %v76 = vld [vmem:[%s0 + $0x3c] sm:$0xf]
  %v77 = vld [vmem:[%s0 + $0x40] sm:$0xf]
  %v78 = vld [vmem:[%s0 + $0x44] sm:$0xf]
  %v79 = vld [vmem:[%s0 + $0x48] sm:$0xf]
  %v80 = vld [vmem:[%s0 + $0x4c] sm:$0xf]
  %v81 = vld [vmem:[%s0 + $0x50] sm:$0xf]
  %v82 = vld [vmem:[%s1] sm:$0xf]
  %v83 = vld [vmem:[%s1 + $0x4] sm:$0xf]
  %v84 = vld [vmem:[%s1 + $0x8] sm:$0xf]
  %v85 = vld [vmem:[%s1 + $0xc] sm:$0xf]
  %v86 = vld [vmem:[%s1 + $0x10] sm:$0xf]
  %v87 = vld [vmem:[%s1 + $0x14] sm:$0xf]
  %v88 = vld [vmem:[%s1 + $0x18] sm:$0xf]
  %v89 = vld [vmem:[%s1 + $0x1c] sm:$0xf]
  %v90 = vld [vmem:[%s1 + $0x20] sm:$0xf]
  %v91 = vld [vmem:[%s1 + $0x24] sm:$0xf]
  %v92 = vld [vmem:[%s1 + $0x28] sm:$0xf]
  %v93 = vld [vmem:[%s1 + $0x2c] sm:$0xf]
  %v94 = vld [vmem:[%s1 + $0x30] sm:$0xf]
  %v95 = vld [vmem:[%s1 + $0x34] sm:$0xf]
  %v96 = vld [vmem:[%s1 + $0x38] sm:$0xf]
  %v97 = vld [vmem:[%s1 + $0x3c] sm:$0xf]
  %v119 = vunpack.c.l.b16 %v61
  %v120 = vunpack.c.l.b16 %v62
  %v121 = vunpack.c.l.b16 %v63
  %v122 = vunpack.c.l.b16 %v64
  %v123 = vunpack.c.l.b16 %v65
  %v124 = vunpack.c.l.b16 %v66
  %v125 = vunpack.c.l.b16 %v67
  %v126 = vunpack.c.l.b16 %v68
  %v127 = vunpack.c.l.b16 %v69
  %v128 = vunpack.c.l.b16 %v70
  %v129 = vunpack.c.l.b16 %v71
  %v130 = vunpack.c.l.b16 %v72
  %v131 = vunpack.c.l.b16 %v73
  %v132 = vunpack.c.l.b16 %v74
  %v133 = vunpack.c.l.b16 %v75
  %v134 = vunpack.c.l.b16 %v76
  %v135 = vunpack.c.l.b16 %v77
  %v136 = vunpack.c.l.b16 %v78
  %v137 = vunpack.c.l.b16 %v79
  %v138 = vunpack.c.l.b16 %v80
  %v139 = vunpack.c.l.b16 %v81
  %v140 = vpack.c.b16 %v120, %v119
  %v141 = vpack.c.b16 %v122, %v121
  %v142 = vpack.c.b16 %v124, %v123
  %v143 = vpack.c.b16 %v126, %v125
  %v144 = vpack.c.b16 %v128, %v127
  %v145 = vpack.c.b16 %v130, %v129
  %v146 = vpack.c.b16 %v132, %v131
  %v147 = vpack.c.b16 %v134, %v133
  %v148 = vpack.c.b16 %v136, %v135
  %v149 = vpack.c.b16 %v138, %v137
  %v150 = vpack.c.b16 %v139, %v139
  %v178 = vunpack.c.l.b16 %v82
  %v179 = vunpack.c.l.b16 %v83
  %v180 = vunpack.c.l.b16 %v84
  %v181 = vunpack.c.l.b16 %v85
  %v182 = vunpack.c.l.b16 %v86
  %v183 = vunpack.c.l.b16 %v87
  %v184 = vunpack.c.l.b16 %v88
  %v185 = vunpack.c.l.b16 %v89
  %v186 = vunpack.c.l.b16 %v90
  %v187 = vunpack.c.l.b16 %v91
  %v188 = vunpack.c.l.b16 %v92
  %v189 = vunpack.c.l.b16 %v93
  %v190 = vunpack.c.l.b16 %v94
  %v191 = vunpack.c.l.b16 %v95
  %v192 = vunpack.c.l.b16 %v96
  %v193 = vunpack.c.l.b16 %v97
  %v194 = vpack.c.b16 %v179, %v178
  %v195 = vpack.c.b16 %v181, %v180
  %v196 = vpack.c.b16 %v183, %v182
  %v197 = vpack.c.b16 %v185, %v184
  %v198 = vpack.c.b16 %v187, %v186
  %v199 = vpack.c.b16 %v189, %v188
  %v200 = vpack.c.b16 %v191, %v190
  %v201 = vpack.c.b16 %v193, %v192
  %210 = vmatprep.subr.bf16.mxu0 0
  %211 = vmatpush1.bf16.msra.mxu0 %v194
  %212 = vmatprep.subr.bf16.mxu0 0
  %213 = vmatpush1.bf16.msra.mxu0 %v195
  %214 = vmatprep.subr.bf16.mxu0 0
  %215 = vmatpush1.bf16.msra.mxu0 %v196
  %216 = vmatprep.subr.bf16.mxu0 0
  %217 = vmatpush1.bf16.msra.mxu0 %v197
  %218 = vmatprep.subr.bf16.mxu0 0
  %219 = vmatpush1.bf16.msra.mxu0 %v198
  %220 = vmatprep.subr.bf16.mxu0 0
  %221 = vmatpush1.bf16.msra.mxu0 %v199
  %222 = vmatprep.subr.bf16.mxu0 0
  %223 = vmatpush1.bf16.msra.mxu0 %v200
  %224 = vmatprep.subr.bf16.mxu0 0
  %225 = vmatpush1.bf16.msra.mxu0 %v201
  %226 = vmatprep.subr.bf16.mxu0 0
  %227 = vmatpush1.bf16.msra.mxu0 0
  %228 = vmatprep.subr.bf16.mxu0 0
  %229 = vmatpush1.bf16.msra.mxu0 0
  %230 = vmatprep.subr.bf16.mxu0 0
  %231 = vmatpush1.bf16.msra.mxu0 0
  %232 = vmatprep.subr.bf16.mxu0 0
  %233 = vmatpush1.bf16.msra.mxu0 0
  %234 = vmatprep.subr.bf16.mxu0 0
  %235 = vmatpush1.bf16.msra.mxu0 0
  %236 = vmatprep.subr.bf16.mxu0 0
  %237 = vmatpush1.bf16.msra.mxu0 0
  %238 = vmatprep.subr.bf16.mxu0 0
  %239 = vmatpush1.bf16.msra.mxu0 0
  %240 = vmatprep.subr.bf16.mxu0 0
  %241 = vmatpush1.bf16.msra.mxu0 0
  %242 = vmatprep.mubr.bf16.mxu0 0
  %243 = vmatmul.mubr.bf16.gmra.mrb[0].mxu0 %v140
  %v244 = vpop.f32.mrb[0].mxu0
  %v245 = vadd.f32 0.0, %v244
  %v246 = vpop.f32.mrb[0].mxu0
  %v247 = vpop.f32.mrb[0].mxu0
  %v248 = vadd.f32 0.0, %v247
  %v249 = vpop.f32.mrb[0].mxu0
  %250 = vmatprep.mubr.bf16.mxu0 0
  %251 = vmatmul.mubr.bf16.gmra.mrb[0].mxu0 %v141
  %v252 = vpop.f32.mrb[0].mxu0
  %v253 = vadd.f32 0.0, %v252
  %v254 = vpop.f32.mrb[0].mxu0
  %v255 = vpop.f32.mrb[0].mxu0
  %v256 = vadd.f32 0.0, %v255
  %v257 = vpop.f32.mrb[0].mxu0
  %258 = vmatprep.mubr.bf16.mxu0 0
  %259 = vmatmul.mubr.bf16.gmra.mrb[0].mxu0 %v142
  %v260 = vpop.f32.mrb[0].mxu0
  %v261 = vadd.f32 0.0, %v260
  %v262 = vpop.f32.mrb[0].mxu0
  %v263 = vpop.f32.mrb[0].mxu0
  %v264 = vadd.f32 0.0, %v263
  %v265 = vpop.f32.mrb[0].mxu0
  %266 = vmatprep.mubr.bf16.mxu0 0
  %267 = vmatmul.mubr.bf16.gmra.mrb[0].mxu0 %v143
  %v268 = vpop.f32.mrb[0].mxu0
  %v269 = vadd.f32 0.0, %v268
  %v270 = vpop.f32.mrb[0].mxu0
  %v271 = vpop.f32.mrb[0].mxu0
  %v272 = vadd.f32 0.0, %v271
  %v273 = vpop.f32.mrb[0].mxu0
  %274 = vmatprep.mubr.bf16.mxu0 0
  %275 = vmatmul.mubr.bf16.gmra.mrb[0].mxu0 %v144
  %v276 = vpop.f32.mrb[0].mxu0
  %v277 = vadd.f32 0.0, %v276
  %v278 = vpop.f32.mrb[0].mxu0
  %v279 = vpop.f32.mrb[0].mxu0
  %v280 = vadd.f32 0.0, %v279
  %v281 = vpop.f32.mrb[0].mxu0
  %282 = vmatprep.mubr.bf16.mxu0 0
  %283 = vmatmul.mubr.bf16.gmra.mrb[0].mxu0 %v145
  %v284 = vpop.f32.mrb[0].mxu0
  %v285 = vadd.f32 0.0, %v284
  %v286 = vpop.f32.mrb[0].mxu0
  %v287 = vpop.f32.mrb[0].mxu0
  %v288 = vadd.f32 0.0, %v287
  %v289 = vpop.f32.mrb[0].mxu0
  %290 = vmatprep.mubr.bf16.mxu0 0
  %291 = vmatmul.mubr.bf16.gmra.mrb[0].mxu0 %v146
  %v292 = vpop.f32.mrb[0].mxu0
  %v293 = vadd.f32 0.0, %v292
  %v294 = vpop.f32.mrb[0].mxu0
  %v295 = vpop.f32.mrb[0].mxu0
  %v296 = vadd.f32 0.0, %v295
  %v297 = vpop.f32.mrb[0].mxu0
  %298 = vmatprep.mubr.bf16.mxu0 0
  %299 = vmatmul.mubr.bf16.gmra.mrb[0].mxu0 %v147
  %v300 = vpop.f32.mrb[0].mxu0
  %v301 = vadd.f32 0.0, %v300
  %v302 = vpop.f32.mrb[0].mxu0
  %v303 = vpop.f32.mrb[0].mxu0
  %v304 = vadd.f32 0.0, %v303
  %v305 = vpop.f32.mrb[0].mxu0
  %306 = vmatprep.mubr.bf16.mxu0 0
  %307 = vmatmul.mubr.bf16.gmra.mrb[0].mxu0 %v148
  %v308 = vpop.f32.mrb[0].mxu0
  %v309 = vadd.f32 0.0, %v308
  %v310 = vpop.f32.mrb[0].mxu0
  %v311 = vpop.f32.mrb[0].mxu0
  %v312 = vadd.f32 0.0, %v311
  %v313 = vpop.f32.mrb[0].mxu0
  %314 = vmatprep.mubr.bf16.mxu0 0
  %315 = vmatmul.mubr.bf16.gmra.mrb[0].mxu0 %v149
  %v316 = vpop.f32.mrb[0].mxu0
  %v317 = vadd.f32 0.0, %v316
  %v318 = vpop.f32.mrb[0].mxu0
  %v319 = vpop.f32.mrb[0].mxu0
  %v320 = vadd.f32 0.0, %v319
  %v321 = vpop.f32.mrb[0].mxu0
  %322 = vmatprep.mubr.bf16.mxu0 0
  %323 = vmatmul.mubr.bf16.gmra.mrb[0].mxu0 %v150
  %v324 = vpop.f32.mrb[0].mxu0
  %v325 = vadd.f32 0.0, %v324
  %v326 = vpop.f32.mrb[0].mxu0
  %v327 = vpop.f32.mrb[0].mxu0
  %v328 = vpop.f32.mrb[0].mxu0
  %329 = vdwg.mxu0
  %v330 = vadd.f32 %v40, %v245
  %v331 = vadd.f32 %v41, %v248
  %v332 = vadd.f32 %v42, %v253
  %v333 = vadd.f32 %v43, %v256
  %v334 = vadd.f32 %v44, %v261
  %v335 = vadd.f32 %v45, %v264
  %v336 = vadd.f32 %v46, %v269
  %v337 = vadd.f32 %v47, %v272
  %v338 = vadd.f32 %v48, %v277
  %v339 = vadd.f32 %v49, %v280
  %v340 = vadd.f32 %v50, %v285
  %v341 = vadd.f32 %v51, %v288
  %v342 = vadd.f32 %v52, %v293
  %v343 = vadd.f32 %v53, %v296
  %v344 = vadd.f32 %v54, %v301
  %v345 = vadd.f32 %v55, %v304
  %v346 = vadd.f32 %v56, %v309
  %v347 = vadd.f32 %v57, %v312
  %v348 = vadd.f32 %v58, %v317
  %v349 = vadd.f32 %v59, %v320
  %v350 = vadd.f32 %v60, %v325
  %351 = vst [vmem:[#allocation2] sm:$0xff] %v330
  %352 = vst [vmem:[#allocation2 + $0x8] sm:$0xff] %v331
  %353 = vst [vmem:[#allocation2 + $0x10] sm:$0xff] %v332
  %354 = vst [vmem:[#allocation2 + $0x18] sm:$0xff] %v333
  %355 = vst [vmem:[#allocation2 + $0x20] sm:$0xff] %v334
  %356 = vst [vmem:[#allocation2 + $0x28] sm:$0xff] %v335
  %357 = vst [vmem:[#allocation2 + $0x30] sm:$0xff] %v336
  %358 = vst [vmem:[#allocation2 + $0x38] sm:$0xff] %v337
  %359 = vst [vmem:[#allocation2 + $0x40] sm:$0xff] %v338
  %360 = vst [vmem:[#allocation2 + $0x48] sm:$0xff] %v339
  %361 = vst [vmem:[#allocation2 + $0x50] sm:$0xff] %v340
  %362 = vst [vmem:[#allocation2 + $0x58] sm:$0xff] %v341
  %363 = vst [vmem:[#allocation2 + $0x60] sm:$0xff] %v342
  %364 = vst [vmem:[#allocation2 + $0x68] sm:$0xff] %v343
  %365 = vst [vmem:[#allocation2 + $0x70] sm:$0xff] %v344
  %366 = vst [vmem:[#allocation2 + $0x78] sm:$0xff] %v345
  %367 = vst [vmem:[#allocation2 + $0x80] sm:$0xff] %v346
  %368 = vst [vmem:[#allocation2 + $0x88] sm:$0xff] %v347
  %369 = vst [vmem:[#allocation2 + $0x90] sm:$0xff] %v348
  %370 = vst [vmem:[#allocation2 + $0x98] sm:$0xff] %v349
  %371 = vst [vmem:[#allocation2 + $0xa0] sm:$0xff] %v350
  // Predicated region
  $region18: #{_lambda_.8} parent=0 // pred_check
    %p372 = pneg %p15
  $region19: #{_lambda_.8} parent=0 // pred_check_branch
    %374 = sbr.rel (%p372) target = $region21
  $region20: #{_lambda_.8} parent=0 // pred_region
    %v375 = vld [vmem:[#allocation2] sm:$0xff]
    %v376 = vld [vmem:[#allocation2 + $0x8] sm:$0xff]
    %v377 = vld [vmem:[#allocation2 + $0x10] sm:$0xff]
    %v378 = vld [vmem:[#allocation2 + $0x18] sm:$0xff]
    %v379 = vld [vmem:[#allocation2 + $0x20] sm:$0xff]
    %v380 = vld [vmem:[#allocation2 + $0x28] sm:$0xff]
    %v381 = vld [vmem:[#allocation2 + $0x30] sm:$0xff]
    %v382 = vld [vmem:[#allocation2 + $0x38] sm:$0xff]
    %v383 = vld [vmem:[#allocation2 + $0x40] sm:$0xff]
    %v384 = vld [vmem:[#allocation2 + $0x48] sm:$0xff]
    %v385 = vld [vmem:[#allocation2 + $0x50] sm:$0xff]
    %v386 = vld [vmem:[#allocation2 + $0x58] sm:$0xff]
    %v387 = vld [vmem:[#allocation2 + $0x60] sm:$0xff]
    %v388 = vld [vmem:[#allocation2 + $0x68] sm:$0xff]
    %v389 = vld [vmem:[#allocation2 + $0x70] sm:$0xff]
    %v390 = vld [vmem:[#allocation2 + $0x78] sm:$0xff]
    %v391 = vld [vmem:[#allocation2 + $0x80] sm:$0xff]
    %v392 = vld [vmem:[#allocation2 + $0x88] sm:$0xff]
    %v393 = vld [vmem:[#allocation2 + $0x90] sm:$0xff]
    %v394 = vld [vmem:[#allocation2 + $0x98] sm:$0xff]
    %v395 = vld [vmem:[#allocation2 + $0xa0] sm:$0xff]
    %v396 = vld [vmem:[%s2] sm:$0x1]
    %v398 = vlaneseq
    %v399 = vshrl.u32 %v398, 7
    %v400 = vsub.s32 0, %v399
    %v401 = vrot.slane %v396, %v400
    %v403 = vadd.f32 %v375, %v401
    %v404 = vadd.f32 %v376, %v401
    %v405 = vadd.f32 %v377, %v401
    %v406 = vadd.f32 %v378, %v401
    %v407 = vadd.f32 %v379, %v401
    %v408 = vadd.f32 %v380, %v401
    %v409 = vadd.f32 %v381, %v401
    %v410 = vadd.f32 %v382, %v401
    %v411 = vadd.f32 %v383, %v401
    %v412 = vadd.f32 %v384, %v401
    %v413 = vadd.f32 %v385, %v401
    %v414 = vadd.f32 %v386, %v401
    %v415 = vadd.f32 %v387, %v401
    %v416 = vadd.f32 %v388, %v401
    %v417 = vadd.f32 %v389, %v401
    %v418 = vadd.f32 %v390, %v401
    %v419 = vadd.f32 %v391, %v401
    %v420 = vadd.f32 %v392, %v401
    %v421 = vadd.f32 %v393, %v401
    %v422 = vadd.f32 %v394, %v401
    %v423 = vadd.f32 %v395, %v401
    %vm424 = vcmp.ge.f32.partialorder %v403, 0.0
    %vm425 = vcmp.ge.f32.partialorder %v404, 0.0
    %vm426 = vcmp.ge.f32.partialorder %v405, 0.0
    %vm427 = vcmp.ge.f32.partialorder %v406, 0.0
    %vm428 = vcmp.ge.f32.partialorder %v407, 0.0
    %vm429 = vcmp.ge.f32.partialorder %v408, 0.0
    %vm430 = vcmp.ge.f32.partialorder %v409, 0.0
    %vm431 = vcmp.ge.f32.partialorder %v410, 0.0
    %vm432 = vcmp.ge.f32.partialorder %v411, 0.0
    %vm433 = vcmp.ge.f32.partialorder %v412, 0.0
    %vm434 = vcmp.ge.f32.partialorder %v413, 0.0
    %vm435 = vcmp.ge.f32.partialorder %v414, 0.0
    %vm436 = vcmp.ge.f32.partialorder %v415, 0.0
    %vm437 = vcmp.ge.f32.partialorder %v416, 0.0
    %vm438 = vcmp.ge.f32.partialorder %v417, 0.0
    %vm439 = vcmp.ge.f32.partialorder %v418, 0.0
    %vm440 = vcmp.ge.f32.partialorder %v419, 0.0
    %vm441 = vcmp.ge.f32.partialorder %v420, 0.0
    %vm442 = vcmp.ge.f32.partialorder %v421, 0.0
    %vm443 = vcmp.ge.f32.partialorder %v422, 0.0
    %vm444 = vcmp.ge.f32.partialorder %v423, 0.0
    %v445 = vmul.f32 %v403, 0.2
    %v446 = vmul.f32 %v404, 0.2
    %v447 = vmul.f32 %v405, 0.2
    %v448 = vmul.f32 %v406, 0.2
    %v449 = vmul.f32 %v407, 0.2
    %v450 = vmul.f32 %v408, 0.2
    %v451 = vmul.f32 %v409, 0.2
    %v452 = vmul.f32 %v410, 0.2
    %v453 = vmul.f32 %v411, 0.2
    %v454 = vmul.f32 %v412, 0.2
    %v455 = vmul.f32 %v413, 0.2
    %v456 = vmul.f32 %v414, 0.2
    %v457 = vmul.f32 %v415, 0.2
    %v458 = vmul.f32 %v416, 0.2
    %v459 = vmul.f32 %v417, 0.2
    %v460 = vmul.f32 %v418, 0.2
    %v461 = vmul.f32 %v419, 0.2
    %v462 = vmul.f32 %v420, 0.2
    %v463 = vmul.f32 %v421, 0.2
    %v464 = vmul.f32 %v422, 0.2
    %v465 = vmul.f32 %v423, 0.2
    %v466 = vsel %vm424, %v403, %v445
    %v467 = vsel %vm425, %v404, %v446
    %v468 = vsel %vm426, %v405, %v447
    %v469 = vsel %vm427, %v406, %v448
    %v470 = vsel %vm428, %v407, %v449
    %v471 = vsel %vm429, %v408, %v450
    %v472 = vsel %vm430, %v409, %v451
    %v473 = vsel %vm431, %v410, %v452
    %v474 = vsel %vm432, %v411, %v453
    %v475 = vsel %vm433, %v412, %v454
    %v476 = vsel %vm434, %v413, %v455
    %v477 = vsel %vm435, %v414, %v456
    %v478 = vsel %vm436, %v415, %v457
    %v479 = vsel %vm437, %v416, %v458
    %v480 = vsel %vm438, %v417, %v459
    %v481 = vsel %vm439, %v418, %v460
    %v482 = vsel %vm440, %v419, %v461
    %v483 = vsel %vm441, %v420, %v462
    %v484 = vsel %vm442, %v421, %v463
    %v485 = vsel %vm443, %v422, %v464
    %v486 = vsel %vm444, %v423, %v465
    %487 = vst [vmem:[%s3] sm:$0xff] %v466
    %488 = vst [vmem:[%s3 + $0x8] sm:$0xff] %v467
    %489 = vst [vmem:[%s3 + $0x10] sm:$0xff] %v468
    %490 = vst [vmem:[%s3 + $0x18] sm:$0xff] %v469
    %491 = vst [vmem:[%s3 + $0x20] sm:$0xff] %v470
    %492 = vst [vmem:[%s3 + $0x28] sm:$0xff] %v471
    %493 = vst [vmem:[%s3 + $0x30] sm:$0xff] %v472
    %494 = vst [vmem:[%s3 + $0x38] sm:$0xff] %v473
    %495 = vst [vmem:[%s3 + $0x40] sm:$0xff] %v474
    %496 = vst [vmem:[%s3 + $0x48] sm:$0xff] %v475
    %497 = vst [vmem:[%s3 + $0x50] sm:$0xff] %v476
    %498 = vst [vmem:[%s3 + $0x58] sm:$0xff] %v477
    %499 = vst [vmem:[%s3 + $0x60] sm:$0xff] %v478
    %500 = vst [vmem:[%s3 + $0x68] sm:$0xff] %v479
    %501 = vst [vmem:[%s3 + $0x70] sm:$0xff] %v480
    %502 = vst [vmem:[%s3 + $0x78] sm:$0xff] %v481
    %503 = vst [vmem:[%s3 + $0x80] sm:$0xff] %v482
    %504 = vst [vmem:[%s3 + $0x88] sm:$0xff] %v483
    %505 = vst [vmem:[%s3 + $0x90] sm:$0xff] %v484
    %506 = vst [vmem:[%s3 + $0x98] sm:$0xff] %v485
    %507 = vst [vmem:[%s3 + $0xa0] sm:$0xff] %v486
  $region21: #{_lambda_.8} parent=0 // pred_fallthru
    _
  // Predicated region
  $region22: #{_lambda_.8} parent=0 // pred_check
    _
  $region23: #{_lambda_.8} parent=0 // pred_check_branch
    %509 = sbr.rel (0) target = $region25
  $region24: #{_lambda_.8} parent=0 // pred_region
    _
  $region25: #{_lambda_.8} parent=0 // pred_fallthru
    _
  // Predicated region
  $region26: #{_lambda_.8} parent=0 // pred_check
    _
  $region27: #{_lambda_.8} parent=0 // pred_check_branch
    %511 = sbr.rel (0) target = $region29
  $region28: #{_lambda_.8} parent=0 // pred_region
    _
  $region29: #{_lambda_.8} parent=0 // pred_fallthru
    _

// kernel: _lambda_.10
$region0: #{_lambda_.10}
  #allocation0 [shape = 'u32[]', space=smem, size = 0x4, offset = 0x4, fixed_abs, tag = 'smem constant byte address 0x4 - core index']
  #allocation1 [shape = 'u32[144,128]{1,0:T(1,128)}', space=vmem, size = 0x12000, scoped, tag = 'internal scratch']
  %s0 = inlined_call_operand.vmem [shape: f32[2,25,16], index: 0, kind: input, shape index: {}]
  %s1 = inlined_call_operand.vmem [shape: f32[1,16], index: 1, kind: input, shape index: {}]
  %s2 = inlined_call_operand.vmem [shape: f32[1,16], index: 2, kind: input, shape index: {}]
  %s3 = inlined_call_operand.vmem [shape: f32[2,25,16], index: 3, kind: output, shape index: {}]
  %s4 = sld [smem:[#allocation0]]
  $region45: #{_lambda_.10} parent=0
    _
  %s6 = ssub.s32 1, %s4
  %s7 = scalar_select 0, %s6, %s4
  loop: start=0, step=1, limit=4
  $region2: #{_lambda_.10} parent=0 // loop_pre_header
    _
  $region3: #{_lambda_.10} parent=0 // loop_header
    %s9 = sphi 0, %s13
    %p10 = scmp.ge.s32.totalorder %s9, 4
    %s19 = sphi 0, %s21
    %s22 = sphi 0, %s19
    %s23 = sphi 0, %s22
    %s39 = sphi 0, %s23
    %s43 = sphi 0, %s43
    %s45 = sphi 0, %s43
    %s46 = sphi 0, %s45
    %s60 = sphi 0, %s46
    %s64 = sphi 0, %s64
    %s66 = sphi 0, %s64
    %s67 = sphi 0, %s66
    %s81 = sphi 0, %s67
    %s87 = sphi 0, %s89
    %s90 = sphi 0, %s87
    %s91 = sphi 0, %s90
    %s107 = sphi 0, %s91
  $region4: #{_lambda_.10} parent=0 // loop_header_branch
    %12 = sbr.rel (%p10) target = $region8
  $region5: #{_lambda_.10} parent=0 // loop_body
    %s14 = ssub.s32 %s9, 1
    %s15 = ssub.s32 %s9, 2
    %s16 = sadd.s32 %s9, 1
    %s17 = ssub.s32 %s9, %s16
    %p18 = scmp.eq.s32.totalorder %s17, 0
    %s20 = sadd.s32 %s19, 1
    %s21 = scalar_select %p18, %s19, %s20
    %p24 = pneg %p18
    %p25 = scmp.eq.s32.totalorder %s9, 1
    %p26 = por %p24, %p25
    %p27 = scmp.ne.s32.totalorder %s19, %s22
    %p28 = scmp.eq.s32.totalorder %s9, 0
    %p29 = por %p27, %p28
    %p30 = scmp.ne.s32.totalorder %s19, %s22
    %p31 = scmp.eq.s32.totalorder %s14, 1
    %p32 = por %p30, %p31
    %p33 = scmp.ne.s32.totalorder %s22, %s23
    %p34 = scmp.eq.s32.totalorder %s14, 0
    %p35 = por %p33, %p34
    %p36 = scmp.ne.s32.totalorder %s22, %s23
    %p37 = scmp.eq.s32.totalorder %s15, 1
    %p38 = por %p36, %p37
    %p40 = scmp.ne.s32.totalorder %s23, %s39
    %p41 = scmp.eq.s32.totalorder %s15, 0
    %p42 = por %p40, %p41
    %s44 = sadd.s32 %s43, 1
    %p47 = scmp.eq.s32.totalorder %s9, 1
    %p48 = scmp.ne.s32.totalorder %s43, %s45
    %p49 = scmp.eq.s32.totalorder %s9, 0
    %p50 = por %p48, %p49
    %p51 = scmp.ne.s32.totalorder %s43, %s45
    %p52 = scmp.eq.s32.totalorder %s14, 1
    %p53 = por %p51, %p52
    %p54 = scmp.ne.s32.totalorder %s45, %s46
    %p55 = scmp.eq.s32.totalorder %s14, 0
    %p56 = por %p54, %p55
    %p57 = scmp.ne.s32.totalorder %s45, %s46
    %p58 = scmp.eq.s32.totalorder %s15, 1
    %p59 = por %p57, %p58
    %p61 = scmp.ne.s32.totalorder %s46, %s60
    %p62 = scmp.eq.s32.totalorder %s15, 0
    %p63 = por %p61, %p62
    %s65 = sadd.s32 %s64, 1
    %p68 = scmp.eq.s32.totalorder %s9, 1
    %p69 = scmp.ne.s32.totalorder %s64, %s66
    %p70 = scmp.eq.s32.totalorder %s9, 0
    %p71 = por %p69, %p70
    %p72 = scmp.ne.s32.totalorder %s64, %s66
    %p73 = scmp.eq.s32.totalorder %s14, 1
    %p74 = por %p72, %p73
    %p75 = scmp.ne.s32.totalorder %s66, %s67
    %p76 = scmp.eq.s32.totalorder %s14, 0
    %p77 = por %p75, %p76
    %p78 = scmp.ne.s32.totalorder %s66, %s67
    %p79 = scmp.eq.s32.totalorder %s15, 1
    %p80 = por %p78, %p79
    %p82 = scmp.ne.s32.totalorder %s67, %s81
    %p83 = scmp.eq.s32.totalorder %s15, 0
    %p84 = por %p82, %p83
    %s85 = ssub.s32 %s9, %s16
    %p86 = scmp.eq.s32.totalorder %s85, 0
    %s88 = sadd.s32 %s87, 1
    %s89 = scalar_select %p86, %s87, %s88
    %p92 = pneg %p86
    %p93 = scmp.eq.s32.totalorder %s9, 1
    %p94 = por %p92, %p93
    %p95 = scmp.ne.s32.totalorder %s87, %s90
    %p96 = scmp.eq.s32.totalorder %s9, 0
    %p97 = por %p95, %p96
    %p98 = scmp.ne.s32.totalorder %s87, %s90
    %p99 = scmp.eq.s32.totalorder %s14, 1
    %p100 = por %p98, %p99
    %p101 = scmp.ne.s32.totalorder %s90, %s91
    %p102 = scmp.eq.s32.totalorder %s14, 0
    %p103 = por %p101, %p102
    %p104 = scmp.ne.s32.totalorder %s90, %s91
    %p105 = scmp.eq.s32.totalorder %s15, 1
    %p106 = por %p104, %p105
    %p108 = scmp.ne.s32.totalorder %s91, %s107
    %p109 = scmp.eq.s32.totalorder %s15, 0
    %p110 = por %p108, %p109
    %p111 = scmp.le.s32.totalorder 1, %s9
    %p112 = scmp.lt.s32.totalorder %s9, 3
    %p113 = pnand %p111, %p112
    %p114 = pneg %p113
    // Predicated region
    $region9: #{_lambda_.10} parent=5 // pred_check
      _
    $region10: #{_lambda_.10} parent=5 // pred_check_branch
      %116 = sbr.rel (%p113) target = $region12
    $region11: #{_lambda_.10} parent=5 // pred_region
      %s117 = ssub.s32 %s9, 1
      // Predicated region
      $region13: #{_lambda_.10} parent=11 // pred_check
        %p118 = pneg %p56
      $region14: #{_lambda_.10} parent=11 // pred_check_branch
        %120 = sbr.rel (%p118) target = $region16
      $region15: #{_lambda_.10} parent=11 // pred_region
        _
      $region16: #{_lambda_.10} parent=11 // pred_fallthru
        _
      // Predicated region
      $region17: #{_lambda_.10} parent=11 // pred_check
        %p121 = pneg %p77
      $region18: #{_lambda_.10} parent=11 // pred_check_branch
        %123 = sbr.rel (%p121) target = $region20
      $region19: #{_lambda_.10} parent=11 // pred_region
        _
      $region20: #{_lambda_.10} parent=11 // pred_fallthru
        _
    $region12: #{_lambda_.10} parent=5 // pred_fallthru
      _
    %p124 = scmp.lt.s32.totalorder %s9, 2
    // Predicated region
    $region21: #{_lambda_.10} parent=5 // pred_check
      %p125 = pneg %p124
    $region22: #{_lambda_.10} parent=5 // pred_check_branch
      %127 = sbr.rel (%p125) target = $region24
    $region23: #{_lambda_.10} parent=5 // pred_region
      // Predicated region
      $region25: #{_lambda_.10} parent=23 // pred_check
        %p128 = pneg %p29
      $region26: #{_lambda_.10} parent=23 // pred_check_branch
        %130 = sbr.rel (%p128) target = $region28
      $region27: #{_lambda_.10} parent=23 // pred_region
        %p131 = scmp.lt.s32.totalorder %s9, 1
        %s132 = scalar_select %p131, %s9, 1
        %s133 = smul.addr %s132, 4
        %s134 = smul.addr %s133, 8
        %s135 = scalar_lea.vmem %s0, %s134
      $region28: #{_lambda_.10} parent=23 // pred_fallthru
        _
    $region24: #{_lambda_.10} parent=5 // pred_fallthru
      _
    %p136 = scmp.le.s32.totalorder 1, %s9
    %p137 = scmp.lt.s32.totalorder %s9, 3
    %p138 = pnand %p136, %p137
    %p139 = pneg %p138
    // Predicated region
    $region29: #{_lambda_.10} parent=5 // pred_check
      _
    $region30: #{_lambda_.10} parent=5 // pred_check_branch
      %141 = sbr.rel (%p138) target = $region32
    $region31: #{_lambda_.10} parent=5 // pred_region
      %s142 = ssub.s32 %s9, 1
      %p143 = scmp.lt.s32.totalorder %s14, 1
      %s144 = scalar_select %p143, %s14, 1
      %s145 = smul.addr %s144, 4
      %s146 = smul.addr %s145, 8
      %s147 = scalar_lea.vmem %s0, %s146
      %p148 = pneg %p35
      %p149 = pneg %p32
      %p150 = pneg %p56
      %p151 = pneg %p53
      %p152 = pneg %p77
      %p153 = pneg %p74
      %p154 = pneg %p103
      %p155 = pneg %p100
      %p156 = scmp.lt.s32.totalorder %s14, 1
      %s157 = scalar_select %p156, %s14, 1
      %s158 = smul.addr %s157, 4
      %s159 = smul.addr %s158, 8
      %s160 = scalar_lea.vmem %s3, %s159
      %p161 = scmp.lt.s32.totalorder %s14, 1
      %s162 = scalar_select %p161, %s14, 1
      %s163 = smul.addr %s162, 4
      %s164 = smul.addr %s163, 8
      %s165 = scalar_lea.vmem %s0, %s164
      %p166 = scmp.lt.s32.totalorder %s14, 1
      %s167 = scalar_select %p166, %s14, 1
      %s168 = smul.addr %s167, 4
      %s169 = smul.addr %s168, 8
      %s170 = scalar_lea.vmem %s3, %s169
      %v171 = vld [vmem:[%s165] sm:$0xff]
      %v172 = vld [vmem:[%s165 + $0x8] sm:$0xff]
      %v173 = vld [vmem:[%s165 + $0x10] sm:$0xff]
      %v174 = vld [vmem:[%s165 + $0x18] sm:$0x1]
      %vm175 = vcmask 130048
      %v176 = vsel %vm175, %v171, 0.0
      %v177 = vsel %vm175, %v172, 0.0
      %v178 = vadd.f32 %v176, %v177
      %v179 = vsel %vm175, %v173, 0.0
      %v180 = vadd.f32 %v178, %v179
      %vm181 = vcmask 122880
      %v182 = vsel %vm181, %v174, 0.0
      %v183 = vadd.f32 %v180, %v182
      %v184 = vrot.slane %v183, 4
      %v185 = vadd.f32 %v183, %v184
      %v186 = vrot.slane %v185, 2
      %v187 = vadd.f32 %v185, %v186
      %v188 = vrot.slane %v187, 1
      %v189 = vadd.f32 %v187, %v188
      %v190 = vmul.f32 %v171, %v171
      %v191 = vmul.f32 %v172, %v172
      %v192 = vmul.f32 %v173, %v173
      %v193 = vmul.f32 %v174, %v174
      %v194 = vsel %vm175, %v190, 0.0
      %v195 = vsel %vm175, %v191, 0.0
      %v196 = vadd.f32 %v194, %v195
      %v197 = vsel %vm175, %v192, 0.0
      %v198 = vadd.f32 %v196, %v197
      %v199 = vsel %vm181, %v193, 0.0
      %v200 = vadd.f32 %v198, %v199
      %v201 = vrot.slane %v200, 4
      %v202 = vadd.f32 %v200, %v201
      %v203 = vrot.slane %v202, 2
      %v204 = vadd.f32 %v202, %v203
      %v205 = vrot.slane %v204, 1
      %v206 = vadd.f32 %v204, %v205
      %v207 = vmul.f32 %v189, 0.04
      %v208 = vmul.f32 %v206, 0.04
      %v209 = vmul.f32 %v207, %v207
      %v210 = vsub.f32 %v208, %v209
      %v211 = vmax.f32 %v210, 0.0
      %v212 = vadd.f32 %v211, 1e-05
      %v213 = vrsqrt.pop %v212
      %v214 = vld [vmem:[%s1] sm:$0x1]
      %v215 = vmul.f32 %v213, %v214
      %v216 = vsub.f32 %v171, %v207
      %v217 = vsub.f32 %v172, %v207
      %v218 = vsub.f32 %v173, %v207
      %v219 = vsub.f32 %v174, %v207
      %v220 = vlaneseq
      %v221 = vshrl.u32 %v220, 7
      %v222 = vsub.s32 0, %v221
      %v223 = vrot.slane %v215, %v222
      %v224 = vmul.f32 %v216, %v223
      %v225 = vmul.f32 %v217, %v223
      %v226 = vmul.f32 %v218, %v223
      %v227 = vmul.f32 %v219, %v223
      %v228 = vld [vmem:[%s2] sm:$0x1]
      %v230 = vlaneseq
      %v231 = vshrl.u32 %v230, 7
      %v232 = vsub.s32 0, %v231
      %v233 = vrot.slane %v228, %v232
      %v235 = vadd.f32 %v224, %v233
      %v236 = vadd.f32 %v225, %v233
      %v237 = vadd.f32 %v226, %v233
      %v238 = vadd.f32 %v227, %v233
      %vm239 = vcmp.ge.f32.partialorder %v235, 0.0
      %vm240 = vcmp.ge.f32.partialorder %v236, 0.0
      %vm241 = vcmp.ge.f32.partialorder %v237, 0.0
      %vm242 = vcmp.ge.f32.partialorder %v238, 0.0
      %v243 = vmul.f32 %v235, 0.2
      %v244 = vmul.f32 %v236, 0.2
      %v245 = vmul.f32 %v237, 0.2
      %v246 = vmul.f32 %v238, 0.2
      %v247 = vsel %vm239, %v235, %v243
      %v248 = vsel %vm240, %v236, %v244
      %v249 = vsel %vm241, %v237, %v245
      %v250 = vsel %vm242, %v238, %v246
      %251 = vst.msk [vmem:[%s170] sm:$0xff] %vm175, %v247
      %252 = vst.msk [vmem:[%s170 + $0x8] sm:$0xff] %vm175, %v248
      %253 = vst.msk [vmem:[%s170 + $0x10] sm:$0xff] %vm175, %v249
      %254 = vst.msk [vmem:[%s170 + $0x18] sm:$0x1] %vm181, %v250
      %p255 = scmp.lt.s32.totalorder %s14, 1
      %s256 = scalar_select %p255, %s14, 1
      %s257 = smul.addr %s256, 4
      %s258 = smul.addr %s257, 8
      %s259 = scalar_lea.vmem %s3, %s258
      // Predicated region
      $region33: #{_lambda_.10} parent=31 // pred_check
        %p260 = pneg %p100
      $region34: #{_lambda_.10} parent=31 // pred_check_branch
        %262 = sbr.rel (%p260) target = $region36
      $region35: #{_lambda_.10} parent=31 // pred_region
        _
      $region36: #{_lambda_.10} parent=31 // pred_fallthru
        _
    $region32: #{_lambda_.10} parent=5 // pred_fallthru
      _
    %p263 = scmp.le.s32.totalorder 2, %s9
    // Predicated region
    $region37: #{_lambda_.10} parent=5 // pred_check
      %p264 = pneg %p263
    $region38: #{_lambda_.10} parent=5 // pred_check_branch
      %266 = sbr.rel (%p264) target = $region40
    $region39: #{_lambda_.10} parent=5 // pred_region
      %s267 = ssub.s32 %s9, 2
      // Predicated region
      $region41: #{_lambda_.10} parent=39 // pred_check
        %p268 = pneg %p106
      $region42: #{_lambda_.10} parent=39 // pred_check_branch
        %270 = sbr.rel (%p268) target = $region44
      $region43: #{_lambda_.10} parent=39 // pred_region
        %p271 = scmp.lt.s32.totalorder %s15, 1
        %s272 = scalar_select %p271, %s15, 1
        %s273 = smul.addr %s272, 4
        %s274 = smul.addr %s273, 8
        %s275 = scalar_lea.vmem %s3, %s274
      $region44: #{_lambda_.10} parent=39 // pred_fallthru
        _
    $region40: #{_lambda_.10} parent=5 // pred_fallthru
      _
  $region6: #{_lambda_.10} parent=0 // loop_footer
    %s13 = sadd.s32 1, %s9
  $region7: #{_lambda_.10} parent=0 // loop_footer_branch
    %8 = sbr.rel target = $region3
  $region8: #{_lambda_.10} parent=0 // loop_exit
    _

// kernel: _lambda_.9
$region0: #{_lambda_.9}
  #allocation0 [shape = 'u32[]', space=smem, size = 0x4, offset = 0x4, fixed_abs, tag = 'smem constant byte address 0x4 - core index']
  #allocation1 [shape = 'u32[144,128]{1,0:T(1,128)}', space=vmem, size = 0x12000, scoped, tag = 'internal scratch']
  #allocation2 [shape = 'f32[56,128]{1,0:T(8,128)}', space=vmem, size = 0x7000, scoped, tag = 'scratch operand']
  %s0 = inlined_call_operand.vmem [shape: bf16[56,128], index: 0, kind: input, shape index: {}]
  %s1 = inlined_call_operand.vmem [shape: bf16[128,128], index: 1, kind: input, shape index: {}]
  %s2 = inlined_call_operand.vmem [shape: f32[1,128], index: 2, kind: input, shape index: {}]
  %s3 = inlined_call_operand.vmem [shape: f32[56,128], index: 3, kind: output, shape index: {}]
  %s4 = sld [smem:[#allocation0]]
  $region30: #{_lambda_.9} parent=0
    _
  %s6 = ssub.s32 1, %s4
  %s7 = scalar_select 0, %s6, %s4
  // Predicated region
  $region2: #{_lambda_.9} parent=0 // pred_check
    _
  $region3: #{_lambda_.9} parent=0 // pred_check_branch
    %9 = sbr.rel (0) target = $region5
  $region4: #{_lambda_.9} parent=0 // pred_region
    _
  $region5: #{_lambda_.9} parent=0 // pred_fallthru
    _
  // Predicated region
  $region6: #{_lambda_.9} parent=0 // pred_check
    _
  $region7: #{_lambda_.9} parent=0 // pred_check_branch
    %11 = sbr.rel (0) target = $region9
  $region8: #{_lambda_.9} parent=0 // pred_region
    _
  $region9: #{_lambda_.9} parent=0 // pred_fallthru
    _
  // Predicated region
  $region10: #{_lambda_.9} parent=0 // pred_check
    _
  $region11: #{_lambda_.9} parent=0 // pred_check_branch
    %13 = sbr.rel (0) target = $region13
  $region12: #{_lambda_.9} parent=0 // pred_region
    _
  $region13: #{_lambda_.9} parent=0 // pred_fallthru
    _
  %p15 = scmp.eq.s32.totalorder 0, 0
  // Predicated region
  $region14: #{_lambda_.9} parent=0 // pred_check
    %p16 = pneg %p15
  $region15: #{_lambda_.9} parent=0 // pred_check_branch
    %18 = sbr.rel (%p16) target = $region17
  $region16: #{_lambda_.9} parent=0 // pred_region
    %19 = vst [vmem:[#allocation2] sm:$0xff] 0.0
    %20 = vst [vmem:[#allocation2 + $0x8] sm:$0xff] 0.0
    %21 = vst [vmem:[#allocation2 + $0x10] sm:$0xff] 0.0
    %22 = vst [vmem:[#allocation2 + $0x18] sm:$0xff] 0.0
    %23 = vst [vmem:[#allocation2 + $0x20] sm:$0xff] 0.0
    %24 = vst [vmem:[#allocation2 + $0x28] sm:$0xff] 0.0
    %25 = vst [vmem:[#allocation2 + $0x30] sm:$0xff] 0.0
  $region17: #{_lambda_.9} parent=0 // pred_fallthru
    _
  %v26 = vld [vmem:[#allocation2] sm:$0xff]
  %v27 = vld [vmem:[#allocation2 + $0x8] sm:$0xff]
  %v28 = vld [vmem:[#allocation2 + $0x10] sm:$0xff]
  %v29 = vld [vmem:[#allocation2 + $0x18] sm:$0xff]
  %v30 = vld [vmem:[#allocation2 + $0x20] sm:$0xff]
  %v31 = vld [vmem:[#allocation2 + $0x28] sm:$0xff]
  %v32 = vld [vmem:[#allocation2 + $0x30] sm:$0xff]
  %v33 = vld [vmem:[%s0] sm:$0xf]
  %v34 = vld [vmem:[%s0 + $0x4] sm:$0xf]
  %v35 = vld [vmem:[%s0 + $0x8] sm:$0xf]
  %v36 = vld [vmem:[%s0 + $0xc] sm:$0xf]
  %v37 = vld [vmem:[%s0 + $0x10] sm:$0xf]
  %v38 = vld [vmem:[%s0 + $0x14] sm:$0xf]
  %v39 = vld [vmem:[%s0 + $0x18] sm:$0xf]
  %v40 = vld [vmem:[%s1] sm:$0xf]
  %v41 = vld [vmem:[%s1 + $0x4] sm:$0xf]
  %v42 = vld [vmem:[%s1 + $0x8] sm:$0xf]
  %v43 = vld [vmem:[%s1 + $0xc] sm:$0xf]
  %v44 = vld [vmem:[%s1 + $0x10] sm:$0xf]
  %v45 = vld [vmem:[%s1 + $0x14] sm:$0xf]
  %v46 = vld [vmem:[%s1 + $0x18] sm:$0xf]
  %v47 = vld [vmem:[%s1 + $0x1c] sm:$0xf]
  %v48 = vld [vmem:[%s1 + $0x20] sm:$0xf]
  %v49 = vld [vmem:[%s1 + $0x24] sm:$0xf]
  %v50 = vld [vmem:[%s1 + $0x28] sm:$0xf]
  %v51 = vld [vmem:[%s1 + $0x2c] sm:$0xf]
  %v52 = vld [vmem:[%s1 + $0x30] sm:$0xf]
  %v53 = vld [vmem:[%s1 + $0x34] sm:$0xf]
  %v54 = vld [vmem:[%s1 + $0x38] sm:$0xf]
  %v55 = vld [vmem:[%s1 + $0x3c] sm:$0xf]
  %v63 = vunpack.c.l.b16 %v33
  %v64 = vunpack.c.l.b16 %v34
  %v65 = vunpack.c.l.b16 %v35
  %v66 = vunpack.c.l.b16 %v36
  %v67 = vunpack.c.l.b16 %v37
  %v68 = vunpack.c.l.b16 %v38
  %v69 = vunpack.c.l.b16 %v39
  %v70 = vpack.c.b16 %v64, %v63
  %v71 = vpack.c.b16 %v66, %v65
  %v72 = vpack.c.b16 %v68, %v67
  %v73 = vpack.c.b16 %v69, %v69
  %v94 = vunpack.c.l.b16 %v40
  %v95 = vunpack.c.l.b16 %v41
  %v96 = vunpack.c.l.b16 %v42
  %v97 = vunpack.c.l.b16 %v43
  %v98 = vunpack.c.l.b16 %v44
  %v99 = vunpack.c.l.b16 %v45
  %v100 = vunpack.c.l.b16 %v46
  %v101 = vunpack.c.l.b16 %v47
  %v102 = vunpack.c.l.b16 %v48
  %v103 = vunpack.c.l.b16 %v49
  %v104 = vunpack.c.l.b16 %v50
  %v105 = vunpack.c.l.b16 %v51
  %v106 = vunpack.c.l.b16 %v52
  %v107 = vunpack.c.l.b16 %v53
  %v108 = vunpack.c.l.b16 %v54
  %v109 = vunpack.c.l.b16 %v55
  %v110 = vpack.c.b16 %v95, %v94
  %v111 = vpack.c.b16 %v97, %v96
  %v112 = vpack.c.b16 %v99, %v98
  %v113 = vpack.c.b16 %v101, %v100
  %v114 = vpack.c.b16 %v103, %v102
  %v115 = vpack.c.b16 %v105, %v104
  %v116 = vpack.c.b16 %v107, %v106
  %v117 = vpack.c.b16 %v109, %v108
  %126 = vmatprep.subr.bf16.mxu0 0
  %127 = vmatpush1.bf16.msra.mxu0 %v110
  %128 = vmatprep.subr.bf16.mxu0 0
  %129 = vmatpush1.bf16.msra.mxu0 %v111
  %130 = vmatprep.subr.bf16.mxu0 0
  %131 = vmatpush1.bf16.msra.mxu0 %v112
  %132 = vmatprep.subr.bf16.mxu0 0
  %133 = vmatpush1.bf16.msra.mxu0 %v113
  %134 = vmatprep.subr.bf16.mxu0 0
  %135 = vmatpush1.bf16.msra.mxu0 %v114
  %136 = vmatprep.subr.bf16.mxu0 0
  %137 = vmatpush1.bf16.msra.mxu0 %v115
  %138 = vmatprep.subr.bf16.mxu0 0
  %139 = vmatpush1.bf16.msra.mxu0 %v116
  %140 = vmatprep.subr.bf16.mxu0 0
  %141 = vmatpush1.bf16.msra.mxu0 %v117
  %142 = vmatprep.subr.bf16.mxu0 0
  %143 = vmatpush1.bf16.msra.mxu0 0
  %144 = vmatprep.subr.bf16.mxu0 0
  %145 = vmatpush1.bf16.msra.mxu0 0
  %146 = vmatprep.subr.bf16.mxu0 0
  %147 = vmatpush1.bf16.msra.mxu0 0
  %148 = vmatprep.subr.bf16.mxu0 0
  %149 = vmatpush1.bf16.msra.mxu0 0
  %150 = vmatprep.subr.bf16.mxu0 0
  %151 = vmatpush1.bf16.msra.mxu0 0
  %152 = vmatprep.subr.bf16.mxu0 0
  %153 = vmatpush1.bf16.msra.mxu0 0
  %154 = vmatprep.subr.bf16.mxu0 0
  %155 = vmatpush1.bf16.msra.mxu0 0
  %156 = vmatprep.subr.bf16.mxu0 0
  %157 = vmatpush1.bf16.msra.mxu0 0
  %158 = vmatprep.mubr.bf16.mxu0 0
  %159 = vmatmul.mubr.bf16.gmra.mrb[0].mxu0 %v70
  %v160 = vpop.f32.mrb[0].mxu0
  %v161 = vadd.f32 0.0, %v160
  %v162 = vpop.f32.mrb[0].mxu0
  %v163 = vpop.f32.mrb[0].mxu0
  %v164 = vadd.f32 0.0, %v163
  %v165 = vpop.f32.mrb[0].mxu0
  %166 = vmatprep.mubr.bf16.mxu0 0
  %167 = vmatmul.mubr.bf16.gmra.mrb[0].mxu0 %v71
  %v168 = vpop.f32.mrb[0].mxu0
  %v169 = vadd.f32 0.0, %v168
  %v170 = vpop.f32.mrb[0].mxu0
  %v171 = vpop.f32.mrb[0].mxu0
  %v172 = vadd.f32 0.0, %v171
  %v173 = vpop.f32.mrb[0].mxu0
  %174 = vmatprep.mubr.bf16.mxu0 0
  %175 = vmatmul.mubr.bf16.gmra.mrb[0].mxu0 %v72
  %v176 = vpop.f32.mrb[0].mxu0
  %v177 = vadd.f32 0.0, %v176
  %v178 = vpop.f32.mrb[0].mxu0
  %v179 = vpop.f32.mrb[0].mxu0
  %v180 = vadd.f32 0.0, %v179
  %v181 = vpop.f32.mrb[0].mxu0
  %182 = vmatprep.mubr.bf16.mxu0 0
  %183 = vmatmul.mubr.bf16.gmra.mrb[0].mxu0 %v73
  %v184 = vpop.f32.mrb[0].mxu0
  %v185 = vadd.f32 0.0, %v184
  %v186 = vpop.f32.mrb[0].mxu0
  %v187 = vpop.f32.mrb[0].mxu0
  %v188 = vpop.f32.mrb[0].mxu0
  %189 = vdwg.mxu0
  %v190 = vadd.f32 %v26, %v161
  %v191 = vadd.f32 %v27, %v164
  %v192 = vadd.f32 %v28, %v169
  %v193 = vadd.f32 %v29, %v172
  %v194 = vadd.f32 %v30, %v177
  %v195 = vadd.f32 %v31, %v180
  %v196 = vadd.f32 %v32, %v185
  %197 = vst [vmem:[#allocation2] sm:$0xff] %v190
  %198 = vst [vmem:[#allocation2 + $0x8] sm:$0xff] %v191
  %199 = vst [vmem:[#allocation2 + $0x10] sm:$0xff] %v192
  %200 = vst [vmem:[#allocation2 + $0x18] sm:$0xff] %v193
  %201 = vst [vmem:[#allocation2 + $0x20] sm:$0xff] %v194
  %202 = vst [vmem:[#allocation2 + $0x28] sm:$0xff] %v195
  %203 = vst [vmem:[#allocation2 + $0x30] sm:$0xff] %v196
  // Predicated region
  $region18: #{_lambda_.9} parent=0 // pred_check
    %p204 = pneg %p15
  $region19: #{_lambda_.9} parent=0 // pred_check_branch
    %206 = sbr.rel (%p204) target = $region21
  $region20: #{_lambda_.9} parent=0 // pred_region
    %v207 = vld [vmem:[#allocation2] sm:$0xff]
    %v208 = vld [vmem:[#allocation2 + $0x8] sm:$0xff]
    %v209 = vld [vmem:[#allocation2 + $0x10] sm:$0xff]
    %v210 = vld [vmem:[#allocation2 + $0x18] sm:$0xff]
    %v211 = vld [vmem:[#allocation2 + $0x20] sm:$0xff]
    %v212 = vld [vmem:[#allocation2 + $0x28] sm:$0xff]
    %v213 = vld [vmem:[#allocation2 + $0x30] sm:$0xff]
    %v214 = vld [vmem:[%s2] sm:$0x1]
    %v216 = vlaneseq
    %v217 = vshrl.u32 %v216, 7
    %v218 = vsub.s32 0, %v217
    %v219 = vrot.slane %v214, %v218
    %v221 = vadd.f32 %v207, %v219
    %v222 = vadd.f32 %v208, %v219
    %v223 = vadd.f32 %v209, %v219
    %v224 = vadd.f32 %v210, %v219
    %v225 = vadd.f32 %v211, %v219
    %v226 = vadd.f32 %v212, %v219
    %v227 = vadd.f32 %v213, %v219
    %228 = vst [vmem:[%s3] sm:$0xff] %v221
    %229 = vst [vmem:[%s3 + $0x8] sm:$0xff] %v222
    %230 = vst [vmem:[%s3 + $0x10] sm:$0xff] %v223
    %231 = vst [vmem:[%s3 + $0x18] sm:$0xff] %v224
    %232 = vst [vmem:[%s3 + $0x20] sm:$0xff] %v225
    %233 = vst [vmem:[%s3 + $0x28] sm:$0xff] %v226
    %234 = vst [vmem:[%s3 + $0x30] sm:$0xff] %v227
  $region21: #{_lambda_.9} parent=0 // pred_fallthru
    _
  // Predicated region
  $region22: #{_lambda_.9} parent=0 // pred_check
    _
  $region23: #{_lambda_.9} parent=0 // pred_check_branch
    %236 = sbr.rel (0) target = $region25
  $region24: #{_lambda_.9} parent=0 // pred_region
    _
  $region25: #{_lambda_.9} parent=0 // pred_fallthru
    _
  // Predicated region
  $region26: #{_lambda_.9} parent=0 // pred_check
    _
  $region27: #{_lambda_.9} parent=0 // pred_check_branch
    %238 = sbr.rel (0) target = $region29
  $region28: #{_lambda_.9} parent=0 // pred_region
    _
  $region29: #{_lambda_.9} parent=0 // pred_fallthru
    _

// kernel: _lambda_.11
$region0: #{_lambda_.11}
  #allocation0 [shape = 'u32[]', space=smem, size = 0x4, offset = 0x4, fixed_abs, tag = 'smem constant byte address 0x4 - core index']
  #allocation1 [shape = 'u32[144,128]{1,0:T(1,128)}', space=vmem, size = 0x12000, scoped, tag = 'internal scratch']
  #allocation2 [shape = 'f32[24,128]{1,0:T(8,128)}', space=vmem, size = 0x3000, scoped, tag = 'scratch operand']
  %s0 = inlined_call_operand.vmem [shape: bf16[24,256], index: 0, kind: input, shape index: {}]
  %s1 = inlined_call_operand.vmem [shape: bf16[256,128], index: 1, kind: input, shape index: {}]
  %s2 = inlined_call_operand.vmem [shape: f32[1,128], index: 2, kind: input, shape index: {}]
  %s3 = inlined_call_operand.vmem [shape: f32[24,128], index: 3, kind: output, shape index: {}]
  %s4 = sld [smem:[#allocation0]]
  $region30: #{_lambda_.11} parent=0
    _
  %s6 = ssub.s32 1, %s4
  %s7 = scalar_select 0, %s6, %s4
  // Predicated region
  $region2: #{_lambda_.11} parent=0 // pred_check
    _
  $region3: #{_lambda_.11} parent=0 // pred_check_branch
    %9 = sbr.rel (0) target = $region5
  $region4: #{_lambda_.11} parent=0 // pred_region
    _
  $region5: #{_lambda_.11} parent=0 // pred_fallthru
    _
  // Predicated region
  $region6: #{_lambda_.11} parent=0 // pred_check
    _
  $region7: #{_lambda_.11} parent=0 // pred_check_branch
    %11 = sbr.rel (0) target = $region9
  $region8: #{_lambda_.11} parent=0 // pred_region
    _
  $region9: #{_lambda_.11} parent=0 // pred_fallthru
    _
  // Predicated region
  $region10: #{_lambda_.11} parent=0 // pred_check
    _
  $region11: #{_lambda_.11} parent=0 // pred_check_branch
    %13 = sbr.rel (0) target = $region13
  $region12: #{_lambda_.11} parent=0 // pred_region
    _
  $region13: #{_lambda_.11} parent=0 // pred_fallthru
    _
  %p15 = scmp.eq.s32.totalorder 0, 0
  // Predicated region
  $region14: #{_lambda_.11} parent=0 // pred_check
    %p16 = pneg %p15
  $region15: #{_lambda_.11} parent=0 // pred_check_branch
    %18 = sbr.rel (%p16) target = $region17
  $region16: #{_lambda_.11} parent=0 // pred_region
    %19 = vst [vmem:[#allocation2] sm:$0xff] 0.0
    %20 = vst [vmem:[#allocation2 + $0x8] sm:$0xff] 0.0
    %21 = vst [vmem:[#allocation2 + $0x10] sm:$0xff] 0.0
  $region17: #{_lambda_.11} parent=0 // pred_fallthru
    _
  %v22 = vld [vmem:[#allocation2] sm:$0xff]
  %v23 = vld [vmem:[#allocation2 + $0x8] sm:$0xff]
  %v24 = vld [vmem:[#allocation2 + $0x10] sm:$0xff]
  %v25 = vld [vmem:[%s0] sm:$0xff]
  %v26 = vld [vmem:[%s0 + $0x8] sm:$0xff]
  %v27 = vld [vmem:[%s0 + $0x10] sm:$0xff]
  %v28 = vld [vmem:[%s1] sm:$0xf]
  %v29 = vld [vmem:[%s1 + $0x4] sm:$0xf]
  %v30 = vld [vmem:[%s1 + $0x8] sm:$0xf]
  %v31 = vld [vmem:[%s1 + $0xc] sm:$0xf]
  %v32 = vld [vmem:[%s1 + $0x10] sm:$0xf]
  %v33 = vld [vmem:[%s1 + $0x14] sm:$0xf]
  %v34 = vld [vmem:[%s1 + $0x18] sm:$0xf]
  %v35 = vld [vmem:[%s1 + $0x1c] sm:$0xf]
  %v36 = vld [vmem:[%s1 + $0x20] sm:$0xf]
  %v37 = vld [vmem:[%s1 + $0x24] sm:$0xf]
  %v38 = vld [vmem:[%s1 + $0x28] sm:$0xf]
  %v39 = vld [vmem:[%s1 + $0x2c] sm:$0xf]
  %v40 = vld [vmem:[%s1 + $0x30] sm:$0xf]
  %v41 = vld [vmem:[%s1 + $0x34] sm:$0xf]
  %v42 = vld [vmem:[%s1 + $0x38] sm:$0xf]
  %v43 = vld [vmem:[%s1 + $0x3c] sm:$0xf]
  %v44 = vld [vmem:[%s1 + $0x40] sm:$0xf]
  %v45 = vld [vmem:[%s1 + $0x44] sm:$0xf]
  %v46 = vld [vmem:[%s1 + $0x48] sm:$0xf]
  %v47 = vld [vmem:[%s1 + $0x4c] sm:$0xf]
  %v48 = vld [vmem:[%s1 + $0x50] sm:$0xf]
  %v49 = vld [vmem:[%s1 + $0x54] sm:$0xf]
  %v50 = vld [vmem:[%s1 + $0x58] sm:$0xf]
  %v51 = vld [vmem:[%s1 + $0x5c] sm:$0xf]
  %v52 = vld [vmem:[%s1 + $0x60] sm:$0xf]
  %v53 = vld [vmem:[%s1 + $0x64] sm:$0xf]
  %v54 = vld [vmem:[%s1 + $0x68] sm:$0xf]
  %v55 = vld [vmem:[%s1 + $0x6c] sm:$0xf]
  %v56 = vld [vmem:[%s1 + $0x70] sm:$0xf]
  %v57 = vld [vmem:[%s1 + $0x74] sm:$0xf]
  %v58 = vld [vmem:[%s1 + $0x78] sm:$0xf]
  %v59 = vld [vmem:[%s1 + $0x7c] sm:$0xf]
  %v63 = vunpack.c.l.b16 %v25
  %v64 = vunpack.c.h.b16 %v25
  %v65 = vunpack.c.l.b16 %v26
  %v66 = vunpack.c.h.b16 %v26
  %v67 = vunpack.c.l.b16 %v27
  %v68 = vunpack.c.h.b16 %v27
  %v69 = vpack.c.b16 %v65, %v63
  %v70 = vpack.c.b16 %v66, %v64
  %v71 = vpack.c.b16 %v67, %v67
  %v72 = vpack.c.b16 %v68, %v68
  %v109 = vunpack.c.l.b16 %v28
  %v110 = vunpack.c.l.b16 %v29
  %v111 = vunpack.c.l.b16 %v30
  %v112 = vunpack.c.l.b16 %v31
  %v113 = vunpack.c.l.b16 %v32
  %v114 = vunpack.c.l.b16 %v33
  %v115 = vunpack.c.l.b16 %v34
  %v116 = vunpack.c.l.b16 %v35
  %v117 = vunpack.c.l.b16 %v36
  %v118 = vunpack.c.l.b16 %v37
  %v119 = vunpack.c.l.b16 %v38
  %v120 = vunpack.c.l.b16 %v39
  %v121 = vunpack.c.l.b16 %v40
  %v122 = vunpack.c.l.b16 %v41
  %v123 = vunpack.c.l.b16 %v42
  %v124 = vunpack.c.l.b16 %v43
  %v125 = vunpack.c.l.b16 %v44
  %v126 = vunpack.c.l.b16 %v45
  %v127 = vunpack.c.l.b16 %v46
  %v128 = vunpack.c.l.b16 %v47
  %v129 = vunpack.c.l.b16 %v48
  %v130 = vunpack.c.l.b16 %v49
  %v131 = vunpack.c.l.b16 %v50
  %v132 = vunpack.c.l.b16 %v51
  %v133 = vunpack.c.l.b16 %v52
  %v134 = vunpack.c.l.b16 %v53
  %v135 = vunpack.c.l.b16 %v54
  %v136 = vunpack.c.l.b16 %v55
  %v137 = vunpack.c.l.b16 %v56
  %v138 = vunpack.c.l.b16 %v57
  %v139 = vunpack.c.l.b16 %v58
  %v140 = vunpack.c.l.b16 %v59
  %v141 = vpack.c.b16 %v110, %v109
  %v142 = vpack.c.b16 %v112, %v111
  %v143 = vpack.c.b16 %v114, %v113
  %v144 = vpack.c.b16 %v116, %v115
  %v145 = vpack.c.b16 %v118, %v117
  %v146 = vpack.c.b16 %v120, %v119
  %v147 = vpack.c.b16 %v122, %v121
  %v148 = vpack.c.b16 %v124, %v123
  %v149 = vpack.c.b16 %v126, %v125
  %v150 = vpack.c.b16 %v128, %v127
  %v151 = vpack.c.b16 %v130, %v129
  %v152 = vpack.c.b16 %v132, %v131
  %v153 = vpack.c.b16 %v134, %v133
  %v154 = vpack.c.b16 %v136, %v135
  %v155 = vpack.c.b16 %v138, %v137
  %v156 = vpack.c.b16 %v140, %v139
  %173 = vmatprep.subr.bf16.mxu0 0
  %174 = vmatpush1.bf16.msra.mxu0 %v141
  %175 = vmatprep.subr.bf16.mxu0 0
  %176 = vmatpush1.bf16.msra.mxu0 %v142
  %177 = vmatprep.subr.bf16.mxu0 0
  %178 = vmatpush1.bf16.msra.mxu0 %v143
  %179 = vmatprep.subr.bf16.mxu0 0
  %180 = vmatpush1.bf16.msra.mxu0 %v144
  %181 = vmatprep.subr.bf16.mxu0 0
  %182 = vmatpush1.bf16.msra.mxu0 %v145
  %183 = vmatprep.subr.bf16.mxu0 0
  %184 = vmatpush1.bf16.msra.mxu0 %v146
  %185 = vmatprep.subr.bf16.mxu0 0
  %186 = vmatpush1.bf16.msra.mxu0 %v147
  %187 = vmatprep.subr.bf16.mxu0 0
  %188 = vmatpush1.bf16.msra.mxu0 %v148
  %189 = vmatprep.subr.bf16.mxu0 0
  %190 = vmatpush1.bf16.msra.mxu0 %v149
  %191 = vmatprep.subr.bf16.mxu0 0
  %192 = vmatpush1.bf16.msra.mxu0 %v150
  %193 = vmatprep.subr.bf16.mxu0 0
  %194 = vmatpush1.bf16.msra.mxu0 %v151
  %195 = vmatprep.subr.bf16.mxu0 0
  %196 = vmatpush1.bf16.msra.mxu0 %v152
  %197 = vmatprep.subr.bf16.mxu0 0
  %198 = vmatpush1.bf16.msra.mxu0 %v153
  %199 = vmatprep.subr.bf16.mxu0 0
  %200 = vmatpush1.bf16.msra.mxu0 %v154
  %201 = vmatprep.subr.bf16.mxu0 0
  %202 = vmatpush1.bf16.msra.mxu0 %v155
  %203 = vmatprep.subr.bf16.mxu0 0
  %204 = vmatpush1.bf16.msra.mxu0 %v156
  %205 = vmatprep.mubr.bf16.mxu0 %v70
  %206 = vmatmul.mubr.bf16.gmra.mrb[0].mxu0 %v69
  %v207 = vpop.f32.mrb[0].mxu0
  %v208 = vadd.f32 0.0, %v207
  %v209 = vpop.f32.mrb[0].mxu0
  %v210 = vpop.f32.mrb[0].mxu0
  %v211 = vadd.f32 0.0, %v210
  %v212 = vpop.f32.mrb[0].mxu0
  %213 = vmatprep.mubr.bf16.mxu0 %v72
  %214 = vmatmul.mubr.bf16.gmra.mrb[0].mxu0 %v71
  %v215 = vpop.f32.mrb[0].mxu0
  %v216 = vadd.f32 0.0, %v215
  %v217 = vpop.f32.mrb[0].mxu0
  %v218 = vpop.f32.mrb[0].mxu0
  %v219 = vpop.f32.mrb[0].mxu0
  %220 = vdwg.mxu0
  %v221 = vadd.f32 %v22, %v208
  %v222 = vadd.f32 %v23, %v211
  %v223 = vadd.f32 %v24, %v216
  %224 = vst [vmem:[#allocation2] sm:$0xff] %v221
  %225 = vst [vmem:[#allocation2 + $0x8] sm:$0xff] %v222
  %226 = vst [vmem:[#allocation2 + $0x10] sm:$0xff] %v223
  // Predicated region
  $region18: #{_lambda_.11} parent=0 // pred_check
    %p227 = pneg %p15
  $region19: #{_lambda_.11} parent=0 // pred_check_branch
    %229 = sbr.rel (%p227) target = $region21
  $region20: #{_lambda_.11} parent=0 // pred_region
    %v230 = vld [vmem:[#allocation2] sm:$0xff]
    %v231 = vld [vmem:[#allocation2 + $0x8] sm:$0xff]
    %v232 = vld [vmem:[#allocation2 + $0x10] sm:$0xff]
    %v233 = vld [vmem:[%s2] sm:$0x1]
    %v235 = vlaneseq
    %v236 = vshrl.u32 %v235, 7
    %v237 = vsub.s32 0, %v236
    %v238 = vrot.slane %v233, %v237
    %v240 = vadd.f32 %v230, %v238
    %v241 = vadd.f32 %v231, %v238
    %v242 = vadd.f32 %v232, %v238
    %243 = vst [vmem:[%s3] sm:$0xff] %v240
    %244 = vst [vmem:[%s3 + $0x8] sm:$0xff] %v241
    %245 = vst [vmem:[%s3 + $0x10] sm:$0xff] %v242
  $region21: #{_lambda_.11} parent=0 // pred_fallthru
    _
  // Predicated region
  $region22: #{_lambda_.11} parent=0 // pred_check
    _
  $region23: #{_lambda_.11} parent=0 // pred_check_branch
    %247 = sbr.rel (0) target = $region25
  $region24: #{_lambda_.11} parent=0 // pred_region
    _
  $region25: #{_lambda_.11} parent=0 // pred_fallthru
    _
  // Predicated region
  $region26: #{_lambda_.11} parent=0 // pred_check
    _
  $region27: #{_lambda_.11} parent=0 // pred_check_branch
    %249 = sbr.rel (0) target = $region29
  $region28: #{_lambda_.11} parent=0 // pred_region
    _
  $region29: #{_lambda_.11} parent=0 // pred_fallthru
    _

// kernel: _lambda_.12
$region0: #{_lambda_.12}
  #allocation0 [shape = 'u32[]', space=smem, size = 0x4, offset = 0x4, fixed_abs, tag = 'smem constant byte address 0x4 - core index']
  #allocation1 [shape = 'u32[144,128]{1,0:T(1,128)}', space=vmem, size = 0x12000, scoped, tag = 'internal scratch']
  %s0 = inlined_call_operand.vmem [shape: f32[2,9,32], index: 0, kind: input, shape index: {}]
  %s1 = inlined_call_operand.vmem [shape: f32[1,32], index: 1, kind: input, shape index: {}]
  %s2 = inlined_call_operand.vmem [shape: f32[1,32], index: 2, kind: input, shape index: {}]
  %s3 = inlined_call_operand.vmem [shape: f32[2,9,32], index: 3, kind: output, shape index: {}]
  %s4 = sld [smem:[#allocation0]]
  $region45: #{_lambda_.12} parent=0
    _
  %s6 = ssub.s32 1, %s4
  %s7 = scalar_select 0, %s6, %s4
  loop: start=0, step=1, limit=4
  $region2: #{_lambda_.12} parent=0 // loop_pre_header
    _
  $region3: #{_lambda_.12} parent=0 // loop_header
    %s9 = sphi 0, %s13
    %p10 = scmp.ge.s32.totalorder %s9, 4
    %s19 = sphi 0, %s21
    %s22 = sphi 0, %s19
    %s23 = sphi 0, %s22
    %s39 = sphi 0, %s23
    %s43 = sphi 0, %s43
    %s45 = sphi 0, %s43
    %s46 = sphi 0, %s45
    %s60 = sphi 0, %s46
    %s64 = sphi 0, %s64
    %s66 = sphi 0, %s64
    %s67 = sphi 0, %s66
    %s81 = sphi 0, %s67
    %s87 = sphi 0, %s89
    %s90 = sphi 0, %s87
    %s91 = sphi 0, %s90
    %s107 = sphi 0, %s91
  $region4: #{_lambda_.12} parent=0 // loop_header_branch
    %12 = sbr.rel (%p10) target = $region8
  $region5: #{_lambda_.12} parent=0 // loop_body
    %s14 = ssub.s32 %s9, 1
    %s15 = ssub.s32 %s9, 2
    %s16 = sadd.s32 %s9, 1
    %s17 = ssub.s32 %s9, %s16
    %p18 = scmp.eq.s32.totalorder %s17, 0
    %s20 = sadd.s32 %s19, 1
    %s21 = scalar_select %p18, %s19, %s20
    %p24 = pneg %p18
    %p25 = scmp.eq.s32.totalorder %s9, 1
    %p26 = por %p24, %p25
    %p27 = scmp.ne.s32.totalorder %s19, %s22
    %p28 = scmp.eq.s32.totalorder %s9, 0
    %p29 = por %p27, %p28
    %p30 = scmp.ne.s32.totalorder %s19, %s22
    %p31 = scmp.eq.s32.totalorder %s14, 1
    %p32 = por %p30, %p31
    %p33 = scmp.ne.s32.totalorder %s22, %s23
    %p34 = scmp.eq.s32.totalorder %s14, 0
    %p35 = por %p33, %p34
    %p36 = scmp.ne.s32.totalorder %s22, %s23
    %p37 = scmp.eq.s32.totalorder %s15, 1
    %p38 = por %p36, %p37
    %p40 = scmp.ne.s32.totalorder %s23, %s39
    %p41 = scmp.eq.s32.totalorder %s15, 0
    %p42 = por %p40, %p41
    %s44 = sadd.s32 %s43, 1
    %p47 = scmp.eq.s32.totalorder %s9, 1
    %p48 = scmp.ne.s32.totalorder %s43, %s45
    %p49 = scmp.eq.s32.totalorder %s9, 0
    %p50 = por %p48, %p49
    %p51 = scmp.ne.s32.totalorder %s43, %s45
    %p52 = scmp.eq.s32.totalorder %s14, 1
    %p53 = por %p51, %p52
    %p54 = scmp.ne.s32.totalorder %s45, %s46
    %p55 = scmp.eq.s32.totalorder %s14, 0
    %p56 = por %p54, %p55
    %p57 = scmp.ne.s32.totalorder %s45, %s46
    %p58 = scmp.eq.s32.totalorder %s15, 1
    %p59 = por %p57, %p58
    %p61 = scmp.ne.s32.totalorder %s46, %s60
    %p62 = scmp.eq.s32.totalorder %s15, 0
    %p63 = por %p61, %p62
    %s65 = sadd.s32 %s64, 1
    %p68 = scmp.eq.s32.totalorder %s9, 1
    %p69 = scmp.ne.s32.totalorder %s64, %s66
    %p70 = scmp.eq.s32.totalorder %s9, 0
    %p71 = por %p69, %p70
    %p72 = scmp.ne.s32.totalorder %s64, %s66
    %p73 = scmp.eq.s32.totalorder %s14, 1
    %p74 = por %p72, %p73
    %p75 = scmp.ne.s32.totalorder %s66, %s67
    %p76 = scmp.eq.s32.totalorder %s14, 0
    %p77 = por %p75, %p76
    %p78 = scmp.ne.s32.totalorder %s66, %s67
    %p79 = scmp.eq.s32.totalorder %s15, 1
    %p80 = por %p78, %p79
    %p82 = scmp.ne.s32.totalorder %s67, %s81
    %p83 = scmp.eq.s32.totalorder %s15, 0
    %p84 = por %p82, %p83
    %s85 = ssub.s32 %s9, %s16
    %p86 = scmp.eq.s32.totalorder %s85, 0
    %s88 = sadd.s32 %s87, 1
    %s89 = scalar_select %p86, %s87, %s88
    %p92 = pneg %p86
    %p93 = scmp.eq.s32.totalorder %s9, 1
    %p94 = por %p92, %p93
    %p95 = scmp.ne.s32.totalorder %s87, %s90
    %p96 = scmp.eq.s32.totalorder %s9, 0
    %p97 = por %p95, %p96
    %p98 = scmp.ne.s32.totalorder %s87, %s90
    %p99 = scmp.eq.s32.totalorder %s14, 1
    %p100 = por %p98, %p99
    %p101 = scmp.ne.s32.totalorder %s90, %s91
    %p102 = scmp.eq.s32.totalorder %s14, 0
    %p103 = por %p101, %p102
    %p104 = scmp.ne.s32.totalorder %s90, %s91
    %p105 = scmp.eq.s32.totalorder %s15, 1
    %p106 = por %p104, %p105
    %p108 = scmp.ne.s32.totalorder %s91, %s107
    %p109 = scmp.eq.s32.totalorder %s15, 0
    %p110 = por %p108, %p109
    %p111 = scmp.le.s32.totalorder 1, %s9
    %p112 = scmp.lt.s32.totalorder %s9, 3
    %p113 = pnand %p111, %p112
    %p114 = pneg %p113
    // Predicated region
    $region9: #{_lambda_.12} parent=5 // pred_check
      _
    $region10: #{_lambda_.12} parent=5 // pred_check_branch
      %116 = sbr.rel (%p113) target = $region12
    $region11: #{_lambda_.12} parent=5 // pred_region
      %s117 = ssub.s32 %s9, 1
      // Predicated region
      $region13: #{_lambda_.12} parent=11 // pred_check
        %p118 = pneg %p56
      $region14: #{_lambda_.12} parent=11 // pred_check_branch
        %120 = sbr.rel (%p118) target = $region16
      $region15: #{_lambda_.12} parent=11 // pred_region
        _
      $region16: #{_lambda_.12} parent=11 // pred_fallthru
        _
      // Predicated region
      $region17: #{_lambda_.12} parent=11 // pred_check
        %p121 = pneg %p77
      $region18: #{_lambda_.12} parent=11 // pred_check_branch
        %123 = sbr.rel (%p121) target = $region20
      $region19: #{_lambda_.12} parent=11 // pred_region
        _
      $region20: #{_lambda_.12} parent=11 // pred_fallthru
        _
    $region12: #{_lambda_.12} parent=5 // pred_fallthru
      _
    %p124 = scmp.lt.s32.totalorder %s9, 2
    // Predicated region
    $region21: #{_lambda_.12} parent=5 // pred_check
      %p125 = pneg %p124
    $region22: #{_lambda_.12} parent=5 // pred_check_branch
      %127 = sbr.rel (%p125) target = $region24
    $region23: #{_lambda_.12} parent=5 // pred_region
      // Predicated region
      $region25: #{_lambda_.12} parent=23 // pred_check
        %p128 = pneg %p29
      $region26: #{_lambda_.12} parent=23 // pred_check_branch
        %130 = sbr.rel (%p128) target = $region28
      $region27: #{_lambda_.12} parent=23 // pred_region
        %p131 = scmp.lt.s32.totalorder %s9, 1
        %s132 = scalar_select %p131, %s9, 1
        %s133 = smul.addr %s132, 2
        %s134 = smul.addr %s133, 8
        %s135 = scalar_lea.vmem %s0, %s134
      $region28: #{_lambda_.12} parent=23 // pred_fallthru
        _
    $region24: #{_lambda_.12} parent=5 // pred_fallthru
      _
    %p136 = scmp.le.s32.totalorder 1, %s9
    %p137 = scmp.lt.s32.totalorder %s9, 3
    %p138 = pnand %p136, %p137
    %p139 = pneg %p138
    // Predicated region
    $region29: #{_lambda_.12} parent=5 // pred_check
      _
    $region30: #{_lambda_.12} parent=5 // pred_check_branch
      %141 = sbr.rel (%p138) target = $region32
    $region31: #{_lambda_.12} parent=5 // pred_region
      %s142 = ssub.s32 %s9, 1
      %p143 = scmp.lt.s32.totalorder %s14, 1
      %s144 = scalar_select %p143, %s14, 1
      %s145 = smul.addr %s144, 2
      %s146 = smul.addr %s145, 8
      %s147 = scalar_lea.vmem %s0, %s146
      %p148 = pneg %p35
      %p149 = pneg %p32
      %p150 = pneg %p56
      %p151 = pneg %p53
      %p152 = pneg %p77
      %p153 = pneg %p74
      %p154 = pneg %p103
      %p155 = pneg %p100
      %p156 = scmp.lt.s32.totalorder %s14, 1
      %s157 = scalar_select %p156, %s14, 1
      %s158 = smul.addr %s157, 2
      %s159 = smul.addr %s158, 8
      %s160 = scalar_lea.vmem %s3, %s159
      %p161 = scmp.lt.s32.totalorder %s14, 1
      %s162 = scalar_select %p161, %s14, 1
      %s163 = smul.addr %s162, 2
      %s164 = smul.addr %s163, 8
      %s165 = scalar_lea.vmem %s0, %s164
      %p166 = scmp.lt.s32.totalorder %s14, 1
      %s167 = scalar_select %p166, %s14, 1
      %s168 = smul.addr %s167, 2
      %s169 = smul.addr %s168, 8
      %s170 = scalar_lea.vmem %s3, %s169
      %v171 = vld [vmem:[%s165] sm:$0xff]
      %v172 = vld [vmem:[%s165 + $0x8] sm:$0x1]
      %vm173 = vcmask 261120
      %v174 = vsel %vm173, %v171, 0.0
      %vm175 = vcmask 253952
      %v176 = vsel %vm175, %v172, 0.0
      %v177 = vadd.f32 %v174, %v176
      %v178 = vrot.slane %v177, 4
      %v179 = vadd.f32 %v177, %v178
      %v180 = vrot.slane %v179, 2
      %v181 = vadd.f32 %v179, %v180
      %v182 = vrot.slane %v181, 1
      %v183 = vadd.f32 %v181, %v182
      %v184 = vmul.f32 %v171, %v171
      %v185 = vmul.f32 %v172, %v172
      %v186 = vsel %vm173, %v184, 0.0
      %v187 = vsel %vm175, %v185, 0.0
      %v188 = vadd.f32 %v186, %v187
      %v189 = vrot.slane %v188, 4
      %v190 = vadd.f32 %v188, %v189
      %v191 = vrot.slane %v190, 2
      %v192 = vadd.f32 %v190, %v191
      %v193 = vrot.slane %v192, 1
      %v194 = vadd.f32 %v192, %v193
      %v195 = vmul.f32 %v183, 0.11111111
      %v196 = vmul.f32 %v194, 0.11111111
      %v197 = vmul.f32 %v195, %v195
      %v198 = vsub.f32 %v196, %v197
      %v199 = vmax.f32 %v198, 0.0
      %v200 = vadd.f32 %v199, 1e-05
      %v201 = vrsqrt.pop %v200
      %v202 = vld [vmem:[%s1] sm:$0x1]
      %v203 = vmul.f32 %v201, %v202
      %v204 = vsub.f32 %v171, %v195
      %v205 = vsub.f32 %v172, %v195
      %v206 = vlaneseq
      %v207 = vshrl.u32 %v206, 7
      %v208 = vsub.s32 0, %v207
      %v209 = vrot.slane %v203, %v208
      %v210 = vmul.f32 %v204, %v209
      %v211 = vmul.f32 %v205, %v209
      %v212 = vld [vmem:[%s2] sm:$0x1]
      %v214 = vlaneseq
      %v215 = vshrl.u32 %v214, 7
      %v216 = vsub.s32 0, %v215
      %v217 = vrot.slane %v212, %v216
      %v219 = vadd.f32 %v210, %v217
      %v220 = vadd.f32 %v211, %v217
      %vm221 = vcmp.ge.f32.partialorder %v219, 0.0
      %vm222 = vcmp.ge.f32.partialorder %v220, 0.0
      %v223 = vmul.f32 %v219, 0.2
      %v224 = vmul.f32 %v220, 0.2
      %v225 = vsel %vm221, %v219, %v223
      %v226 = vsel %vm222, %v220, %v224
      %227 = vst.msk [vmem:[%s170] sm:$0xff] %vm173, %v225
      %228 = vst.msk [vmem:[%s170 + $0x8] sm:$0x1] %vm175, %v226
      %p229 = scmp.lt.s32.totalorder %s14, 1
      %s230 = scalar_select %p229, %s14, 1
      %s231 = smul.addr %s230, 2
      %s232 = smul.addr %s231, 8
      %s233 = scalar_lea.vmem %s3, %s232
      // Predicated region
      $region33: #{_lambda_.12} parent=31 // pred_check
        %p234 = pneg %p100
      $region34: #{_lambda_.12} parent=31 // pred_check_branch
        %236 = sbr.rel (%p234) target = $region36
      $region35: #{_lambda_.12} parent=31 // pred_region
        _
      $region36: #{_lambda_.12} parent=31 // pred_fallthru
        _
    $region32: #{_lambda_.12} parent=5 // pred_fallthru
      _
    %p237 = scmp.le.s32.totalorder 2, %s9
    // Predicated region
    $region37: #{_lambda_.12} parent=5 // pred_check
      %p238 = pneg %p237
    $region38: #{_lambda_.12} parent=5 // pred_check_branch
      %240 = sbr.rel (%p238) target = $region40
    $region39: #{_lambda_.12} parent=5 // pred_region
      %s241 = ssub.s32 %s9, 2
      // Predicated region
      $region41: #{_lambda_.12} parent=39 // pred_check
        %p242 = pneg %p106
      $region42: #{_lambda_.12} parent=39 // pred_check_branch
        %244 = sbr.rel (%p242) target = $region44
      $region43: #{_lambda_.12} parent=39 // pred_region
        %p245 = scmp.lt.s32.totalorder %s15, 1
        %s246 = scalar_select %p245, %s15, 1
        %s247 = smul.addr %s246, 2
        %s248 = smul.addr %s247, 8
        %s249 = scalar_lea.vmem %s3, %s248
      $region44: #{_lambda_.12} parent=39 // pred_fallthru
        _
    $region40: #{_lambda_.12} parent=5 // pred_fallthru
      _
  $region6: #{_lambda_.12} parent=0 // loop_footer
    %s13 = sadd.s32 1, %s9
  $region7: #{_lambda_.12} parent=0 // loop_footer_branch
    %8 = sbr.rel target = $region3
  $region8: #{_lambda_.12} parent=0 // loop_exit
    _

// kernel: _lambda_.13
$region0: #{_lambda_.13}
  #allocation0 [shape = 'u32[]', space=smem, size = 0x4, offset = 0x4, fixed_abs, tag = 'smem constant byte address 0x4 - core index']
  #allocation1 [shape = 'u32[144,128]{1,0:T(1,128)}', space=vmem, size = 0x12000, scoped, tag = 'internal scratch']
  #allocation2 [shape = 'f32[32,128]{1,0:T(8,128)}', space=vmem, size = 0x4000, scoped, tag = 'scratch operand']
  %s0 = inlined_call_operand.vmem [shape: bf16[32,512], index: 0, kind: input, shape index: {}]
  %s1 = inlined_call_operand.vmem [shape: bf16[512,128], index: 1, kind: input, shape index: {}]
  %s2 = inlined_call_operand.vmem [shape: f32[1,128], index: 2, kind: input, shape index: {}]
  %s3 = inlined_call_operand.vmem [shape: f32[32,128], index: 3, kind: output, shape index: {}]
  %s4 = sld [smem:[#allocation0]]
  $region30: #{_lambda_.13} parent=0
    _
  %s6 = ssub.s32 1, %s4
  %s7 = scalar_select 0, %s6, %s4
  // Predicated region
  $region2: #{_lambda_.13} parent=0 // pred_check
    _
  $region3: #{_lambda_.13} parent=0 // pred_check_branch
    %9 = sbr.rel (0) target = $region5
  $region4: #{_lambda_.13} parent=0 // pred_region
    _
  $region5: #{_lambda_.13} parent=0 // pred_fallthru
    _
  // Predicated region
  $region6: #{_lambda_.13} parent=0 // pred_check
    _
  $region7: #{_lambda_.13} parent=0 // pred_check_branch
    %11 = sbr.rel (0) target = $region9
  $region8: #{_lambda_.13} parent=0 // pred_region
    _
  $region9: #{_lambda_.13} parent=0 // pred_fallthru
    _
  // Predicated region
  $region10: #{_lambda_.13} parent=0 // pred_check
    _
  $region11: #{_lambda_.13} parent=0 // pred_check_branch
    %13 = sbr.rel (0) target = $region13
  $region12: #{_lambda_.13} parent=0 // pred_region
    _
  $region13: #{_lambda_.13} parent=0 // pred_fallthru
    _
  %p15 = scmp.eq.s32.totalorder 0, 0
  // Predicated region
  $region14: #{_lambda_.13} parent=0 // pred_check
    %p16 = pneg %p15
  $region15: #{_lambda_.13} parent=0 // pred_check_branch
    %18 = sbr.rel (%p16) target = $region17
  $region16: #{_lambda_.13} parent=0 // pred_region
    %19 = vst [vmem:[#allocation2] sm:$0xff] 0.0
    %20 = vst [vmem:[#allocation2 + $0x8] sm:$0xff] 0.0
    %21 = vst [vmem:[#allocation2 + $0x10] sm:$0xff] 0.0
    %22 = vst [vmem:[#allocation2 + $0x18] sm:$0xff] 0.0
  $region17: #{_lambda_.13} parent=0 // pred_fallthru
    _
  %v23 = vld [vmem:[#allocation2] sm:$0xff]
  %v24 = vld [vmem:[#allocation2 + $0x8] sm:$0xff]
  %v25 = vld [vmem:[#allocation2 + $0x10] sm:$0xff]
  %v26 = vld [vmem:[#allocation2 + $0x18] sm:$0xff]
  %v27 = vld [vmem:[%s0] sm:$0xff]
  %v28 = vld [vmem:[%s0 + $0x8] sm:$0xff]
  %v29 = vld [vmem:[%s0 + $0x10] sm:$0xff]
  %v30 = vld [vmem:[%s0 + $0x18] sm:$0xff]
  %v31 = vld [vmem:[%s0 + $0x20] sm:$0xff]
  %v32 = vld [vmem:[%s0 + $0x28] sm:$0xff]
  %v33 = vld [vmem:[%s0 + $0x30] sm:$0xff]
  %v34 = vld [vmem:[%s0 + $0x38] sm:$0xff]
  %v35 = vld [vmem:[%s1] sm:$0xf]
  %v36 = vld [vmem:[%s1 + $0x4] sm:$0xf]
  %v37 = vld [vmem:[%s1 + $0x8] sm:$0xf]
  %v38 = vld [vmem:[%s1 + $0xc] sm:$0xf]
  %v39 = vld [vmem:[%s1 + $0x10] sm:$0xf]
  %v40 = vld [vmem:[%s1 + $0x14] sm:$0xf]
  %v41 = vld [vmem:[%s1 + $0x18] sm:$0xf]
  %v42 = vld [vmem:[%s1 + $0x1c] sm:$0xf]
  %v43 = vld [vmem:[%s1 + $0x20] sm:$0xf]
  %v44 = vld [vmem:[%s1 + $0x24] sm:$0xf]
  %v45 = vld [vmem:[%s1 + $0x28] sm:$0xf]
  %v46 = vld [vmem:[%s1 + $0x2c] sm:$0xf]
  %v47 = vld [vmem:[%s1 + $0x30] sm:$0xf]
  %v48 = vld [vmem:[%s1 + $0x34] sm:$0xf]
  %v49 = vld [vmem:[%s1 + $0x38] sm:$0xf]
  %v50 = vld [vmem:[%s1 + $0x3c] sm:$0xf]
  %v51 = vld [vmem:[%s1 + $0x40] sm:$0xf]
  %v52 = vld [vmem:[%s1 + $0x44] sm:$0xf]
  %v53 = vld [vmem:[%s1 + $0x48] sm:$0xf]
  %v54 = vld [vmem:[%s1 + $0x4c] sm:$0xf]
  %v55 = vld [vmem:[%s1 + $0x50] sm:$0xf]
  %v56 = vld [vmem:[%s1 + $0x54] sm:$0xf]
  %v57 = vld [vmem:[%s1 + $0x58] sm:$0xf]
  %v58 = vld [vmem:[%s1 + $0x5c] sm:$0xf]
  %v59 = vld [vmem:[%s1 + $0x60] sm:$0xf]
  %v60 = vld [vmem:[%s1 + $0x64] sm:$0xf]
  %v61 = vld [vmem:[%s1 + $0x68] sm:$0xf]
  %v62 = vld [vmem:[%s1 + $0x6c] sm:$0xf]
  %v63 = vld [vmem:[%s1 + $0x70] sm:$0xf]
  %v64 = vld [vmem:[%s1 + $0x74] sm:$0xf]
  %v65 = vld [vmem:[%s1 + $0x78] sm:$0xf]
  %v66 = vld [vmem:[%s1 + $0x7c] sm:$0xf]
  %v67 = vld [vmem:[%s1 + $0x80] sm:$0xf]
  %v68 = vld [vmem:[%s1 + $0x84] sm:$0xf]
  %v69 = vld [vmem:[%s1 + $0x88] sm:$0xf]
  %v70 = vld [vmem:[%s1 + $0x8c] sm:$0xf]
  %v71 = vld [vmem:[%s1 + $0x90] sm:$0xf]
  %v72 = vld [vmem:[%s1 + $0x94] sm:$0xf]
  %v73 = vld [vmem:[%s1 + $0x98] sm:$0xf]
  %v74 = vld [vmem:[%s1 + $0x9c] sm:$0xf]
  %v75 = vld [vmem:[%s1 + $0xa0] sm:$0xf]
  %v76 = vld [vmem:[%s1 + $0xa4] sm:$0xf]
  %v77 = vld [vmem:[%s1 + $0xa8] sm:$0xf]
  %v78 = vld [vmem:[%s1 + $0xac] sm:$0xf]
  %v79 = vld [vmem:[%s1 + $0xb0] sm:$0xf]
  %v80 = vld [vmem:[%s1 + $0xb4] sm:$0xf]
  %v81 = vld [vmem:[%s1 + $0xb8] sm:$0xf]
  %v82 = vld [vmem:[%s1 + $0xbc] sm:$0xf]
  %v83 = vld [vmem:[%s1 + $0xc0] sm:$0xf]
  %v84 = vld [vmem:[%s1 + $0xc4] sm:$0xf]
  %v85 = vld [vmem:[%s1 + $0xc8] sm:$0xf]
  %v86 = vld [vmem:[%s1 + $0xcc] sm:$0xf]
  %v87 = vld [vmem:[%s1 + $0xd0] sm:$0xf]
  %v88 = vld [vmem:[%s1 + $0xd4] sm:$0xf]
  %v89 = vld [vmem:[%s1 + $0xd8] sm:$0xf]
  %v90 = vld [vmem:[%s1 + $0xdc] sm:$0xf]
  %v91 = vld [vmem:[%s1 + $0xe0] sm:$0xf]
  %v92 = vld [vmem:[%s1 + $0xe4] sm:$0xf]
  %v93 = vld [vmem:[%s1 + $0xe8] sm:$0xf]
  %v94 = vld [vmem:[%s1 + $0xec] sm:$0xf]
  %v95 = vld [vmem:[%s1 + $0xf0] sm:$0xf]
  %v96 = vld [vmem:[%s1 + $0xf4] sm:$0xf]
  %v97 = vld [vmem:[%s1 + $0xf8] sm:$0xf]
  %v98 = vld [vmem:[%s1 + $0xfc] sm:$0xf]
  %v107 = vunpack.c.l.b16 %v27
  %v108 = vunpack.c.h.b16 %v27
  %v109 = vunpack.c.l.b16 %v28
  %v110 = vunpack.c.h.b16 %v28
  %v111 = vunpack.c.l.b16 %v29
  %v112 = vunpack.c.h.b16 %v29
  %v113 = vunpack.c.l.b16 %v30
  %v114 = vunpack.c.h.b16 %v30
  %v115 = vunpack.c.l.b16 %v31
  %v116 = vunpack.c.h.b16 %v31
  %v117 = vunpack.c.l.b16 %v32
  %v118 = vunpack.c.h.b16 %v32
  %v119 = vunpack.c.l.b16 %v33
  %v120 = vunpack.c.h.b16 %v33
  %v121 = vunpack.c.l.b16 %v34
  %v122 = vunpack.c.h.b16 %v34
  %v123 = vpack.c.b16 %v111, %v107
  %v124 = vpack.c.b16 %v112, %v108
  %v125 = vpack.c.b16 %v113, %v109
  %v126 = vpack.c.b16 %v114, %v110
  %v127 = vpack.c.b16 %v119, %v115
  %v128 = vpack.c.b16 %v120, %v116
  %v129 = vpack.c.b16 %v121, %v117
  %v130 = vpack.c.b16 %v122, %v118
  %v203 = vunpack.c.l.b16 %v35
  %v204 = vunpack.c.l.b16 %v36
  %v205 = vunpack.c.l.b16 %v37
  %v206 = vunpack.c.l.b16 %v38
  %v207 = vunpack.c.l.b16 %v39
  %v208 = vunpack.c.l.b16 %v40
  %v209 = vunpack.c.l.b16 %v41
  %v210 = vunpack.c.l.b16 %v42
  %v211 = vunpack.c.l.b16 %v43
  %v212 = vunpack.c.l.b16 %v44
  %v213 = vunpack.c.l.b16 %v45
  %v214 = vunpack.c.l.b16 %v46
  %v215 = vunpack.c.l.b16 %v47
  %v216 = vunpack.c.l.b16 %v48
  %v217 = vunpack.c.l.b16 %v49
  %v218 = vunpack.c.l.b16 %v50
  %v219 = vunpack.c.l.b16 %v51
  %v220 = vunpack.c.l.b16 %v52
  %v221 = vunpack.c.l.b16 %v53
  %v222 = vunpack.c.l.b16 %v54
  %v223 = vunpack.c.l.b16 %v55
  %v224 = vunpack.c.l.b16 %v56
  %v225 = vunpack.c.l.b16 %v57
  %v226 = vunpack.c.l.b16 %v58
  %v227 = vunpack.c.l.b16 %v59
  %v228 = vunpack.c.l.b16 %v60
  %v229 = vunpack.c.l.b16 %v61
  %v230 = vunpack.c.l.b16 %v62
  %v231 = vunpack.c.l.b16 %v63
  %v232 = vunpack.c.l.b16 %v64
  %v233 = vunpack.c.l.b16 %v65
  %v234 = vunpack.c.l.b16 %v66
  %v235 = vunpack.c.l.b16 %v67
  %v236 = vunpack.c.l.b16 %v68
  %v237 = vunpack.c.l.b16 %v69
  %v238 = vunpack.c.l.b16 %v70
  %v239 = vunpack.c.l.b16 %v71
  %v240 = vunpack.c.l.b16 %v72
  %v241 = vunpack.c.l.b16 %v73
  %v242 = vunpack.c.l.b16 %v74
  %v243 = vunpack.c.l.b16 %v75
  %v244 = vunpack.c.l.b16 %v76
  %v245 = vunpack.c.l.b16 %v77
  %v246 = vunpack.c.l.b16 %v78
  %v247 = vunpack.c.l.b16 %v79
  %v248 = vunpack.c.l.b16 %v80
  %v249 = vunpack.c.l.b16 %v81
  %v250 = vunpack.c.l.b16 %v82
  %v251 = vunpack.c.l.b16 %v83
  %v252 = vunpack.c.l.b16 %v84
  %v253 = vunpack.c.l.b16 %v85
  %v254 = vunpack.c.l.b16 %v86
  %v255 = vunpack.c.l.b16 %v87
  %v256 = vunpack.c.l.b16 %v88
  %v257 = vunpack.c.l.b16 %v89
  %v258 = vunpack.c.l.b16 %v90
  %v259 = vunpack.c.l.b16 %v91
  %v260 = vunpack.c.l.b16 %v92
  %v261 = vunpack.c.l.b16 %v93
  %v262 = vunpack.c.l.b16 %v94
  %v263 = vunpack.c.l.b16 %v95
  %v264 = vunpack.c.l.b16 %v96
  %v265 = vunpack.c.l.b16 %v97
  %v266 = vunpack.c.l.b16 %v98
  %v267 = vpack.c.b16 %v204, %v203
  %v268 = vpack.c.b16 %v206, %v205
  %v269 = vpack.c.b16 %v208, %v207
  %v270 = vpack.c.b16 %v210, %v209
  %v271 = vpack.c.b16 %v212, %v211
  %v272 = vpack.c.b16 %v214, %v213
  %v273 = vpack.c.b16 %v216, %v215
  %v274 = vpack.c.b16 %v218, %v217
  %v275 = vpack.c.b16 %v220, %v219
  %v276 = vpack.c.b16 %v222, %v221
  %v277 = vpack.c.b16 %v224, %v223
  %v278 = vpack.c.b16 %v226, %v225
  %v279 = vpack.c.b16 %v228, %v227
  %v280 = vpack.c.b16 %v230, %v229
  %v281 = vpack.c.b16 %v232, %v231
  %v282 = vpack.c.b16 %v234, %v233
  %v283 = vpack.c.b16 %v236, %v235
  %v284 = vpack.c.b16 %v238, %v237
  %v285 = vpack.c.b16 %v240, %v239
  %v286 = vpack.c.b16 %v242, %v241
  %v287 = vpack.c.b16 %v244, %v243
  %v288 = vpack.c.b16 %v246, %v245
  %v289 = vpack.c.b16 %v248, %v247
  %v290 = vpack.c.b16 %v250, %v249
  %v291 = vpack.c.b16 %v252, %v251
  %v292 = vpack.c.b16 %v254, %v253
  %v293 = vpack.c.b16 %v256, %v255
  %v294 = vpack.c.b16 %v258, %v257
  %v295 = vpack.c.b16 %v260, %v259
  %v296 = vpack.c.b16 %v262, %v261
  %v297 = vpack.c.b16 %v264, %v263
  %v298 = vpack.c.b16 %v266, %v265
  %331 = vmatprep.subr.bf16.mxu0 0
  %332 = vmatpush1.bf16.msra.mxu0 %v267
  %333 = vmatprep.subr.bf16.mxu0 0
  %334 = vmatpush1.bf16.msra.mxu0 %v268
  %335 = vmatprep.subr.bf16.mxu0 0
  %336 = vmatpush1.bf16.msra.mxu0 %v269
  %337 = vmatprep.subr.bf16.mxu0 0
  %338 = vmatpush1.bf16.msra.mxu0 %v270
  %339 = vmatprep.subr.bf16.mxu0 0
  %340 = vmatpush1.bf16.msra.mxu0 %v271
  %341 = vmatprep.subr.bf16.mxu0 0
  %342 = vmatpush1.bf16.msra.mxu0 %v272
  %343 = vmatprep.subr.bf16.mxu0 0
  %344 = vmatpush1.bf16.msra.mxu0 %v273
  %345 = vmatprep.subr.bf16.mxu0 0
  %346 = vmatpush1.bf16.msra.mxu0 %v274
  %347 = vmatprep.subr.bf16.mxu0 0
  %348 = vmatpush1.bf16.msra.mxu0 %v275
  %349 = vmatprep.subr.bf16.mxu0 0
  %350 = vmatpush1.bf16.msra.mxu0 %v276
  %351 = vmatprep.subr.bf16.mxu0 0
  %352 = vmatpush1.bf16.msra.mxu0 %v277
  %353 = vmatprep.subr.bf16.mxu0 0
  %354 = vmatpush1.bf16.msra.mxu0 %v278
  %355 = vmatprep.subr.bf16.mxu0 0
  %356 = vmatpush1.bf16.msra.mxu0 %v279
  %357 = vmatprep.subr.bf16.mxu0 0
  %358 = vmatpush1.bf16.msra.mxu0 %v280
  %359 = vmatprep.subr.bf16.mxu0 0
  %360 = vmatpush1.bf16.msra.mxu0 %v281
  %361 = vmatprep.subr.bf16.mxu0 0
  %362 = vmatpush1.bf16.msra.mxu0 %v282
  %363 = vmatprep.mubr.bf16.mxu0 %v124
  %364 = vmatmul.mubr.bf16.gmra.mrb[0].mxu0 %v123
  %v365 = vpop.f32.mrb[0].mxu0
  %v366 = vadd.f32 0.0, %v365
  %v367 = vpop.f32.mrb[0].mxu0
  %v368 = vpop.f32.mrb[0].mxu0
  %v369 = vadd.f32 0.0, %v368
  %v370 = vpop.f32.mrb[0].mxu0
  %371 = vmatprep.mubr.bf16.mxu0 %v128
  %372 = vmatmul.mubr.bf16.gmra.mrb[0].mxu0 %v127
  %v373 = vpop.f32.mrb[0].mxu0
  %v374 = vadd.f32 0.0, %v373
  %v375 = vpop.f32.mrb[0].mxu0
  %v376 = vpop.f32.mrb[0].mxu0
  %v377 = vadd.f32 0.0, %v376
  %v378 = vpop.f32.mrb[0].mxu0
  %379 = vdwg.mxu0
  %380 = vmatprep.subr.bf16.mxu0 0
  %381 = vmatpush1.bf16.msra.mxu0 %v283
  %382 = vmatprep.subr.bf16.mxu0 0
  %383 = vmatpush1.bf16.msra.mxu0 %v284
  %384 = vmatprep.subr.bf16.mxu0 0
  %385 = vmatpush1.bf16.msra.mxu0 %v285
  %386 = vmatprep.subr.bf16.mxu0 0
  %387 = vmatpush1.bf16.msra.mxu0 %v286
  %388 = vmatprep.subr.bf16.mxu0 0
  %389 = vmatpush1.bf16.msra.mxu0 %v287
  %390 = vmatprep.subr.bf16.mxu0 0
  %391 = vmatpush1.bf16.msra.mxu0 %v288
  %392 = vmatprep.subr.bf16.mxu0 0
  %393 = vmatpush1.bf16.msra.mxu0 %v289
  %394 = vmatprep.subr.bf16.mxu0 0
  %395 = vmatpush1.bf16.msra.mxu0 %v290
  %396 = vmatprep.subr.bf16.mxu0 0
  %397 = vmatpush1.bf16.msra.mxu0 %v291
  %398 = vmatprep.subr.bf16.mxu0 0
  %399 = vmatpush1.bf16.msra.mxu0 %v292
  %400 = vmatprep.subr.bf16.mxu0 0
  %401 = vmatpush1.bf16.msra.mxu0 %v293
  %402 = vmatprep.subr.bf16.mxu0 0
  %403 = vmatpush1.bf16.msra.mxu0 %v294
  %404 = vmatprep.subr.bf16.mxu0 0
  %405 = vmatpush1.bf16.msra.mxu0 %v295
  %406 = vmatprep.subr.bf16.mxu0 0
  %407 = vmatpush1.bf16.msra.mxu0 %v296
  %408 = vmatprep.subr.bf16.mxu0 0
  %409 = vmatpush1.bf16.msra.mxu0 %v297
  %410 = vmatprep.subr.bf16.mxu0 0
  %411 = vmatpush1.bf16.msra.mxu0 %v298
  %412 = vmatprep.mubr.bf16.mxu0 %v126
  %413 = vmatmul.mubr.bf16.gmra.mrb[0].mxu0 %v125
  %v414 = vpop.f32.mrb[0].mxu0
  %v415 = vadd.f32 %v366, %v414
  %v416 = vpop.f32.mrb[0].mxu0
  %v417 = vpop.f32.mrb[0].mxu0
  %v418 = vadd.f32 %v369, %v417
  %v419 = vpop.f32.mrb[0].mxu0
  %420 = vmatprep.mubr.bf16.mxu0 %v130
  %421 = vmatmul.mubr.bf16.gmra.mrb[0].mxu0 %v129
  %v422 = vpop.f32.mrb[0].mxu0
  %v423 = vadd.f32 %v374, %v422
  %v424 = vpop.f32.mrb[0].mxu0
  %v425 = vpop.f32.mrb[0].mxu0
  %v426 = vadd.f32 %v377, %v425
  %v427 = vpop.f32.mrb[0].mxu0
  %428 = vdwg.mxu0
  %v429 = vadd.f32 %v23, %v415
  %v430 = vadd.f32 %v24, %v418
  %v431 = vadd.f32 %v25, %v423
  %v432 = vadd.f32 %v26, %v426
  %433 = vst [vmem:[#allocation2] sm:$0xff] %v429
  %434 = vst [vmem:[#allocation2 + $0x8] sm:$0xff] %v430
  %435 = vst [vmem:[#allocation2 + $0x10] sm:$0xff] %v431
  %436 = vst [vmem:[#allocation2 + $0x18] sm:$0xff] %v432
  // Predicated region
  $region18: #{_lambda_.13} parent=0 // pred_check
    %p437 = pneg %p15
  $region19: #{_lambda_.13} parent=0 // pred_check_branch
    %439 = sbr.rel (%p437) target = $region21
  $region20: #{_lambda_.13} parent=0 // pred_region
    %v440 = vld [vmem:[#allocation2] sm:$0xff]
    %v441 = vld [vmem:[#allocation2 + $0x8] sm:$0xff]
    %v442 = vld [vmem:[#allocation2 + $0x10] sm:$0xff]
    %v443 = vld [vmem:[#allocation2 + $0x18] sm:$0xff]
    %v444 = vld [vmem:[%s2] sm:$0x1]
    %v446 = vlaneseq
    %v447 = vshrl.u32 %v446, 7
    %v448 = vsub.s32 0, %v447
    %v449 = vrot.slane %v444, %v448
    %v451 = vadd.f32 %v440, %v449
    %v452 = vadd.f32 %v441, %v449
    %v453 = vadd.f32 %v442, %v449
    %v454 = vadd.f32 %v443, %v449
    %455 = vst [vmem:[%s3] sm:$0xff] %v451
    %456 = vst [vmem:[%s3 + $0x8] sm:$0xff] %v452
    %457 = vst [vmem:[%s3 + $0x10] sm:$0xff] %v453
    %458 = vst [vmem:[%s3 + $0x18] sm:$0xff] %v454
  $region21: #{_lambda_.13} parent=0 // pred_fallthru
    _
  // Predicated region
  $region22: #{_lambda_.13} parent=0 // pred_check
    _
  $region23: #{_lambda_.13} parent=0 // pred_check_branch
    %460 = sbr.rel (0) target = $region25
  $region24: #{_lambda_.13} parent=0 // pred_region
    _
  $region25: #{_lambda_.13} parent=0 // pred_fallthru
    _
  // Predicated region
  $region26: #{_lambda_.13} parent=0 // pred_check
    _
  $region27: #{_lambda_.13} parent=0 // pred_check_branch
    %462 = sbr.rel (0) target = $region29
  $region28: #{_lambda_.13} parent=0 // pred_region
    _
  $region29: #{_lambda_.13} parent=0 // pred_fallthru
    _

// kernel: _lambda_.14
$region0: #{_lambda_.14}
  #allocation0 [shape = 'u32[]', space=smem, size = 0x4, offset = 0x4, fixed_abs, tag = 'smem constant byte address 0x4 - core index']
  #allocation1 [shape = 'u32[144,128]{1,0:T(1,128)}', space=vmem, size = 0x12000, scoped, tag = 'internal scratch']
  %s0 = inlined_call_operand.vmem [shape: f32[2,16,64], index: 0, kind: input, shape index: {}]
  %s1 = inlined_call_operand.vmem [shape: f32[1,64], index: 1, kind: input, shape index: {}]
  %s2 = inlined_call_operand.vmem [shape: f32[1,64], index: 2, kind: input, shape index: {}]
  %s3 = inlined_call_operand.vmem [shape: f32[2,16,64], index: 3, kind: output, shape index: {}]
  %s4 = sld [smem:[#allocation0]]
  $region45: #{_lambda_.14} parent=0
    _
  %s6 = ssub.s32 1, %s4
  %s7 = scalar_select 0, %s6, %s4
  loop: start=0, step=1, limit=4
  $region2: #{_lambda_.14} parent=0 // loop_pre_header
    _
  $region3: #{_lambda_.14} parent=0 // loop_header
    %s9 = sphi 0, %s13
    %p10 = scmp.ge.s32.totalorder %s9, 4
    %s19 = sphi 0, %s21
    %s22 = sphi 0, %s19
    %s23 = sphi 0, %s22
    %s39 = sphi 0, %s23
    %s43 = sphi 0, %s43
    %s45 = sphi 0, %s43
    %s46 = sphi 0, %s45
    %s60 = sphi 0, %s46
    %s64 = sphi 0, %s64
    %s66 = sphi 0, %s64
    %s67 = sphi 0, %s66
    %s81 = sphi 0, %s67
    %s87 = sphi 0, %s89
    %s90 = sphi 0, %s87
    %s91 = sphi 0, %s90
    %s107 = sphi 0, %s91
  $region4: #{_lambda_.14} parent=0 // loop_header_branch
    %12 = sbr.rel (%p10) target = $region8
  $region5: #{_lambda_.14} parent=0 // loop_body
    %s14 = ssub.s32 %s9, 1
    %s15 = ssub.s32 %s9, 2
    %s16 = sadd.s32 %s9, 1
    %s17 = ssub.s32 %s9, %s16
    %p18 = scmp.eq.s32.totalorder %s17, 0
    %s20 = sadd.s32 %s19, 1
    %s21 = scalar_select %p18, %s19, %s20
    %p24 = pneg %p18
    %p25 = scmp.eq.s32.totalorder %s9, 1
    %p26 = por %p24, %p25
    %p27 = scmp.ne.s32.totalorder %s19, %s22
    %p28 = scmp.eq.s32.totalorder %s9, 0
    %p29 = por %p27, %p28
    %p30 = scmp.ne.s32.totalorder %s19, %s22
    %p31 = scmp.eq.s32.totalorder %s14, 1
    %p32 = por %p30, %p31
    %p33 = scmp.ne.s32.totalorder %s22, %s23
    %p34 = scmp.eq.s32.totalorder %s14, 0
    %p35 = por %p33, %p34
    %p36 = scmp.ne.s32.totalorder %s22, %s23
    %p37 = scmp.eq.s32.totalorder %s15, 1
    %p38 = por %p36, %p37
    %p40 = scmp.ne.s32.totalorder %s23, %s39
    %p41 = scmp.eq.s32.totalorder %s15, 0
    %p42 = por %p40, %p41
    %s44 = sadd.s32 %s43, 1
    %p47 = scmp.eq.s32.totalorder %s9, 1
    %p48 = scmp.ne.s32.totalorder %s43, %s45
    %p49 = scmp.eq.s32.totalorder %s9, 0
    %p50 = por %p48, %p49
    %p51 = scmp.ne.s32.totalorder %s43, %s45
    %p52 = scmp.eq.s32.totalorder %s14, 1
    %p53 = por %p51, %p52
    %p54 = scmp.ne.s32.totalorder %s45, %s46
    %p55 = scmp.eq.s32.totalorder %s14, 0
    %p56 = por %p54, %p55
    %p57 = scmp.ne.s32.totalorder %s45, %s46
    %p58 = scmp.eq.s32.totalorder %s15, 1
    %p59 = por %p57, %p58
    %p61 = scmp.ne.s32.totalorder %s46, %s60
    %p62 = scmp.eq.s32.totalorder %s15, 0
    %p63 = por %p61, %p62
    %s65 = sadd.s32 %s64, 1
    %p68 = scmp.eq.s32.totalorder %s9, 1
    %p69 = scmp.ne.s32.totalorder %s64, %s66
    %p70 = scmp.eq.s32.totalorder %s9, 0
    %p71 = por %p69, %p70
    %p72 = scmp.ne.s32.totalorder %s64, %s66
    %p73 = scmp.eq.s32.totalorder %s14, 1
    %p74 = por %p72, %p73
    %p75 = scmp.ne.s32.totalorder %s66, %s67
    %p76 = scmp.eq.s32.totalorder %s14, 0
    %p77 = por %p75, %p76
    %p78 = scmp.ne.s32.totalorder %s66, %s67
    %p79 = scmp.eq.s32.totalorder %s15, 1
    %p80 = por %p78, %p79
    %p82 = scmp.ne.s32.totalorder %s67, %s81
    %p83 = scmp.eq.s32.totalorder %s15, 0
    %p84 = por %p82, %p83
    %s85 = ssub.s32 %s9, %s16
    %p86 = scmp.eq.s32.totalorder %s85, 0
    %s88 = sadd.s32 %s87, 1
    %s89 = scalar_select %p86, %s87, %s88
    %p92 = pneg %p86
    %p93 = scmp.eq.s32.totalorder %s9, 1
    %p94 = por %p92, %p93
    %p95 = scmp.ne.s32.totalorder %s87, %s90
    %p96 = scmp.eq.s32.totalorder %s9, 0
    %p97 = por %p95, %p96
    %p98 = scmp.ne.s32.totalorder %s87, %s90
    %p99 = scmp.eq.s32.totalorder %s14, 1
    %p100 = por %p98, %p99
    %p101 = scmp.ne.s32.totalorder %s90, %s91
    %p102 = scmp.eq.s32.totalorder %s14, 0
    %p103 = por %p101, %p102
    %p104 = scmp.ne.s32.totalorder %s90, %s91
    %p105 = scmp.eq.s32.totalorder %s15, 1
    %p106 = por %p104, %p105
    %p108 = scmp.ne.s32.totalorder %s91, %s107
    %p109 = scmp.eq.s32.totalorder %s15, 0
    %p110 = por %p108, %p109
    %p111 = scmp.le.s32.totalorder 1, %s9
    %p112 = scmp.lt.s32.totalorder %s9, 3
    %p113 = pnand %p111, %p112
    %p114 = pneg %p113
    // Predicated region
    $region9: #{_lambda_.14} parent=5 // pred_check
      _
    $region10: #{_lambda_.14} parent=5 // pred_check_branch
      %116 = sbr.rel (%p113) target = $region12
    $region11: #{_lambda_.14} parent=5 // pred_region
      %s117 = ssub.s32 %s9, 1
      // Predicated region
      $region13: #{_lambda_.14} parent=11 // pred_check
        %p118 = pneg %p56
      $region14: #{_lambda_.14} parent=11 // pred_check_branch
        %120 = sbr.rel (%p118) target = $region16
      $region15: #{_lambda_.14} parent=11 // pred_region
        _
      $region16: #{_lambda_.14} parent=11 // pred_fallthru
        _
      // Predicated region
      $region17: #{_lambda_.14} parent=11 // pred_check
        %p121 = pneg %p77
      $region18: #{_lambda_.14} parent=11 // pred_check_branch
        %123 = sbr.rel (%p121) target = $region20
      $region19: #{_lambda_.14} parent=11 // pred_region
        _
      $region20: #{_lambda_.14} parent=11 // pred_fallthru
        _
    $region12: #{_lambda_.14} parent=5 // pred_fallthru
      _
    %p124 = scmp.lt.s32.totalorder %s9, 2
    // Predicated region
    $region21: #{_lambda_.14} parent=5 // pred_check
      %p125 = pneg %p124
    $region22: #{_lambda_.14} parent=5 // pred_check_branch
      %127 = sbr.rel (%p125) target = $region24
    $region23: #{_lambda_.14} parent=5 // pred_region
      // Predicated region
      $region25: #{_lambda_.14} parent=23 // pred_check
        %p128 = pneg %p29
      $region26: #{_lambda_.14} parent=23 // pred_check_branch
        %130 = sbr.rel (%p128) target = $region28
      $region27: #{_lambda_.14} parent=23 // pred_region
        %p131 = scmp.lt.s32.totalorder %s9, 1
        %s132 = scalar_select %p131, %s9, 1
        %s133 = smul.addr %s132, 2
        %s134 = smul.addr %s133, 8
        %s135 = scalar_lea.vmem %s0, %s134
      $region28: #{_lambda_.14} parent=23 // pred_fallthru
        _
    $region24: #{_lambda_.14} parent=5 // pred_fallthru
      _
    %p136 = scmp.le.s32.totalorder 1, %s9
    %p137 = scmp.lt.s32.totalorder %s9, 3
    %p138 = pnand %p136, %p137
    %p139 = pneg %p138
    // Predicated region
    $region29: #{_lambda_.14} parent=5 // pred_check
      _
    $region30: #{_lambda_.14} parent=5 // pred_check_branch
      %141 = sbr.rel (%p138) target = $region32
    $region31: #{_lambda_.14} parent=5 // pred_region
      %s142 = ssub.s32 %s9, 1
      %p143 = scmp.lt.s32.totalorder %s14, 1
      %s144 = scalar_select %p143, %s14, 1
      %s145 = smul.addr %s144, 2
      %s146 = smul.addr %s145, 8
      %s147 = scalar_lea.vmem %s0, %s146
      %p148 = pneg %p35
      %p149 = pneg %p32
      %p150 = pneg %p56
      %p151 = pneg %p53
      %p152 = pneg %p77
      %p153 = pneg %p74
      %p154 = pneg %p103
      %p155 = pneg %p100
      %p156 = scmp.lt.s32.totalorder %s14, 1
      %s157 = scalar_select %p156, %s14, 1
      %s158 = smul.addr %s157, 2
      %s159 = smul.addr %s158, 8
      %s160 = scalar_lea.vmem %s3, %s159
      %p161 = scmp.lt.s32.totalorder %s14, 1
      %s162 = scalar_select %p161, %s14, 1
      %s163 = smul.addr %s162, 2
      %s164 = smul.addr %s163, 8
      %s165 = scalar_lea.vmem %s0, %s164
      %p166 = scmp.lt.s32.totalorder %s14, 1
      %s167 = scalar_select %p166, %s14, 1
      %s168 = smul.addr %s167, 2
      %s169 = smul.addr %s168, 8
      %s170 = scalar_lea.vmem %s3, %s169
      %v171 = vld [vmem:[%s165] sm:$0xff]
      %v172 = vld [vmem:[%s165 + $0x8] sm:$0xff]
      %vm173 = vcmask 523264
      %v174 = vsel %vm173, %v171, 0.0
      %v175 = vsel %vm173, %v172, 0.0
      %v176 = vadd.f32 %v174, %v175
      %v177 = vrot.slane %v176, 4
      %v178 = vadd.f32 %v176, %v177
      %v179 = vrot.slane %v178, 2
      %v180 = vadd.f32 %v178, %v179
      %v181 = vrot.slane %v180, 1
      %v182 = vadd.f32 %v180, %v181
      %v183 = vmul.f32 %v171, %v171
      %v184 = vmul.f32 %v172, %v172
      %v185 = vsel %vm173, %v183, 0.0
      %v186 = vsel %vm173, %v184, 0.0
      %v187 = vadd.f32 %v185, %v186
      %v188 = vrot.slane %v187, 4
      %v189 = vadd.f32 %v187, %v188
      %v190 = vrot.slane %v189, 2
      %v191 = vadd.f32 %v189, %v190
      %v192 = vrot.slane %v191, 1
      %v193 = vadd.f32 %v191, %v192
      %v194 = vmul.f32 %v182, 0.0625
      %v195 = vmul.f32 %v193, 0.0625
      %v196 = vmul.f32 %v194, %v194
      %v197 = vsub.f32 %v195, %v196
      %v198 = vmax.f32 %v197, 0.0
      %v199 = vadd.f32 %v198, 1e-05
      %v200 = vrsqrt.pop %v199
      %v201 = vld [vmem:[%s1] sm:$0x1]
      %v202 = vmul.f32 %v200, %v201
      %v203 = vsub.f32 %v171, %v194
      %v204 = vsub.f32 %v172, %v194
      %v205 = vlaneseq
      %v206 = vshrl.u32 %v205, 7
      %v207 = vsub.s32 0, %v206
      %v208 = vrot.slane %v202, %v207
      %v209 = vmul.f32 %v203, %v208
      %v210 = vmul.f32 %v204, %v208
      %v211 = vld [vmem:[%s2] sm:$0x1]
      %v213 = vlaneseq
      %v214 = vshrl.u32 %v213, 7
      %v215 = vsub.s32 0, %v214
      %v216 = vrot.slane %v211, %v215
      %v218 = vadd.f32 %v209, %v216
      %v219 = vadd.f32 %v210, %v216
      %vm220 = vcmp.ge.f32.partialorder %v218, 0.0
      %vm221 = vcmp.ge.f32.partialorder %v219, 0.0
      %v222 = vmul.f32 %v218, 0.2
      %v223 = vmul.f32 %v219, 0.2
      %v224 = vsel %vm220, %v218, %v222
      %v225 = vsel %vm221, %v219, %v223
      %226 = vst.msk [vmem:[%s170] sm:$0xff] %vm173, %v224
      %227 = vst.msk [vmem:[%s170 + $0x8] sm:$0xff] %vm173, %v225
      %p228 = scmp.lt.s32.totalorder %s14, 1
      %s229 = scalar_select %p228, %s14, 1
      %s230 = smul.addr %s229, 2
      %s231 = smul.addr %s230, 8
      %s232 = scalar_lea.vmem %s3, %s231
      // Predicated region
      $region33: #{_lambda_.14} parent=31 // pred_check
        %p233 = pneg %p100
      $region34: #{_lambda_.14} parent=31 // pred_check_branch
        %235 = sbr.rel (%p233) target = $region36
      $region35: #{_lambda_.14} parent=31 // pred_region
        _
      $region36: #{_lambda_.14} parent=31 // pred_fallthru
        _
    $region32: #{_lambda_.14} parent=5 // pred_fallthru
      _
    %p236 = scmp.le.s32.totalorder 2, %s9
    // Predicated region
    $region37: #{_lambda_.14} parent=5 // pred_check
      %p237 = pneg %p236
    $region38: #{_lambda_.14} parent=5 // pred_check_branch
      %239 = sbr.rel (%p237) target = $region40
    $region39: #{_lambda_.14} parent=5 // pred_region
      %s240 = ssub.s32 %s9, 2
      // Predicated region
      $region41: #{_lambda_.14} parent=39 // pred_check
        %p241 = pneg %p106
      $region42: #{_lambda_.14} parent=39 // pred_check_branch
        %243 = sbr.rel (%p241) target = $region44
      $region43: #{_lambda_.14} parent=39 // pred_region
        %p244 = scmp.lt.s32.totalorder %s15, 1
        %s245 = scalar_select %p244, %s15, 1
        %s246 = smul.addr %s245, 2
        %s247 = smul.addr %s246, 8
        %s248 = scalar_lea.vmem %s3, %s247
      $region44: #{_lambda_.14} parent=39 // pred_fallthru
        _
    $region40: #{_lambda_.14} parent=5 // pred_fallthru
      _
  $region6: #{_lambda_.14} parent=0 // loop_footer
    %s13 = sadd.s32 1, %s9
  $region7: #{_lambda_.14} parent=0 // loop_footer_branch
    %8 = sbr.rel target = $region3
  $region8: #{_lambda_.14} parent=0 // loop_exit
    _

// kernel: _lambda_.15
$region0: #{_lambda_.15}
  #allocation0 [shape = 'u32[]', space=smem, size = 0x4, offset = 0x4, fixed_abs, tag = 'smem constant byte address 0x4 - core index']
  #allocation1 [shape = 'u32[144,128]{1,0:T(1,128)}', space=vmem, size = 0x12000, scoped, tag = 'internal scratch']
  #allocation2 [shape = 'f32[56,128]{1,0:T(8,128)}', space=vmem, size = 0x7000, scoped, tag = 'scratch operand']
  %s0 = inlined_call_operand.vmem [shape: bf16[56,1024], index: 0, kind: input, shape index: {}]
  %s1 = inlined_call_operand.vmem [shape: bf16[1024,128], index: 1, kind: input, shape index: {}]
  %s2 = inlined_call_operand.vmem [shape: f32[1,128], index: 2, kind: input, shape index: {}]
  %s3 = inlined_call_operand.vmem [shape: f32[56,128], index: 3, kind: output, shape index: {}]
  %s4 = sld [smem:[#allocation0]]
  $region76: #{_lambda_.15} parent=0
    _
  %s6 = ssub.s32 1, %s4
  %s7 = scalar_select 0, %s6, %s4
  $region1: #{_lambda_.15} parent=0
    #allocation3 [shape = 'u8[114688]{0}', space=vmem, size = 0x1c000, scoped, tag = 'input window, operand 0']
    loop: start=0, step=1, limit=4
    $region2: #{_lambda_.15} parent=1 // loop_pre_header
      _
    $region3: #{_lambda_.15} parent=1 // loop_header
      %s9 = sphi 0, %s13
      %p10 = scmp.ge.s32.totalorder %s9, 4
      %s16 = sphi 0, %s35
      %s17 = sphi 0, %s31
      %s18 = sphi 0, %s27
      %s19 = sphi 0, %s16
      %s20 = sphi 0, %s17
      %s21 = sphi 0, %s18
      %s22 = sphi 0, %s19
      %s23 = sphi 0, %s20
      %s24 = sphi 0, %s21
      %s40 = sphi 0, %s42
      %s43 = sphi 0, %s40
      %s44 = sphi 0, %s43
      %s60 = sphi 0, %s44
      %s68 = sphi 0, %s70
      %s71 = sphi 0, %s68
      %s72 = sphi 0, %s71
      %s88 = sphi 0, %s72
      %s94 = sphi 0, %s96
      %s97 = sphi 0, %s94
      %s98 = sphi 0, %s97
      %s114 = sphi 0, %s98
      %s122 = sphi 0, %s124
      %s125 = sphi 0, %s122
      %s126 = sphi 0, %s125
      %s142 = sphi 0, %s126
    $region4: #{_lambda_.15} parent=1 // loop_header_branch
      %12 = sbr.rel (%p10) target = $region8
    $region5: #{_lambda_.15} parent=1 // loop_body
      %s14 = ssub.s32 %s9, 1
      %s15 = ssub.s32 %s9, 2
      %s25 = sadd.s32 1, %s18
      %p26 = scmp.ge.s32.totalorder %s25, 2
      %s27 = scalar_select %p26, 0, %s25
      %s28 = sadd.s32 1, %s17
      %s29 = scalar_select %p26, %s28, %s17
      %p30 = scmp.ge.s32.totalorder %s29, 1
      %s31 = scalar_select %p30, 0, %s29
      %s32 = sadd.s32 1, %s16
      %s33 = scalar_select %p30, %s32, %s16
      %p34 = scmp.ge.s32.totalorder %s33, 1
      %s35 = scalar_select %p34, 0, %s33
      %s36 = ssub.s32 %s16, %s35
      %s37 = ssub.s32 %s18, %s27
      %s38 = sor.u32 %s36, %s37
      %p39 = scmp.eq.s32.totalorder %s38, 0
      %s41 = sadd.s32 %s40, 1
      %s42 = scalar_select %p39, %s40, %s41
      %p45 = pneg %p39
      %p46 = scmp.eq.s32.totalorder %s9, 1
      %p47 = por %p45, %p46
      %p48 = scmp.ne.s32.totalorder %s40, %s43
      %p49 = scmp.eq.s32.totalorder %s9, 0
      %p50 = por %p48, %p49
      %p51 = scmp.ne.s32.totalorder %s40, %s43
      %p52 = scmp.eq.s32.totalorder %s14, 1
      %p53 = por %p51, %p52
      %p54 = scmp.ne.s32.totalorder %s43, %s44
      %p55 = scmp.eq.s32.totalorder %s14, 0
      %p56 = por %p54, %p55
      %p57 = scmp.ne.s32.totalorder %s43, %s44
      %p58 = scmp.eq.s32.totalorder %s15, 1
      %p59 = por %p57, %p58
      %p61 = scmp.ne.s32.totalorder %s44, %s60
      %p62 = scmp.eq.s32.totalorder %s15, 0
      %p63 = por %p61, %p62
      %s64 = ssub.s32 %s18, %s27
      %s65 = ssub.s32 %s17, %s31
      %s66 = sor.u32 %s64, %s65
      %p67 = scmp.eq.s32.totalorder %s66, 0
      %s69 = sadd.s32 %s68, 1
      %s70 = scalar_select %p67, %s68, %s69
      %p73 = pneg %p67
      %p74 = scmp.eq.s32.totalorder %s9, 1
      %p75 = por %p73, %p74
      %p76 = scmp.ne.s32.totalorder %s68, %s71
      %p77 = scmp.eq.s32.totalorder %s9, 0
      %p78 = por %p76, %p77
      %p79 = scmp.ne.s32.totalorder %s68, %s71
      %p80 = scmp.eq.s32.totalorder %s14, 1
      %p81 = por %p79, %p80
      %p82 = scmp.ne.s32.totalorder %s71, %s72
      %p83 = scmp.eq.s32.totalorder %s14, 0
      %p84 = por %p82, %p83
      %p85 = scmp.ne.s32.totalorder %s71, %s72
      %p86 = scmp.eq.s32.totalorder %s15, 1
      %p87 = por %p85, %p86
      %p89 = scmp.ne.s32.totalorder %s72, %s88
      %p90 = scmp.eq.s32.totalorder %s15, 0
      %p91 = por %p89, %p90
      %s92 = ssub.s32 %s17, %s31
      %p93 = scmp.eq.s32.totalorder %s92, 0
      %s95 = sadd.s32 %s94, 1
      %s96 = scalar_select %p93, %s94, %s95
      %p99 = pneg %p93
      %p100 = scmp.eq.s32.totalorder %s9, 1
      %p101 = por %p99, %p100
      %p102 = scmp.ne.s32.totalorder %s94, %s97
      %p103 = scmp.eq.s32.totalorder %s9, 0
      %p104 = por %p102, %p103
      %p105 = scmp.ne.s32.totalorder %s94, %s97
      %p106 = scmp.eq.s32.totalorder %s14, 1
      %p107 = por %p105, %p106
      %p108 = scmp.ne.s32.totalorder %s97, %s98
      %p109 = scmp.eq.s32.totalorder %s14, 0
      %p110 = por %p108, %p109
      %p111 = scmp.ne.s32.totalorder %s97, %s98
      %p112 = scmp.eq.s32.totalorder %s15, 1
      %p113 = por %p111, %p112
      %p115 = scmp.ne.s32.totalorder %s98, %s114
      %p116 = scmp.eq.s32.totalorder %s15, 0
      %p117 = por %p115, %p116
      %s118 = ssub.s32 %s16, %s35
      %s119 = ssub.s32 %s17, %s31
      %s120 = sor.u32 %s118, %s119
      %p121 = scmp.eq.s32.totalorder %s120, 0
      %s123 = sadd.s32 %s122, 1
      %s124 = scalar_select %p121, %s122, %s123
      %p127 = pneg %p121
      %p128 = scmp.eq.s32.totalorder %s9, 1
      %p129 = por %p127, %p128
      %p130 = scmp.ne.s32.totalorder %s122, %s125
      %p131 = scmp.eq.s32.totalorder %s9, 0
      %p132 = por %p130, %p131
      %p133 = scmp.ne.s32.totalorder %s122, %s125
      %p134 = scmp.eq.s32.totalorder %s14, 1
      %p135 = por %p133, %p134
      %p136 = scmp.ne.s32.totalorder %s125, %s126
      %p137 = scmp.eq.s32.totalorder %s14, 0
      %p138 = por %p136, %p137
      %p139 = scmp.ne.s32.totalorder %s125, %s126
      %p140 = scmp.eq.s32.totalorder %s15, 1
      %p141 = por %p139, %p140
      %p143 = scmp.ne.s32.totalorder %s126, %s142
      %p144 = scmp.eq.s32.totalorder %s15, 0
      %p145 = por %p143, %p144
      %p146 = scmp.le.s32.totalorder 1, %s9
      %p147 = scmp.lt.s32.totalorder %s9, 3
      %p148 = pnand %p146, %p147
      %p149 = pneg %p148
      // Predicated region
      $region9: #{_lambda_.15} parent=5 // pred_check
        _
      $region10: #{_lambda_.15} parent=5 // pred_check_branch
        %151 = sbr.rel (%p148) target = $region12
      $region11: #{_lambda_.15} parent=5 // pred_region
        %s152 = ssub.s32 %s9, 1
        // Predicated region
        $region13: #{_lambda_.15} parent=11 // pred_check
          %p153 = pneg %p110
        $region14: #{_lambda_.15} parent=11 // pred_check_branch
          %155 = sbr.rel (%p153) target = $region16
        $region15: #{_lambda_.15} parent=11 // pred_region
          %p156 = scmp.lt.s32.totalorder %s20, 0
          %s157 = scalar_select %p156, %s20, 0
          %s158 = scalar_lea.vmem %s2, %s157
        $region16: #{_lambda_.15} parent=11 // pred_fallthru
          _
      $region12: #{_lambda_.15} parent=5 // pred_fallthru
        _
      %p159 = scmp.lt.s32.totalorder %s9, 2
      // Predicated region
      $region17: #{_lambda_.15} parent=5 // pred_check
        %p160 = pneg %p159
      $region18: #{_lambda_.15} parent=5 // pred_check_branch
        %162 = sbr.rel (%p160) target = $region20
      $region19: #{_lambda_.15} parent=5 // pred_region
        // Predicated region
        $region21: #{_lambda_.15} parent=19 // pred_check
          %p163 = pneg %p50
        $region22: #{_lambda_.15} parent=19 // pred_check_branch
          %165 = sbr.rel (%p163) target = $region24
        $region23: #{_lambda_.15} parent=19 // pred_region
          %s166 = sand.u32 %s40, 1
          %s167 = sand.u32 %s40, 1
          %s168 = smul.addr %s167, 112
          %s169 = scalar_lea.vmem [#allocation3], %s168
          %s170 = smul.u32 7, %s16
          %s171 = smul.u32 4, %s18
          %s172 = smul.addr %s170, 8
          %s173 = sadd.s32 %s171, %s172
          %s174 = smul.addr %s173, 4
          %s175 = scalar_lea.vmem %s0, %s174
          // Predicated region
          $region25: #{_lambda_.15} parent=23 // pred_check
            _
          $region26: #{_lambda_.15} parent=23 // pred_check_branch
            %177 = sbr.rel (0) target = $region28
          $region27: #{_lambda_.15} parent=23 // pred_region
            // Predicated region
            $region29: #{_lambda_.15} parent=27 // pred_check
              _
            $region30: #{_lambda_.15} parent=27 // pred_check_branch
              %179 = sbr.rel (0) target = $region32
            $region31: #{_lambda_.15} parent=27 // pred_region
              loop: start=0, step=1, limit=1
              $region33: #{_lambda_.15} parent=31 // loop_pre_header
                _
              $region34: #{_lambda_.15} parent=31 // loop_header
                %s181 = sphi 0, %s185
                %p182 = scmp.ge.s32.totalorder %s181, 1
                %s186 = sphi %s175, %s175
                %s187 = sphi %s169, %s169
              $region35: #{_lambda_.15} parent=31 // loop_header_branch
                %184 = sbr.rel (%p182) target = $region39
              $region36: #{_lambda_.15} parent=31 // loop_body
                %v188 = vld [vmem:[%s186] sm:$0xff]
                %189 = vst [vmem:[%s187] sm:$0xff] %v188
                %v190 = vld [vmem:[%s186 + $0x8] sm:$0xff]
                %191 = vst [vmem:[%s187 + $0x8] sm:$0xff] %v190
                %v192 = vld [vmem:[%s186 + $0x20] sm:$0xff]
                %193 = vst [vmem:[%s187 + $0x10] sm:$0xff] %v192
                %v194 = vld [vmem:[%s186 + $0x28] sm:$0xff]
                %195 = vst [vmem:[%s187 + $0x18] sm:$0xff] %v194
                %v196 = vld [vmem:[%s186 + $0x40] sm:$0xff]
                %197 = vst [vmem:[%s187 + $0x20] sm:$0xff] %v196
                %v198 = vld [vmem:[%s186 + $0x48] sm:$0xff]
                %199 = vst [vmem:[%s187 + $0x28] sm:$0xff] %v198
                %v200 = vld [vmem:[%s186 + $0x60] sm:$0xff]
                %201 = vst [vmem:[%s187 + $0x30] sm:$0xff] %v200
                %v202 = vld [vmem:[%s186 + $0x68] sm:$0xff]
                %203 = vst [vmem:[%s187 + $0x38] sm:$0xff] %v202
                %v204 = vld [vmem:[%s186 + $0x80] sm:$0xff]
                %205 = vst [vmem:[%s187 + $0x40] sm:$0xff] %v204
                %v206 = vld [vmem:[%s186 + $0x88] sm:$0xff]
                %207 = vst [vmem:[%s187 + $0x48] sm:$0xff] %v206
                %v208 = vld [vmem:[%s186 + $0xa0] sm:$0xff]
                %209 = vst [vmem:[%s187 + $0x50] sm:$0xff] %v208
                %v210 = vld [vmem:[%s186 + $0xa8] sm:$0xff]
                %211 = vst [vmem:[%s187 + $0x58] sm:$0xff] %v210
                %v212 = vld [vmem:[%s186 + $0xc0] sm:$0xff]
                %213 = vst [vmem:[%s187 + $0x60] sm:$0xff] %v212
                %v214 = vld [vmem:[%s186 + $0xc8] sm:$0xff]
                %215 = vst [vmem:[%s187 + $0x68] sm:$0xff] %v214
              $region37: #{_lambda_.15} parent=31 // loop_footer
                %s185 = sadd.s32 1, %s181
              $region38: #{_lambda_.15} parent=31 // loop_footer_branch
                %180 = sbr.rel target = $region34
              $region39: #{_lambda_.15} parent=31 // loop_exit
                _
            $region32: #{_lambda_.15} parent=27 // pred_fallthru
              _
            // Predicated region
            $region40: #{_lambda_.15} parent=27 // pred_check
              _
            $region41: #{_lambda_.15} parent=27 // pred_check_branch
              %217 = sbr.rel target = $region43
            $region42: #{_lambda_.15} parent=27 // pred_region
              _
            $region43: #{_lambda_.15} parent=27 // pred_fallthru
              _
          $region28: #{_lambda_.15} parent=23 // pred_fallthru
            _
          %218 = vnop
        $region24: #{_lambda_.15} parent=19 // pred_fallthru
          _
        // Predicated region
        $region44: #{_lambda_.15} parent=19 // pred_check
          %p219 = pneg %p78
        $region45: #{_lambda_.15} parent=19 // pred_check_branch
          %221 = sbr.rel (%p219) target = $region47
        $region46: #{_lambda_.15} parent=19 // pred_region
          %s222 = smul.u32 64, %s18
          %p223 = scmp.lt.s32.totalorder %s222, 127
          %s224 = scalar_select %p223, %s222, 127
          %p225 = scmp.lt.s32.totalorder %s17, 0
          %s226 = scalar_select %p225, %s17, 0
          %s227 = sadd.s32 %s226, %s224
          %s228 = smul.addr %s227, 4
          %s229 = scalar_lea.vmem %s1, %s228
          %s230 = smul.u32 64, %s18
        $region47: #{_lambda_.15} parent=19 // pred_fallthru
          _
      $region20: #{_lambda_.15} parent=5 // pred_fallthru
        _
      %p231 = scmp.le.s32.totalorder 1, %s9
      %p232 = scmp.lt.s32.totalorder %s9, 3
      %p233 = pnand %p231, %p232
      %p234 = pneg %p233
      // Predicated region
      $region48: #{_lambda_.15} parent=5 // pred_check
        _
      $region49: #{_lambda_.15} parent=5 // pred_check_branch
        %236 = sbr.rel (%p233) target = $region51
      $region50: #{_lambda_.15} parent=5 // pred_region
        %s237 = ssub.s32 %s9, 1
        %s238 = sand.u32 %s43, 1
        %s239 = sand.u32 %s43, 1
        %s240 = smul.addr %s239, 112
        %s241 = scalar_lea.vmem [#allocation3], %s240
        // Predicated region
        $region52: #{_lambda_.15} parent=50 // pred_check
          %p242 = pneg %p56
        $region53: #{_lambda_.15} parent=50 // pred_check_branch
          %244 = sbr.rel (%p242) target = $region55
        $region54: #{_lambda_.15} parent=50 // pred_region
          _
        $region55: #{_lambda_.15} parent=50 // pred_fallthru
          _
        %s245 = sand.u32 %s43, 1
        %s246 = sand.u32 %s43, 1
        %s247 = smul.addr %s246, 112
        %s248 = scalar_lea.vmem [#allocation3], %s247
        %p249 = pneg %p56
        %p250 = pneg %p53
        %s251 = smul.u32 64, %s21
        %p252 = scmp.lt.s32.totalorder %s251, 127
        %s253 = scalar_select %p252, %s251, 127
        %p254 = scmp.lt.s32.totalorder %s20, 0
        %s255 = scalar_select %p254, %s20, 0
        %s256 = sadd.s32 %s255, %s253
        %s257 = smul.addr %s256, 4
        %s258 = scalar_lea.vmem %s1, %s257
        %p259 = pneg %p84
        %p260 = pneg %p81
        %p261 = scmp.lt.s32.totalorder %s20, 0
        %s262 = scalar_select %p261, %s20, 0
        %s263 = scalar_lea.vmem %s2, %s262
        %p264 = pneg %p110
        %p265 = pneg %p107
        %p266 = pneg %p138
        %p267 = pneg %p135
        %s268 = smul.u32 7, %s19
        %p269 = scmp.lt.s32.totalorder %s268, 6
        %s270 = scalar_select %p269, %s268, 6
        %p271 = scmp.lt.s32.totalorder %s20, 0
        %s272 = scalar_select %p271, %s20, 0
        %s273 = sadd.s32 %s272, %s270
        %s274 = smul.addr %s273, 8
        %s275 = scalar_lea.vmem %s3, %s274
        %s276 = smul.u32 7, %s19
        %s277 = smul.u32 4, %s21
        %s278 = smul.u32 64, %s21
        %p279 = scmp.lt.s32.totalorder %s278, 127
        %s280 = scalar_select %p279, %s278, 127
        %p281 = scmp.lt.s32.totalorder %s20, 0
        %s282 = scalar_select %p281, %s20, 0
        %s283 = sadd.s32 %s282, %s280
        %s284 = smul.addr %s283, 4
        %s285 = scalar_lea.vmem %s1, %s284
        %s286 = smul.u32 64, %s21
        %p287 = scmp.lt.s32.totalorder %s20, 0
        %s288 = scalar_select %p287, %s20, 0
        %s289 = scalar_lea.vmem %s2, %s288
        %s290 = smul.u32 7, %s19
        %p291 = scmp.lt.s32.totalorder %s290, 6
        %s292 = scalar_select %p291, %s290, 6
        %p293 = scmp.lt.s32.totalorder %s20, 0
        %s294 = scalar_select %p293, %s20, 0
        %s295 = sadd.s32 %s294, %s292
        %s296 = smul.addr %s295, 8
        %s297 = scalar_lea.vmem %s3, %s296
        %s298 = smul.u32 7, %s19
        %p300 = scmp.eq.s32.totalorder %s21, 0
        // Predicated region
        $region56: #{_lambda_.15} parent=50 // pred_check
          %p301 = pneg %p300
        $region57: #{_lambda_.15} parent=50 // pred_check_branch
          %303 = sbr.rel (%p301) target = $region59
        $region58: #{_lambda_.15} parent=50 // pred_region
          %304 = vst [vmem:[#allocation2] sm:$0xff] 0.0
          %305 = vst [vmem:[#allocation2 + $0x8] sm:$0xff] 0.0
          %306 = vst [vmem:[#allocation2 + $0x10] sm:$0xff] 0.0
          %307 = vst [vmem:[#allocation2 + $0x18] sm:$0xff] 0.0
          %308 = vst [vmem:[#allocation2 + $0x20] sm:$0xff] 0.0
          %309 = vst [vmem:[#allocation2 + $0x28] sm:$0xff] 0.0
          %310 = vst [vmem:[#allocation2 + $0x30] sm:$0xff] 0.0
        $region59: #{_lambda_.15} parent=50 // pred_fallthru
          _
        %v311 = vld [vmem:[#allocation2] sm:$0xff]
        %v312 = vld [vmem:[#allocation2 + $0x8] sm:$0xff]
        %v313 = vld [vmem:[#allocation2 + $0x10] sm:$0xff]
        %v314 = vld [vmem:[#allocation2 + $0x18] sm:$0xff]
        %v315 = vld [vmem:[#allocation2 + $0x20] sm:$0xff]
        %v316 = vld [vmem:[#allocation2 + $0x28] sm:$0xff]
        %v317 = vld [vmem:[#allocation2 + $0x30] sm:$0xff]
        %v318 = vld [vmem:[%s241] sm:$0xff]
        %v319 = vld [vmem:[%s241 + $0x8] sm:$0xff]
        %v320 = vld [vmem:[%s241 + $0x10] sm:$0xff]
        %v321 = vld [vmem:[%s241 + $0x18] sm:$0xff]
        %v322 = vld [vmem:[%s241 + $0x20] sm:$0xff]
        %v323 = vld [vmem:[%s241 + $0x28] sm:$0xff]
        %v324 = vld [vmem:[%s241 + $0x30] sm:$0xff]
        %v325 = vld [vmem:[%s241 + $0x38] sm:$0xff]
        %v326 = vld [vmem:[%s241 + $0x40] sm:$0xff]
        %v327 = vld [vmem:[%s241 + $0x48] sm:$0xff]
        %v328 = vld [vmem:[%s241 + $0x50] sm:$0xff]
        %v329 = vld [vmem:[%s241 + $0x58] sm:$0xff]
        %v330 = vld [vmem:[%s241 + $0x60] sm:$0xff]
        %v331 = vld [vmem:[%s241 + $0x68] sm:$0xff]
        %v332 = vld [vmem:[%s285] sm:$0xf]
        %v333 = vld [vmem:[%s285 + $0x4] sm:$0xf]
        %v334 = vld [vmem:[%s285 + $0x8] sm:$0xf]
        %v335 = vld [vmem:[%s285 + $0xc] sm:$0xf]
        %v336 = vld [vmem:[%s285 + $0x10] sm:$0xf]
        %v337 = vld [vmem:[%s285 + $0x14] sm:$0xf]
        %v338 = vld [vmem:[%s285 + $0x18] sm:$0xf]
        %v339 = vld [vmem:[%s285 + $0x1c] sm:$0xf]
        %v340 = vld [vmem:[%s285 + $0x20] sm:$0xf]
        %v341 = vld [vmem:[%s285 + $0x24] sm:$0xf]
        %v342 = vld [vmem:[%s285 + $0x28] sm:$0xf]
        %v343 = vld [vmem:[%s285 + $0x2c] sm:$0xf]
        %v344 = vld [vmem:[%s285 + $0x30] sm:$0xf]
        %v345 = vld [vmem:[%s285 + $0x34] sm:$0xf]
        %v346 = vld [vmem:[%s285 + $0x38] sm:$0xf]
        %v347 = vld [vmem:[%s285 + $0x3c] sm:$0xf]
        %v348 = vld [vmem:[%s285 + $0x40] sm:$0xf]
        %v349 = vld [vmem:[%s285 + $0x44] sm:$0xf]
        %v350 = vld [vmem:[%s285 + $0x48] sm:$0xf]
        %v351 = vld [vmem:[%s285 + $0x4c] sm:$0xf]
        %v352 = vld [vmem:[%s285 + $0x50] sm:$0xf]
        %v353 = vld [vmem:[%s285 + $0x54] sm:$0xf]
        %v354 = vld [vmem:[%s285 + $0x58] sm:$0xf]
        %v355 = vld [vmem:[%s285 + $0x5c] sm:$0xf]
        %v356 = vld [vmem:[%s285 + $0x60] sm:$0xf]
        %v357 = vld [vmem:[%s285 + $0x64] sm:$0xf]
        %v358 = vld [vmem:[%s285 + $0x68] sm:$0xf]
        %v359 = vld [vmem:[%s285 + $0x6c] sm:$0xf]
        %v360 = vld [vmem:[%s285 + $0x70] sm:$0xf]
        %v361 = vld [vmem:[%s285 + $0x74] sm:$0xf]
        %v362 = vld [vmem:[%s285 + $0x78] sm:$0xf]
        %v363 = vld [vmem:[%s285 + $0x7c] sm:$0xf]
        %v364 = vld [vmem:[%s285 + $0x80] sm:$0xf]
        %v365 = vld [vmem:[%s285 + $0x84] sm:$0xf]
        %v366 = vld [vmem:[%s285 + $0x88] sm:$0xf]
        %v367 = vld [vmem:[%s285 + $0x8c] sm:$0xf]
        %v368 = vld [vmem:[%s285 + $0x90] sm:$0xf]
        %v369 = vld [vmem:[%s285 + $0x94] sm:$0xf]
        %v370 = vld [vmem:[%s285 + $0x98] sm:$0xf]
        %v371 = vld [vmem:[%s285 + $0x9c] sm:$0xf]
        %v372 = vld [vmem:[%s285 + $0xa0] sm:$0xf]
        %v373 = vld [vmem:[%s285 + $0xa4] sm:$0xf]
        %v374 = vld [vmem:[%s285 + $0xa8] sm:$0xf]
        %v375 = vld [vmem:[%s285 + $0xac] sm:$0xf]
        %v376 = vld [vmem:[%s285 + $0xb0] sm:$0xf]
        %v377 = vld [vmem:[%s285 + $0xb4] sm:$0xf]
        %v378 = vld [vmem:[%s285 + $0xb8] sm:$0xf]
        %v379 = vld [vmem:[%s285 + $0xbc] sm:$0xf]
        %v380 = vld [vmem:[%s285 + $0xc0] sm:$0xf]
        %v381 = vld [vmem:[%s285 + $0xc4] sm:$0xf]
        %v382 = vld [vmem:[%s285 + $0xc8] sm:$0xf]
        %v383 = vld [vmem:[%s285 + $0xcc] sm:$0xf]
        %v384 = vld [vmem:[%s285 + $0xd0] sm:$0xf]
        %v385 = vld [vmem:[%s285 + $0xd4] sm:$0xf]
        %v386 = vld [vmem:[%s285 + $0xd8] sm:$0xf]
        %v387 = vld [vmem:[%s285 + $0xdc] sm:$0xf]
        %v388 = vld [vmem:[%s285 + $0xe0] sm:$0xf]
        %v389 = vld [vmem:[%s285 + $0xe4] sm:$0xf]
        %v390 = vld [vmem:[%s285 + $0xe8] sm:$0xf]
        %v391 = vld [vmem:[%s285 + $0xec] sm:$0xf]
        %v392 = vld [vmem:[%s285 + $0xf0] sm:$0xf]
        %v393 = vld [vmem:[%s285 + $0xf4] sm:$0xf]
        %v394 = vld [vmem:[%s285 + $0xf8] sm:$0xf]
        %v395 = vld [vmem:[%s285 + $0xfc] sm:$0xf]
        %v410 = vunpack.c.l.b16 %v318
        %v411 = vunpack.c.h.b16 %v318
        %v412 = vunpack.c.l.b16 %v319
        %v413 = vunpack.c.h.b16 %v319
        %v414 = vunpack.c.l.b16 %v320
        %v415 = vunpack.c.h.b16 %v320
        %v416 = vunpack.c.l.b16 %v321
        %v417 = vunpack.c.h.b16 %v321
        %v418 = vunpack.c.l.b16 %v322
        %v419 = vunpack.c.h.b16 %v322
        %v420 = vunpack.c.l.b16 %v323
        %v421 = vunpack.c.h.b16 %v323
        %v422 = vunpack.c.l.b16 %v324
        %v423 = vunpack.c.h.b16 %v324
        %v424 = vunpack.c.l.b16 %v325
        %v425 = vunpack.c.h.b16 %v325
        %v426 = vunpack.c.l.b16 %v326
        %v427 = vunpack.c.h.b16 %v326
        %v428 = vunpack.c.l.b16 %v327
        %v429 = vunpack.c.h.b16 %v327
        %v430 = vunpack.c.l.b16 %v328
        %v431 = vunpack.c.h.b16 %v328
        %v432 = vunpack.c.l.b16 %v329
        %v433 = vunpack.c.h.b16 %v329
        %v434 = vunpack.c.l.b16 %v330
        %v435 = vunpack.c.h.b16 %v330
        %v436 = vunpack.c.l.b16 %v331
        %v437 = vunpack.c.h.b16 %v331
        %v438 = vpack.c.b16 %v414, %v410
        %v439 = vpack.c.b16 %v415, %v411
        %v440 = vpack.c.b16 %v416, %v412
        %v441 = vpack.c.b16 %v417, %v413
        %v442 = vpack.c.b16 %v422, %v418
        %v443 = vpack.c.b16 %v423, %v419
        %v444 = vpack.c.b16 %v424, %v420
        %v445 = vpack.c.b16 %v425, %v421
        %v446 = vpack.c.b16 %v430, %v426
        %v447 = vpack.c.b16 %v431, %v427
        %v448 = vpack.c.b16 %v432, %v428
        %v449 = vpack.c.b16 %v433, %v429
        %v450 = vpack.c.b16 %v434, %v434
        %v451 = vpack.c.b16 %v435, %v435
        %v452 = vpack.c.b16 %v436, %v436
        %v453 = vpack.c.b16 %v437, %v437
        %v534 = vunpack.c.l.b16 %v332
        %v535 = vunpack.c.l.b16 %v333
        %v536 = vunpack.c.l.b16 %v334
        %v537 = vunpack.c.l.b16 %v335
        %v538 = vunpack.c.l.b16 %v336
        %v539 = vunpack.c.l.b16 %v337
        %v540 = vunpack.c.l.b16 %v338
        %v541 = vunpack.c.l.b16 %v339
        %v542 = vunpack.c.l.b16 %v340
        %v543 = vunpack.c.l.b16 %v341
        %v544 = vunpack.c.l.b16 %v342
        %v545 = vunpack.c.l.b16 %v343
        %v546 = vunpack.c.l.b16 %v344
        %v547 = vunpack.c.l.b16 %v345
        %v548 = vunpack.c.l.b16 %v346
        %v549 = vunpack.c.l.b16 %v347
        %v550 = vunpack.c.l.b16 %v348
        %v551 = vunpack.c.l.b16 %v349
        %v552 = vunpack.c.l.b16 %v350
        %v553 = vunpack.c.l.b16 %v351
        %v554 = vunpack.c.l.b16 %v352
        %v555 = vunpack.c.l.b16 %v353
        %v556 = vunpack.c.l.b16 %v354
        %v557 = vunpack.c.l.b16 %v355
        %v558 = vunpack.c.l.b16 %v356
        %v559 = vunpack.c.l.b16 %v357
        %v560 = vunpack.c.l.b16 %v358
        %v561 = vunpack.c.l.b16 %v359
        %v562 = vunpack.c.l.b16 %v360
        %v563 = vunpack.c.l.b16 %v361
        %v564 = vunpack.c.l.b16 %v362
        %v565 = vunpack.c.l.b16 %v363
        %v566 = vunpack.c.l.b16 %v364
        %v567 = vunpack.c.l.b16 %v365
        %v568 = vunpack.c.l.b16 %v366
        %v569 = vunpack.c.l.b16 %v367
        %v570 = vunpack.c.l.b16 %v368
        %v571 = vunpack.c.l.b16 %v369
        %v572 = vunpack.c.l.b16 %v370
        %v573 = vunpack.c.l.b16 %v371
        %v574 = vunpack.c.l.b16 %v372
        %v575 = vunpack.c.l.b16 %v373
        %v576 = vunpack.c.l.b16 %v374
        %v577 = vunpack.c.l.b16 %v375
        %v578 = vunpack.c.l.b16 %v376
        %v579 = vunpack.c.l.b16 %v377
        %v580 = vunpack.c.l.b16 %v378
        %v581 = vunpack.c.l.b16 %v379
        %v582 = vunpack.c.l.b16 %v380
        %v583 = vunpack.c.l.b16 %v381
        %v584 = vunpack.c.l.b16 %v382
        %v585 = vunpack.c.l.b16 %v383
        %v586 = vunpack.c.l.b16 %v384
        %v587 = vunpack.c.l.b16 %v385
        %v588 = vunpack.c.l.b16 %v386
        %v589 = vunpack.c.l.b16 %v387
        %v590 = vunpack.c.l.b16 %v388
        %v591 = vunpack.c.l.b16 %v389
        %v592 = vunpack.c.l.b16 %v390
        %v593 = vunpack.c.l.b16 %v391
        %v594 = vunpack.c.l.b16 %v392
        %v595 = vunpack.c.l.b16 %v393
        %v596 = vunpack.c.l.b16 %v394
        %v597 = vunpack.c.l.b16 %v395
        %v598 = vpack.c.b16 %v535, %v534
        %v599 = vpack.c.b16 %v537, %v536
        %v600 = vpack.c.b16 %v539, %v538
        %v601 = vpack.c.b16 %v541, %v540
        %v602 = vpack.c.b16 %v543, %v542
        %v603 = vpack.c.b16 %v545, %v544
        %v604 = vpack.c.b16 %v547, %v546
        %v605 = vpack.c.b16 %v549, %v548
        %v606 = vpack.c.b16 %v551, %v550
        %v607 = vpack.c.b16 %v553, %v552
        %v608 = vpack.c.b16 %v555, %v554
        %v609 = vpack.c.b16 %v557, %v556
        %v610 = vpack.c.b16 %v559, %v558
        %v611 = vpack.c.b16 %v561, %v560
        %v612 = vpack.c.b16 %v563, %v562
        %v613 = vpack.c.b16 %v565, %v564
        %v614 = vpack.c.b16 %v567, %v566
        %v615 = vpack.c.b16 %v569, %v568
        %v616 = vpack.c.b16 %v571, %v570
        %v617 = vpack.c.b16 %v573, %v572
        %v618 = vpack.c.b16 %v575, %v574
        %v619 = vpack.c.b16 %v577, %v576
        %v620 = vpack.c.b16 %v579, %v578
        %v621 = vpack.c.b16 %v581, %v580
        %v622 = vpack.c.b16 %v583, %v582
        %v623 = vpack.c.b16 %v585, %v584
        %v624 = vpack.c.b16 %v587, %v586
        %v625 = vpack.c.b16 %v589, %v588
        %v626 = vpack.c.b16 %v591, %v590
        %v627 = vpack.c.b16 %v593, %v592
        %v628 = vpack.c.b16 %v595, %v594
        %v629 = vpack.c.b16 %v597, %v596
        %662 = vmatprep.subr.bf16.mxu0 0
        %663 = vmatpush1.bf16.msra.mxu0 %v598
        %664 = vmatprep.subr.bf16.mxu0 0
        %665 = vmatpush1.bf16.msra.mxu0 %v599
        %666 = vmatprep.subr.bf16.mxu0 0
        %667 = vmatpush1.bf16.msra.mxu0 %v600
        %668 = vmatprep.subr.bf16.mxu0 0
        %669 = vmatpush1.bf16.msra.mxu0 %v601
        %670 = vmatprep.subr.bf16.mxu0 0
        %671 = vmatpush1.bf16.msra.mxu0 %v602
        %672 = vmatprep.subr.bf16.mxu0 0
        %673 = vmatpush1.bf16.msra.mxu0 %v603
        %674 = vmatprep.subr.bf16.mxu0 0
        %675 = vmatpush1.bf16.msra.mxu0 %v604
        %676 = vmatprep.subr.bf16.mxu0 0
        %677 = vmatpush1.bf16.msra.mxu0 %v605
        %678 = vmatprep.subr.bf16.mxu0 0
        %679 = vmatpush1.bf16.msra.mxu0 %v606
        %680 = vmatprep.subr.bf16.mxu0 0
        %681 = vmatpush1.bf16.msra.mxu0 %v607
        %682 = vmatprep.subr.bf16.mxu0 0
        %683 = vmatpush1.bf16.msra.mxu0 %v608
        %684 = vmatprep.subr.bf16.mxu0 0
        %685 = vmatpush1.bf16.msra.mxu0 %v609
        %686 = vmatprep.subr.bf16.mxu0 0
        %687 = vmatpush1.bf16.msra.mxu0 %v610
        %688 = vmatprep.subr.bf16.mxu0 0
        %689 = vmatpush1.bf16.msra.mxu0 %v611
        %690 = vmatprep.subr.bf16.mxu0 0
        %691 = vmatpush1.bf16.msra.mxu0 %v612
        %692 = vmatprep.subr.bf16.mxu0 0
        %693 = vmatpush1.bf16.msra.mxu0 %v613
        %694 = vmatprep.mubr.bf16.mxu0 %v439
        %695 = vmatmul.mubr.bf16.gmra.mrb[0].mxu0 %v438
        %v696 = vpop.f32.mrb[0].mxu0
        %v697 = vadd.f32 0.0, %v696
        %v698 = vpop.f32.mrb[0].mxu0
        %v699 = vpop.f32.mrb[0].mxu0
        %v700 = vadd.f32 0.0, %v699
        %v701 = vpop.f32.mrb[0].mxu0
        %702 = vmatprep.mubr.bf16.mxu0 %v443
        %703 = vmatmul.mubr.bf16.gmra.mrb[0].mxu0 %v442
        %v704 = vpop.f32.mrb[0].mxu0
        %v705 = vadd.f32 0.0, %v704
        %v706 = vpop.f32.mrb[0].mxu0
        %v707 = vpop.f32.mrb[0].mxu0
        %v708 = vadd.f32 0.0, %v707
        %v709 = vpop.f32.mrb[0].mxu0
        %710 = vmatprep.mubr.bf16.mxu0 %v447
        %711 = vmatmul.mubr.bf16.gmra.mrb[0].mxu0 %v446
        %v712 = vpop.f32.mrb[0].mxu0
        %v713 = vadd.f32 0.0, %v712
        %v714 = vpop.f32.mrb[0].mxu0
        %v715 = vpop.f32.mrb[0].mxu0
        %v716 = vadd.f32 0.0, %v715
        %v717 = vpop.f32.mrb[0].mxu0
        %718 = vmatprep.mubr.bf16.mxu0 %v451
        %719 = vmatmul.mubr.bf16.gmra.mrb[0].mxu0 %v450
        %v720 = vpop.f32.mrb[0].mxu0
        %v721 = vadd.f32 0.0, %v720
        %v722 = vpop.f32.mrb[0].mxu0
        %v723 = vpop.f32.mrb[0].mxu0
        %v724 = vpop.f32.mrb[0].mxu0
        %725 = vdwg.mxu0
        %726 = vmatprep.subr.bf16.mxu0 0
        %727 = vmatpush1.bf16.msra.mxu0 %v614
        %728 = vmatprep.subr.bf16.mxu0 0
        %729 = vmatpush1.bf16.msra.mxu0 %v615
        %730 = vmatprep.subr.bf16.mxu0 0
        %731 = vmatpush1.bf16.msra.mxu0 %v616
        %732 = vmatprep.subr.bf16.mxu0 0
        %733 = vmatpush1.bf16.msra.mxu0 %v617
        %734 = vmatprep.subr.bf16.mxu0 0
        %735 = vmatpush1.bf16.msra.mxu0 %v618
        %736 = vmatprep.subr.bf16.mxu0 0
        %737 = vmatpush1.bf16.msra.mxu0 %v619
        %738 = vmatprep.subr.bf16.mxu0 0
        %739 = vmatpush1.bf16.msra.mxu0 %v620
        %740 = vmatprep.subr.bf16.mxu0 0
        %741 = vmatpush1.bf16.msra.mxu0 %v621
        %742 = vmatprep.subr.bf16.mxu0 0
        %743 = vmatpush1.bf16.msra.mxu0 %v622
        %744 = vmatprep.subr.bf16.mxu0 0
        %745 = vmatpush1.bf16.msra.mxu0 %v623
        %746 = vmatprep.subr.bf16.mxu0 0
        %747 = vmatpush1.bf16.msra.mxu0 %v624
        %748 = vmatprep.subr.bf16.mxu0 0
        %749 = vmatpush1.bf16.msra.mxu0 %v625
        %750 = vmatprep.subr.bf16.mxu0 0
        %751 = vmatpush1.bf16.msra.mxu0 %v626
        %752 = vmatprep.subr.bf16.mxu0 0
        %753 = vmatpush1.bf16.msra.mxu0 %v627
        %754 = vmatprep.subr.bf16.mxu0 0
        %755 = vmatpush1.bf16.msra.mxu0 %v628
        %756 = vmatprep.subr.bf16.mxu0 0
        %757 = vmatpush1.bf16.msra.mxu0 %v629
        %758 = vmatprep.mubr.bf16.mxu0 %v441
        %759 = vmatmul.mubr.bf16.gmra.mrb[0].mxu0 %v440
        %v760 = vpop.f32.mrb[0].mxu0
        %v761 = vadd.f32 %v697, %v760
        %v762 = vpop.f32.mrb[0].mxu0
        %v763 = vpop.f32.mrb[0].mxu0
        %v764 = vadd.f32 %v700, %v763
        %v765 = vpop.f32.mrb[0].mxu0
        %766 = vmatprep.mubr.bf16.mxu0 %v445
        %767 = vmatmul.mubr.bf16.gmra.mrb[0].mxu0 %v444
        %v768 = vpop.f32.mrb[0].mxu0
        %v769 = vadd.f32 %v705, %v768
        %v770 = vpop.f32.mrb[0].mxu0
        %v771 = vpop.f32.mrb[0].mxu0
        %v772 = vadd.f32 %v708, %v771
        %v773 = vpop.f32.mrb[0].mxu0
        %774 = vmatprep.mubr.bf16.mxu0 %v449
        %775 = vmatmul.mubr.bf16.gmra.mrb[0].mxu0 %v448
        %v776 = vpop.f32.mrb[0].mxu0
        %v777 = vadd.f32 %v713, %v776
        %v778 = vpop.f32.mrb[0].mxu0
        %v779 = vpop.f32.mrb[0].mxu0
        %v780 = vadd.f32 %v716, %v779
        %v781 = vpop.f32.mrb[0].mxu0
        %782 = vmatprep.mubr.bf16.mxu0 %v453
        %783 = vmatmul.mubr.bf16.gmra.mrb[0].mxu0 %v452
        %v784 = vpop.f32.mrb[0].mxu0
        %v785 = vadd.f32 %v721, %v784
        %v786 = vpop.f32.mrb[0].mxu0
        %v787 = vpop.f32.mrb[0].mxu0
        %v788 = vpop.f32.mrb[0].mxu0
        %789 = vdwg.mxu0
        %v790 = vadd.f32 %v311, %v761
        %v791 = vadd.f32 %v312, %v764
        %v792 = vadd.f32 %v313, %v769
        %v793 = vadd.f32 %v314, %v772
        %v794 = vadd.f32 %v315, %v777
        %v795 = vadd.f32 %v316, %v780
        %v796 = vadd.f32 %v317, %v785
        %797 = vst [vmem:[#allocation2] sm:$0xff] %v790
        %798 = vst [vmem:[#allocation2 + $0x8] sm:$0xff] %v791
        %799 = vst [vmem:[#allocation2 + $0x10] sm:$0xff] %v792
        %800 = vst [vmem:[#allocation2 + $0x18] sm:$0xff] %v793
        %801 = vst [vmem:[#allocation2 + $0x20] sm:$0xff] %v794
        %802 = vst [vmem:[#allocation2 + $0x28] sm:$0xff] %v795
        %803 = vst [vmem:[#allocation2 + $0x30] sm:$0xff] %v796
        %p804 = scmp.eq.s32.totalorder %s21, 1
        // Predicated region
        $region60: #{_lambda_.15} parent=50 // pred_check
          %p805 = pneg %p804
        $region61: #{_lambda_.15} parent=50 // pred_check_branch
          %807 = sbr.rel (%p805) target = $region63
        $region62: #{_lambda_.15} parent=50 // pred_region
          %v808 = vld [vmem:[#allocation2] sm:$0xff]
          %v809 = vld [vmem:[#allocation2 + $0x8] sm:$0xff]
          %v810 = vld [vmem:[#allocation2 + $0x10] sm:$0xff]
          %v811 = vld [vmem:[#allocation2 + $0x18] sm:$0xff]
          %v812 = vld [vmem:[#allocation2 + $0x20] sm:$0xff]
          %v813 = vld [vmem:[#allocation2 + $0x28] sm:$0xff]
          %v814 = vld [vmem:[#allocation2 + $0x30] sm:$0xff]
          %v815 = vld [vmem:[%s289] sm:$0x1]
          %v817 = vlaneseq
          %v818 = vshrl.u32 %v817, 7
          %v819 = vsub.s32 0, %v818
          %v820 = vrot.slane %v815, %v819
          %v822 = vadd.f32 %v808, %v820
          %v823 = vadd.f32 %v809, %v820
          %v824 = vadd.f32 %v810, %v820
          %v825 = vadd.f32 %v811, %v820
          %v826 = vadd.f32 %v812, %v820
          %v827 = vadd.f32 %v813, %v820
          %v828 = vadd.f32 %v814, %v820
          %829 = vst [vmem:[%s297] sm:$0xff] %v822
          %830 = vst [vmem:[%s297 + $0x8] sm:$0xff] %v823
          %831 = vst [vmem:[%s297 + $0x10] sm:$0xff] %v824
          %832 = vst [vmem:[%s297 + $0x18] sm:$0xff] %v825
          %833 = vst [vmem:[%s297 + $0x20] sm:$0xff] %v826
          %834 = vst [vmem:[%s297 + $0x28] sm:$0xff] %v827
          %835 = vst [vmem:[%s297 + $0x30] sm:$0xff] %v828
        $region63: #{_lambda_.15} parent=50 // pred_fallthru
          _
        %s836 = smul.u32 7, %s19
        %p837 = scmp.lt.s32.totalorder %s836, 6
        %s838 = scalar_select %p837, %s836, 6
        %p839 = scmp.lt.s32.totalorder %s20, 0
        %s840 = scalar_select %p839, %s20, 0
        %s841 = sadd.s32 %s840, %s838
        %s842 = smul.addr %s841, 8
        %s843 = scalar_lea.vmem %s3, %s842
        // Predicated region
        $region64: #{_lambda_.15} parent=50 // pred_check
          %p844 = pneg %p135
        $region65: #{_lambda_.15} parent=50 // pred_check_branch
          %846 = sbr.rel (%p844) target = $region67
        $region66: #{_lambda_.15} parent=50 // pred_region
          %s847 = smul.u32 7, %s19
        $region67: #{_lambda_.15} parent=50 // pred_fallthru
          _
        // Predicated region
        $region68: #{_lambda_.15} parent=50 // pred_check
          %p848 = pneg %p135
        $region69: #{_lambda_.15} parent=50 // pred_check_branch
          %850 = sbr.rel (%p848) target = $region71
        $region70: #{_lambda_.15} parent=50 // pred_region
          %s851 = smul.u32 7, %s19
          %p852 = scmp.lt.s32.totalorder %s851, 6
          %s853 = scalar_select %p852, %s851, 6
          %p854 = scmp.lt.s32.totalorder %s20, 0
          %s855 = scalar_select %p854, %s20, 0
          %s856 = sadd.s32 %s855, %s853
          %s857 = smul.addr %s856, 8
          %s858 = scalar_lea.vmem %s3, %s857
        $region71: #{_lambda_.15} parent=50 // pred_fallthru
          _
      $region51: #{_lambda_.15} parent=5 // pred_fallthru
        _
      %p859 = scmp.le.s32.totalorder 2, %s9
      // Predicated region
      $region72: #{_lambda_.15} parent=5 // pred_check
        %p860 = pneg %p859
      $region73: #{_lambda_.15} parent=5 // pred_check_branch
        %862 = sbr.rel (%p860) target = $region75
      $region74: #{_lambda_.15} parent=5 // pred_region
        %s863 = ssub.s32 %s9, 2
      $region75: #{_lambda_.15} parent=5 // pred_fallthru
        _
    $region6: #{_lambda_.15} parent=1 // loop_footer
      %s13 = sadd.s32 1, %s9
    $region7: #{_lambda_.15} parent=1 // loop_footer_branch
      %8 = sbr.rel target = $region3
    $region8: #{_lambda_.15} parent=1 // loop_exit
      _

</llo_original>
